<compile_context>
chip_gen: v7x
topology: tpu7x:2x2x1
jax: 0.10.0
libtpu: 0.0.40
codegen_flags: <defaults>
</compile_context>

<pallas_src>
import functools

import jax
import jax.numpy as jnp
from jax.experimental import pallas as pl
from jax.experimental.pallas import tpu as pltpu

NEG_SLOPE = 0.2
# TODO(synk): `mine.param_bounds` is an external global not present in the source
# module; using deterministic synthetic bounds (pd in [0,1], ps in [0,10]).
PD_BOUNDS = (0.0, 1.0)
PS_BOUNDS = (0.0, 10.0)

SHARE_CODE_LEN = 256
SHARE_DIMS = [128, 256, 256, SHARE_CODE_LEN]   # 4 x (Linear -> LeakyReLU)
HEAD_DIMS = [256, 128, 64, 32, 1]              # 4 x (Linear -> LeakyReLU), Linear -> Sigmoid
OUT_PAD = 128                                   # padded lane width of the fused head tail
OUT_W = 8                                       # lanes written to HBM (col0=diff, col1=spec)
BIAS_W = 512                                    # packed-bias row width (max layer width)
MAX_TILE_B = 512                                # default batch tile cap


def _round_up(x, m):
    return ((x + m - 1) // m) * m


# ----------------------------------------------------------------------------- kernel
def albedo_kernel(x_ref,
                  w0, w1, w2, w3,                  # shared trunk weights (bf16)
                  hw0, hw1d, hw1s, hw2, hw3, hw4,  # fused / split head weights (bf16)
                  bias_ref,                        # (11, BIAS_W) f32 biases + scale/offset
                  out_ref):                        # (tile_b, OUT_W) f32
    def bias(row, width):
        return bias_ref[row:row + 1, 0:width]      # (1, width) f32, broadcast over rows

    def linear(h, w_ref, row, width):
        # bf16 x bf16 MXU matmul, f32 accumulation, f32 bias add.
        return jnp.dot(h, w_ref[...], preferred_element_type=jnp.float32) + bias(row, width)

    def leaky(z):
        # max(z, 0.2*z) == LeakyReLU(0.2) since 0 < slope < 1.
        return jnp.maximum(z, NEG_SLOPE * z)

    h = x_ref[...]                                               # (tile_b, m_len) bf16

    # Shared trunk: 4 x (Linear -> LeakyReLU).
    for row, (w_ref, width) in enumerate(((w0, 128), (w1, 256), (w2, 256), (w3, 256))):
        h = leaky(linear(h, w_ref, row, width)).astype(jnp.bfloat16)

    # Head layer 0 (both heads read share_codes): one concatenated (256, 512) matmul.
    h = leaky(linear(h, hw0, 4, 512)).astype(jnp.bfloat16)       # (tile_b, 512)

    # Head layer 1: two dense (256, 128) matmuls — no zero block-diag tiles, so half
    # the MXU passes on v5e's 128x128 MXU; cycle-neutral on v6e/v7x.
    d1 = jnp.dot(h[:, 0:256], hw1d[...], preferred_element_type=jnp.float32)
    s1 = jnp.dot(h[:, 256:512], hw1s[...], preferred_element_type=jnp.float32)
    h = leaky(jnp.concatenate([d1, s1], axis=-1) + bias(5, 256)).astype(jnp.bfloat16)

    # Head layers 2..3: block-diagonal (diff ⊕ spec), >=128-lane matmuls.
    h = leaky(linear(h, hw2, 6, 128)).astype(jnp.bfloat16)       # (tile_b, 128)
    h = leaky(linear(h, hw3, 7, 128)).astype(jnp.bfloat16)       # (tile_b, 128)

    # Final packed 1-wide layers: col 0 = diffuse logit, col 1 = specular logit.
    z = linear(h, hw4, 8, OUT_PAD)                               # (tile_b, 128) f32
    s = 1.0 / (1.0 + jnp.exp(-z))                                # exact sigmoid
    res = s * bias(9, OUT_PAD) + bias(10, OUT_PAD)               # bounds rescale
    out_ref[...] = res[:, 0:OUT_W]                               # narrow HBM writeback


# ------------------------------------------------------------------------ param utils
def init_params(key, measurements_length):
    """PyTorch nn.Linear-style init: U(-1/sqrt(fan_in), 1/sqrt(fan_in)).
    Returns 14 (W, b) pairs with W stored as (in_features, out_features)."""
    dims = []
    in_sz = measurements_length
    for out_sz in SHARE_DIMS:
        dims.append((in_sz, out_sz))
        in_sz = out_sz
    for _ in range(2):                            # diffuse head, then specular head
        in_sz = SHARE_CODE_LEN
        for out_sz in HEAD_DIMS:
            dims.append((in_sz, out_sz))
            in_sz = out_sz

    params = []
    for fan_in, fan_out in dims:
        key, kw, kb = jax.random.split(key, 3)
        bound = 1.0 / jnp.sqrt(jnp.float32(fan_in))
        w = jax.random.uniform(kw, (fan_in, fan_out), jnp.float32, -bound, bound)
        b = jax.random.uniform(kb, (1, fan_out), jnp.float32, -bound, bound)
        params.append((w, b))
    return params


def pack_params(params, pd_bounds=PD_BOUNDS, ps_bounds=PS_BOUNDS):
    """Fuse the two heads and pack all biases + bounds vectors into one array.
    Returns (weights: tuple of 10 bf16 arrays, bias_pack: (11, BIAS_W) f32)."""
    trunk = params[0:4]
    dif = params[4:9]
    spe = params[9:14]

    weights = []
    bias_rows = []

    def add_bias(b):
        b = jnp.asarray(b, jnp.float32).reshape(-1)
        bias_rows.append(jnp.pad(b, (0, BIAS_W - b.shape[0])))

    # Shared trunk.
    for w, b in trunk:
        weights.append(w.astype(jnp.bfloat16))
        add_bias(b)

    # Head layer 0: both heads read share_codes -> concatenate outputs: (256, 512).
    weights.append(jnp.concatenate([dif[0][0], spe[0][0]], axis=1).astype(jnp.bfloat16))
    add_bias(jnp.concatenate([dif[0][1], spe[0][1]], axis=1))

    # Head layer 1: kept as two dense (256, 128) weights (MXU-friendly on v5e);
    # bias is concatenated and applied after the in-kernel lane concat.
    weights.append(dif[1][0].astype(jnp.bfloat16))
    weights.append(spe[1][0].astype(jnp.bfloat16))
    add_bias(jnp.concatenate([dif[1][1], spe[1][1]], axis=1))

    def block_diag(wd, ws, pad_out_to=None):
        ki, ko = wd.shape
        si, so = ws.shape
        W = jnp.zeros((ki + si, ko + so), jnp.float32)
        W = W.at[:ki, :ko].set(wd)
        W = W.at[ki:, ko:].set(ws)
        if pad_out_to is not None and pad_out_to > ko + so:
            W = jnp.pad(W, ((0, 0), (0, pad_out_to - (ko + so))))
        return W

    def cat_bias(bd, bs, pad_out_to=None):
        b = jnp.concatenate([bd, bs], axis=1)
        if pad_out_to is not None and pad_out_to > b.shape[1]:
            b = jnp.pad(b, ((0, 0), (0, pad_out_to - b.shape[1])))
        return b

    # Head layers 2..3: block-diagonal diff ⊕ spec; layer 3 output padded to 128 lanes.
    for j, pad in ((2, None), (3, OUT_PAD)):
        weights.append(block_diag(dif[j][0], spe[j][0], pad_out_to=pad).astype(jnp.bfloat16))
        add_bias(cat_bias(dif[j][1], spe[j][1], pad_out_to=pad))

    # Final layer: input layout [0:32]=diff chain, [32:64]=spec chain, [64:128]=zeros.
    tail = HEAD_DIMS[3]                                  # 32
    w4 = jnp.zeros((OUT_PAD, OUT_PAD), jnp.float32)
    w4 = w4.at[0:tail, 0:1].set(dif[4][0])
    w4 = w4.at[tail:2 * tail, 1:2].set(spe[4][0])
    weights.append(w4.astype(jnp.bfloat16))
    b4 = jnp.zeros((OUT_PAD,), jnp.float32)
    b4 = b4.at[0].set(dif[4][1][0, 0]).at[1].set(spe[4][1][0, 0])
    add_bias(b4)

    # Bounds rescale rows: row 9 = scale, row 10 = offset (col 0 -> pd, col 1 -> ps).
    scale = jnp.zeros((OUT_PAD,), jnp.float32)
    scale = scale.at[0].set(pd_bounds[1] - pd_bounds[0]).at[1].set(ps_bounds[1] - ps_bounds[0])
    offset = jnp.zeros((OUT_PAD,), jnp.float32)
    offset = offset.at[0].set(pd_bounds[0]).at[1].set(ps_bounds[0])
    add_bias(scale)
    add_bias(offset)

    bias_pack = jnp.stack(bias_rows, axis=0)             # (11, BIAS_W) f32
    return tuple(weights), bias_pack


# ---------------------------------------------------------------------------- wrapper
@functools.partial(jax.jit, static_argnames=("max_tile_b",))
def albedo_net_forward(batch_data, weights, bias_pack, max_tile_b=MAX_TILE_B):
    """batch_data: (batch, sample_view_num, m_len, 1).
    Returns (albedo_diff (batch,1), albedo_spec (batch,1))."""
    B = batch_data.shape[0]
    m_len = batch_data.shape[1] * batch_data.shape[2] * batch_data.shape[3]
    x = batch_data.reshape(B, m_len).astype(jnp.bfloat16)

    # Adaptive batch tile: smallest legal multiple of 128 covering B, capped; for
    # larger batches keep >=2 grid steps so both v7x TensorCores get work.
    tile_b = min(max_tile_b, _round_up(B, 128))
    if B > 256 and _round_up(B, tile_b) // tile_b < 2:
        tile_b = _round_up((B + 1) // 2, 128)

    pad_b = (-B) % tile_b
    if pad_b:
        x = jnp.pad(x, ((0, pad_b), (0, 0)))
    Bp = B + pad_b
    grid = (Bp // tile_b,)

    macs_per_row = (m_len * 128 + 128 * 256 + 256 * 256 + 256 * 256         # trunk
                    + 256 * 512 + 2 * 256 * 128 + 256 * 128                  # head 0..2
                    + 128 * 128 + 128 * 128)                                 # head 3..4
    weight_bytes = sum(int(w.size) * 2 for w in weights) + int(bias_pack.size) * 4
    cost = pl.CostEstimate(
        flops=2 * Bp * macs_per_row,
        transcendentals=Bp * OUT_PAD,
        bytes_accessed=Bp * (m_len * 2 + OUT_W * 4) + weight_bytes,
    )

    in_specs = [pl.BlockSpec((tile_b, m_len), lambda i: (i, 0))]
    operands = [x]
    for w in weights:                                    # grid-invariant -> VMEM-resident
        in_specs.append(pl.BlockSpec(w.shape, lambda i: (0, 0)))
        operands.append(w)
    in_specs.append(pl.BlockSpec(bias_pack.shape, lambda i: (0, 0)))
    operands.append(bias_pack)

    slab = pl.pallas_call(
        albedo_kernel,
        out_shape=jax.ShapeDtypeStruct((Bp, OUT_W), jnp.float32),
        grid=grid,
        in_specs=in_specs,
        out_specs=pl.BlockSpec((tile_b, OUT_W), lambda i: (i, 0)),
        compiler_params=pltpu.CompilerParams(
            dimension_semantics=("parallel",),
        ),
        cost_estimate=cost,
    )(*operands)

    albedo_diff = slab[:B, 0:1]
    albedo_spec = slab[:B, 1:2]
    return albedo_diff, albedo_spec


# -------------------------------------------------------------------------- reference
def reference_forward(batch_data, params):
    """Pure-JAX f32 reference (matches the PyTorch forward, synthetic bounds)."""
    B = batch_data.shape[0]
    m_len = batch_data.shape[1] * batch_data.shape[2] * batch_data.shape[3]
    h = batch_data.reshape(B, m_len).astype(jnp.float32)
    li = 0
    for _ in SHARE_DIMS:
        w, b = params[li]
        z = h @ w + b
        h = jnp.where(z >= 0, z, NEG_SLOPE * z)
        li += 1
    share = h
    outs = []
    for _ in range(2):
        h = share
        for j in range(len(HEAD_DIMS)):
            w, b = params[li]
            z = h @ w + b
            h = jax.nn.sigmoid(z) if j == len(HEAD_DIMS) - 1 else jnp.where(z >= 0, z, NEG_SLOPE * z)
            li += 1
        outs.append(h)
    diff = outs[0] * (PD_BOUNDS[1] - PD_BOUNDS[0]) + PD_BOUNDS[0]
    spec = outs[1] * (PS_BOUNDS[1] - PS_BOUNDS[0]) + PS_BOUNDS[0]
    return diff, spec


if __name__ == "__main__":
    key = jax.random.PRNGKey(0)
    k_data, k_params = jax.random.split(key)

    batch_size = 8
    sample_view_num = 1
    measurements_length = 32   # args['measurements_length_albedo']

    batch_data = jax.random.normal(
        k_data, (batch_size, sample_view_num, measurements_length, 1), jnp.float32
    )
    params = init_params(k_params, measurements_length)
    weights, bias_pack = pack_params(params)

    albedo_diff, albedo_spec = albedo_net_forward(batch_data, weights, bias_pack)
    jax.block_until_ready((albedo_diff, albedo_spec))

    assert albedo_diff.shape == (batch_size, 1)
    assert albedo_spec.shape == (batch_size, 1)
    assert bool(jnp.all(jnp.isfinite(albedo_diff))) and bool(jnp.all(jnp.isfinite(albedo_spec)))

    # Loose check against the f32 reference (kernel runs matmuls in bf16).
    ref_diff, ref_spec = reference_forward(batch_data, params)
    err_d = float(jnp.max(jnp.abs(albedo_diff - ref_diff)))
    err_s = float(jnp.max(jnp.abs(albedo_spec - ref_spec)))
    assert err_d < 0.1 and err_s < 1.0, (err_d, err_s)

    print("KERNEL_OK")
</pallas_src>

<mosaic_0001>
module attributes {stable_mosaic.version = 11 : i64} {
  func.func @albedo_kernel(%arg0: i32, %arg1: memref<128x32xbf16, #tpu.memory_space<vmem>>, %arg2: memref<32x128xbf16, #tpu.memory_space<vmem>>, %arg3: memref<128x256xbf16, #tpu.memory_space<vmem>>, %arg4: memref<256x256xbf16, #tpu.memory_space<vmem>>, %arg5: memref<256x256xbf16, #tpu.memory_space<vmem>>, %arg6: memref<256x512xbf16, #tpu.memory_space<vmem>>, %arg7: memref<256x128xbf16, #tpu.memory_space<vmem>>, %arg8: memref<256x128xbf16, #tpu.memory_space<vmem>>, %arg9: memref<256x128xbf16, #tpu.memory_space<vmem>>, %arg10: memref<128x128xbf16, #tpu.memory_space<vmem>>, %arg11: memref<128x128xbf16, #tpu.memory_space<vmem>>, %arg12: memref<11x512xf32, #tpu.memory_space<vmem>>, %arg13: memref<128x8xf32, #tpu.memory_space<vmem>>) attributes {dimension_semantics = [#tpu.dimension_semantics<parallel>], iteration_bounds = array<i64: 1>, scalar_prefetch = 0 : i64, scratch_operands = 0 : i64, tpu.core_type = #tpu.core_type<tc>, window_params = [{transform_indices = @transform_0, window_bounds = array<i64: 128, 32>}, {pipeline_mode = #tpu.pipeline_mode<synchronous>, transform_indices = @transform_1, window_bounds = array<i64: 32, 128>}, {pipeline_mode = #tpu.pipeline_mode<synchronous>, transform_indices = @transform_2, window_bounds = array<i64: 128, 256>}, {pipeline_mode = #tpu.pipeline_mode<synchronous>, transform_indices = @transform_3, window_bounds = array<i64: 256, 256>}, {pipeline_mode = #tpu.pipeline_mode<synchronous>, transform_indices = @transform_4, window_bounds = array<i64: 256, 256>}, {pipeline_mode = #tpu.pipeline_mode<synchronous>, transform_indices = @transform_5, window_bounds = array<i64: 256, 512>}, {pipeline_mode = #tpu.pipeline_mode<synchronous>, transform_indices = @transform_6, window_bounds = array<i64: 256, 128>}, {pipeline_mode = #tpu.pipeline_mode<synchronous>, transform_indices = @transform_7, window_bounds = array<i64: 256, 128>}, {pipeline_mode = #tpu.pipeline_mode<synchronous>, transform_indices = @transform_8, window_bounds = array<i64: 256, 128>}, {pipeline_mode = #tpu.pipeline_mode<synchronous>, transform_indices = @transform_9, window_bounds = array<i64: 128, 128>}, {pipeline_mode = #tpu.pipeline_mode<synchronous>, transform_indices = @transform_10, window_bounds = array<i64: 128, 128>}, {pipeline_mode = #tpu.pipeline_mode<synchronous>, transform_indices = @transform_11, window_bounds = array<i64: 11, 512>}, {transform_indices = @transform_12, window_bounds = array<i64: 128, 8>}]} {
    %c0 = arith.constant 0 : index
    %c0_0 = arith.constant 0 : index
    %0 = vector.load %arg1[%c0, %c0_0] : memref<128x32xbf16, #tpu.memory_space<vmem>>, vector<128x32xbf16>
    %c0_1 = arith.constant 0 : index
    %c0_2 = arith.constant 0 : index
    %1 = vector.load %arg2[%c0_1, %c0_2] : memref<32x128xbf16, #tpu.memory_space<vmem>>, vector<32x128xbf16>
    %cst = arith.constant dense<0.000000e+00> : vector<128x128xf32>
    %2 = tpu.matmul %0, %1, %cst {dimension_numbers = #tpu.dot_dimension_numbers<[1], [0], [0], [1], [0, 0, 1, 1], [], []>} : vector<128x32xbf16>, vector<32x128xbf16>, vector<128x128xf32> -> vector<128x128xf32>
    %c0_3 = arith.constant 0 : index
    %c0_4 = arith.constant 0 : index
    %3 = vector.load %arg12[%c0_3, %c0_4] : memref<11x512xf32, #tpu.memory_space<vmem>>, vector<1x128xf32>
    %4 = vector.broadcast %3 : vector<1x128xf32> to vector<128x128xf32>
    %5 = arith.addf %2, %4 : vector<128x128xf32>
    %cst_5 = arith.constant 2.000000e-01 : f32
    %6 = vector.broadcast %cst_5 : f32 to vector<128x128xf32>
    %7 = arith.mulf %6, %5 : vector<128x128xf32>
    %8 = arith.maximumf %5, %7 : vector<128x128xf32>
    %9 = arith.truncf %8 : vector<128x128xf32> to vector<128x128xbf16>
    %c0_6 = arith.constant 0 : index
    %c0_7 = arith.constant 0 : index
    %10 = vector.load %arg3[%c0_6, %c0_7] : memref<128x256xbf16, #tpu.memory_space<vmem>>, vector<128x256xbf16>
    %cst_8 = arith.constant dense<0.000000e+00> : vector<128x256xf32>
    %11 = tpu.matmul %9, %10, %cst_8 {dimension_numbers = #tpu.dot_dimension_numbers<[1], [0], [0], [1], [0, 0, 1, 1], [], []>} : vector<128x128xbf16>, vector<128x256xbf16>, vector<128x256xf32> -> vector<128x256xf32>
    %c1 = arith.constant 1 : index
    %c0_9 = arith.constant 0 : index
    %12 = vector.load %arg12[%c1, %c0_9] : memref<11x512xf32, #tpu.memory_space<vmem>>, vector<1x256xf32>
    %13 = vector.broadcast %12 : vector<1x256xf32> to vector<128x256xf32>
    %14 = arith.addf %11, %13 : vector<128x256xf32>
    %cst_10 = arith.constant 2.000000e-01 : f32
    %15 = vector.broadcast %cst_10 : f32 to vector<128x256xf32>
    %16 = arith.mulf %15, %14 : vector<128x256xf32>
    %17 = arith.maximumf %14, %16 : vector<128x256xf32>
    %18 = arith.truncf %17 : vector<128x256xf32> to vector<128x256xbf16>
    %c0_11 = arith.constant 0 : index
    %c0_12 = arith.constant 0 : index
    %19 = vector.load %arg4[%c0_11, %c0_12] : memref<256x256xbf16, #tpu.memory_space<vmem>>, vector<256x256xbf16>
    %cst_13 = arith.constant dense<0.000000e+00> : vector<128x256xf32>
    %20 = tpu.matmul %18, %19, %cst_13 {dimension_numbers = #tpu.dot_dimension_numbers<[1], [0], [0], [1], [0, 0, 1, 1], [], []>} : vector<128x256xbf16>, vector<256x256xbf16>, vector<128x256xf32> -> vector<128x256xf32>
    %c2 = arith.constant 2 : index
    %c0_14 = arith.constant 0 : index
    %21 = vector.load %arg12[%c2, %c0_14] : memref<11x512xf32, #tpu.memory_space<vmem>>, vector<1x256xf32>
    %22 = vector.broadcast %21 : vector<1x256xf32> to vector<128x256xf32>
    %23 = arith.addf %20, %22 : vector<128x256xf32>
    %cst_15 = arith.constant 2.000000e-01 : f32
    %24 = vector.broadcast %cst_15 : f32 to vector<128x256xf32>
    %25 = arith.mulf %24, %23 : vector<128x256xf32>
    %26 = arith.maximumf %23, %25 : vector<128x256xf32>
    %27 = arith.truncf %26 : vector<128x256xf32> to vector<128x256xbf16>
    %c0_16 = arith.constant 0 : index
    %c0_17 = arith.constant 0 : index
    %28 = vector.load %arg5[%c0_16, %c0_17] : memref<256x256xbf16, #tpu.memory_space<vmem>>, vector<256x256xbf16>
    %cst_18 = arith.constant dense<0.000000e+00> : vector<128x256xf32>
    %29 = tpu.matmul %27, %28, %cst_18 {dimension_numbers = #tpu.dot_dimension_numbers<[1], [0], [0], [1], [0, 0, 1, 1], [], []>} : vector<128x256xbf16>, vector<256x256xbf16>, vector<128x256xf32> -> vector<128x256xf32>
    %c3 = arith.constant 3 : index
    %c0_19 = arith.constant 0 : index
    %30 = vector.load %arg12[%c3, %c0_19] : memref<11x512xf32, #tpu.memory_space<vmem>>, vector<1x256xf32>
    %31 = vector.broadcast %30 : vector<1x256xf32> to vector<128x256xf32>
    %32 = arith.addf %29, %31 : vector<128x256xf32>
    %cst_20 = arith.constant 2.000000e-01 : f32
    %33 = vector.broadcast %cst_20 : f32 to vector<128x256xf32>
    %34 = arith.mulf %33, %32 : vector<128x256xf32>
    %35 = arith.maximumf %32, %34 : vector<128x256xf32>
    %36 = arith.truncf %35 : vector<128x256xf32> to vector<128x256xbf16>
    %c0_21 = arith.constant 0 : index
    %c0_22 = arith.constant 0 : index
    %37 = vector.load %arg6[%c0_21, %c0_22] : memref<256x512xbf16, #tpu.memory_space<vmem>>, vector<256x512xbf16>
    %cst_23 = arith.constant dense<0.000000e+00> : vector<128x512xf32>
    %38 = tpu.matmul %36, %37, %cst_23 {dimension_numbers = #tpu.dot_dimension_numbers<[1], [0], [0], [1], [0, 0, 1, 1], [], []>} : vector<128x256xbf16>, vector<256x512xbf16>, vector<128x512xf32> -> vector<128x512xf32>
    %c4 = arith.constant 4 : index
    %c0_24 = arith.constant 0 : index
    %39 = vector.load %arg12[%c4, %c0_24] : memref<11x512xf32, #tpu.memory_space<vmem>>, vector<1x512xf32>
    %40 = vector.broadcast %39 : vector<1x512xf32> to vector<128x512xf32>
    %41 = arith.addf %38, %40 : vector<128x512xf32>
    %cst_25 = arith.constant 2.000000e-01 : f32
    %42 = vector.broadcast %cst_25 : f32 to vector<128x512xf32>
    %43 = arith.mulf %42, %41 : vector<128x512xf32>
    %44 = arith.maximumf %41, %43 : vector<128x512xf32>
    %45 = arith.truncf %44 : vector<128x512xf32> to vector<128x512xbf16>
    %46 = vector.extract_strided_slice %45 {offsets = [0, 0], sizes = [128, 256], strides = [1, 1]} : vector<128x512xbf16> to vector<128x256xbf16>
    %c0_26 = arith.constant 0 : index
    %c0_27 = arith.constant 0 : index
    %47 = vector.load %arg7[%c0_26, %c0_27] : memref<256x128xbf16, #tpu.memory_space<vmem>>, vector<256x128xbf16>
    %cst_28 = arith.constant dense<0.000000e+00> : vector<128x128xf32>
    %48 = tpu.matmul %46, %47, %cst_28 {dimension_numbers = #tpu.dot_dimension_numbers<[1], [0], [0], [1], [0, 0, 1, 1], [], []>} : vector<128x256xbf16>, vector<256x128xbf16>, vector<128x128xf32> -> vector<128x128xf32>
    %49 = vector.extract_strided_slice %45 {offsets = [0, 256], sizes = [128, 256], strides = [1, 1]} : vector<128x512xbf16> to vector<128x256xbf16>
    %c0_29 = arith.constant 0 : index
    %c0_30 = arith.constant 0 : index
    %50 = vector.load %arg8[%c0_29, %c0_30] : memref<256x128xbf16, #tpu.memory_space<vmem>>, vector<256x128xbf16>
    %cst_31 = arith.constant dense<0.000000e+00> : vector<128x128xf32>
    %51 = tpu.matmul %49, %50, %cst_31 {dimension_numbers = #tpu.dot_dimension_numbers<[1], [0], [0], [1], [0, 0, 1, 1], [], []>} : vector<128x256xbf16>, vector<256x128xbf16>, vector<128x128xf32> -> vector<128x128xf32>
    %52 = tpu.concatenate %48, %51 in 1 : vector<128x128xf32>, vector<128x128xf32> -> vector<128x256xf32>
    %c5 = arith.constant 5 : index
    %c0_32 = arith.constant 0 : index
    %53 = vector.load %arg12[%c5, %c0_32] : memref<11x512xf32, #tpu.memory_space<vmem>>, vector<1x256xf32>
    %54 = vector.broadcast %53 : vector<1x256xf32> to vector<128x256xf32>
    %55 = arith.addf %52, %54 : vector<128x256xf32>
    %cst_33 = arith.constant 2.000000e-01 : f32
    %56 = vector.broadcast %cst_33 : f32 to vector<128x256xf32>
    %57 = arith.mulf %56, %55 : vector<128x256xf32>
    %58 = arith.maximumf %55, %57 : vector<128x256xf32>
    %59 = arith.truncf %58 : vector<128x256xf32> to vector<128x256xbf16>
    %c0_34 = arith.constant 0 : index
    %c0_35 = arith.constant 0 : index
    %60 = vector.load %arg9[%c0_34, %c0_35] : memref<256x128xbf16, #tpu.memory_space<vmem>>, vector<256x128xbf16>
    %cst_36 = arith.constant dense<0.000000e+00> : vector<128x128xf32>
    %61 = tpu.matmul %59, %60, %cst_36 {dimension_numbers = #tpu.dot_dimension_numbers<[1], [0], [0], [1], [0, 0, 1, 1], [], []>} : vector<128x256xbf16>, vector<256x128xbf16>, vector<128x128xf32> -> vector<128x128xf32>
    %c6 = arith.constant 6 : index
    %c0_37 = arith.constant 0 : index
    %62 = vector.load %arg12[%c6, %c0_37] : memref<11x512xf32, #tpu.memory_space<vmem>>, vector<1x128xf32>
    %63 = vector.broadcast %62 : vector<1x128xf32> to vector<128x128xf32>
    %64 = arith.addf %61, %63 : vector<128x128xf32>
    %cst_38 = arith.constant 2.000000e-01 : f32
    %65 = vector.broadcast %cst_38 : f32 to vector<128x128xf32>
    %66 = arith.mulf %65, %64 : vector<128x128xf32>
    %67 = arith.maximumf %64, %66 : vector<128x128xf32>
    %68 = arith.truncf %67 : vector<128x128xf32> to vector<128x128xbf16>
    %c0_39 = arith.constant 0 : index
    %c0_40 = arith.constant 0 : index
    %69 = vector.load %arg10[%c0_39, %c0_40] : memref<128x128xbf16, #tpu.memory_space<vmem>>, vector<128x128xbf16>
    %cst_41 = arith.constant dense<0.000000e+00> : vector<128x128xf32>
    %70 = tpu.matmul %68, %69, %cst_41 {dimension_numbers = #tpu.dot_dimension_numbers<[1], [0], [0], [1], [0, 0, 1, 1], [], []>} : vector<128x128xbf16>, vector<128x128xbf16>, vector<128x128xf32> -> vector<128x128xf32>
    %c7 = arith.constant 7 : index
    %c0_42 = arith.constant 0 : index
    %71 = vector.load %arg12[%c7, %c0_42] : memref<11x512xf32, #tpu.memory_space<vmem>>, vector<1x128xf32>
    %72 = vector.broadcast %71 : vector<1x128xf32> to vector<128x128xf32>
    %73 = arith.addf %70, %72 : vector<128x128xf32>
    %cst_43 = arith.constant 2.000000e-01 : f32
    %74 = vector.broadcast %cst_43 : f32 to vector<128x128xf32>
    %75 = arith.mulf %74, %73 : vector<128x128xf32>
    %76 = arith.maximumf %73, %75 : vector<128x128xf32>
    %77 = arith.truncf %76 : vector<128x128xf32> to vector<128x128xbf16>
    %c0_44 = arith.constant 0 : index
    %c0_45 = arith.constant 0 : index
    %78 = vector.load %arg11[%c0_44, %c0_45] : memref<128x128xbf16, #tpu.memory_space<vmem>>, vector<128x128xbf16>
    %cst_46 = arith.constant dense<0.000000e+00> : vector<128x128xf32>
    %79 = tpu.matmul %77, %78, %cst_46 {dimension_numbers = #tpu.dot_dimension_numbers<[1], [0], [0], [1], [0, 0, 1, 1], [], []>} : vector<128x128xbf16>, vector<128x128xbf16>, vector<128x128xf32> -> vector<128x128xf32>
    %c8 = arith.constant 8 : index
    %c0_47 = arith.constant 0 : index
    %80 = vector.load %arg12[%c8, %c0_47] : memref<11x512xf32, #tpu.memory_space<vmem>>, vector<1x128xf32>
    %81 = vector.broadcast %80 : vector<1x128xf32> to vector<128x128xf32>
    %82 = arith.addf %79, %81 : vector<128x128xf32>
    %cst_48 = arith.constant 0.000000e+00 : f32
    %83 = vector.broadcast %cst_48 : f32 to vector<128x128xf32>
    %84 = arith.subf %83, %82 : vector<128x128xf32>
    %85 = math.exp %84 : vector<128x128xf32>
    %cst_49 = arith.constant 1.000000e+00 : f32
    %86 = vector.broadcast %cst_49 : f32 to vector<128x128xf32>
    %87 = arith.addf %86, %85 : vector<128x128xf32>
    %cst_50 = arith.constant 1.000000e+00 : f32
    %88 = vector.broadcast %cst_50 : f32 to vector<128x128xf32>
    %89 = arith.divf %88, %87 : vector<128x128xf32>
    %c9 = arith.constant 9 : index
    %c0_51 = arith.constant 0 : index
    %90 = vector.load %arg12[%c9, %c0_51] : memref<11x512xf32, #tpu.memory_space<vmem>>, vector<1x128xf32>
    %91 = vector.broadcast %90 : vector<1x128xf32> to vector<128x128xf32>
    %92 = arith.mulf %89, %91 : vector<128x128xf32>
    %c10 = arith.constant 10 : index
    %c0_52 = arith.constant 0 : index
    %93 = vector.load %arg12[%c10, %c0_52] : memref<11x512xf32, #tpu.memory_space<vmem>>, vector<1x128xf32>
    %94 = vector.broadcast %93 : vector<1x128xf32> to vector<128x128xf32>
    %95 = arith.addf %92, %94 : vector<128x128xf32>
    %96 = vector.extract_strided_slice %95 {offsets = [0, 0], sizes = [128, 8], strides = [1, 1]} : vector<128x128xf32> to vector<128x8xf32>
    %c0_53 = arith.constant 0 : index
    %c0_54 = arith.constant 0 : index
    %97 = vector.load %arg13[%c0_53, %c0_54] : memref<128x8xf32, #tpu.memory_space<vmem>>, vector<128x8xf32>
    tpu.vector_store %arg13[%c0_53, %c0_54], %96 {strides = array<i32>} : memref<128x8xf32, #tpu.memory_space<vmem>>, vector<128x8xf32>,
    return
  }
  func.func @transform_0(%arg0: i32) -> (i32, i32) {
    %c0_i32 = arith.constant 0 : i32
    %c0_i32_0 = arith.constant 0 : i32
    return %arg0, %c0_i32 : i32, i32
  }
  func.func @transform_1(%arg0: i32) -> (i32, i32) {
    %c0_i32 = arith.constant 0 : i32
    %c0_i32_0 = arith.constant 0 : i32
    %c0_i32_1 = arith.constant 0 : i32
    return %c0_i32, %c0_i32_0 : i32, i32
  }
  func.func @transform_2(%arg0: i32) -> (i32, i32) {
    %c0_i32 = arith.constant 0 : i32
    %c0_i32_0 = arith.constant 0 : i32
    %c0_i32_1 = arith.constant 0 : i32
    return %c0_i32, %c0_i32_0 : i32, i32
  }
  func.func @transform_3(%arg0: i32) -> (i32, i32) {
    %c0_i32 = arith.constant 0 : i32
    %c0_i32_0 = arith.constant 0 : i32
    %c0_i32_1 = arith.constant 0 : i32
    return %c0_i32, %c0_i32_0 : i32, i32
  }
  func.func @transform_4(%arg0: i32) -> (i32, i32) {
    %c0_i32 = arith.constant 0 : i32
    %c0_i32_0 = arith.constant 0 : i32
    %c0_i32_1 = arith.constant 0 : i32
    return %c0_i32, %c0_i32_0 : i32, i32
  }
  func.func @transform_5(%arg0: i32) -> (i32, i32) {
    %c0_i32 = arith.constant 0 : i32
    %c0_i32_0 = arith.constant 0 : i32
    %c0_i32_1 = arith.constant 0 : i32
    return %c0_i32, %c0_i32_0 : i32, i32
  }
  func.func @transform_6(%arg0: i32) -> (i32, i32) {
    %c0_i32 = arith.constant 0 : i32
    %c0_i32_0 = arith.constant 0 : i32
    %c0_i32_1 = arith.constant 0 : i32
    return %c0_i32, %c0_i32_0 : i32, i32
  }
  func.func @transform_7(%arg0: i32) -> (i32, i32) {
    %c0_i32 = arith.constant 0 : i32
    %c0_i32_0 = arith.constant 0 : i32
    %c0_i32_1 = arith.constant 0 : i32
    return %c0_i32, %c0_i32_0 : i32, i32
  }
  func.func @transform_8(%arg0: i32) -> (i32, i32) {
    %c0_i32 = arith.constant 0 : i32
    %c0_i32_0 = arith.constant 0 : i32
    %c0_i32_1 = arith.constant 0 : i32
    return %c0_i32, %c0_i32_0 : i32, i32
  }
  func.func @transform_9(%arg0: i32) -> (i32, i32) {
    %c0_i32 = arith.constant 0 : i32
    %c0_i32_0 = arith.constant 0 : i32
    %c0_i32_1 = arith.constant 0 : i32
    return %c0_i32, %c0_i32_0 : i32, i32
  }
  func.func @transform_10(%arg0: i32) -> (i32, i32) {
    %c0_i32 = arith.constant 0 : i32
    %c0_i32_0 = arith.constant 0 : i32
    %c0_i32_1 = arith.constant 0 : i32
    return %c0_i32, %c0_i32_0 : i32, i32
  }
  func.func @transform_11(%arg0: i32) -> (i32, i32) {
    %c0_i32 = arith.constant 0 : i32
    %c0_i32_0 = arith.constant 0 : i32
    %c0_i32_1 = arith.constant 0 : i32
    return %c0_i32, %c0_i32_0 : i32, i32
  }
  func.func @transform_12(%arg0: i32) -> (i32, i32) {
    %c0_i32 = arith.constant 0 : i32
    %c0_i32_0 = arith.constant 0 : i32
    return %arg0, %c0_i32 : i32, i32
  }
}

</mosaic_0001>

<llo_original>
// kernel: albedo_net_forward.1
$region0: #{albedo_net_forward.1}
  #allocation0 [shape = 'u32[]', space=smem, size = 0x4, offset = 0x4, fixed_abs, tag = 'smem constant byte address 0x4 - core index']
  #allocation1 [shape = 'u32[144,128]{1,0:T(1,128)}', space=vmem, size = 0x12000, scoped, tag = 'internal scratch']
  %s0 = inlined_call_operand.vmem [shape: bf16[128,32], index: 0, kind: input, shape index: {}]
  %s1 = inlined_call_operand.vmem [shape: bf16[32,128], index: 1, kind: input, shape index: {}]
  %s2 = inlined_call_operand.hbm [shape: bf16[128,256], index: 2, kind: input, shape index: {}]
  %s3 = inlined_call_operand.hbm [shape: bf16[256,256], index: 3, kind: input, shape index: {}]
  %s4 = inlined_call_operand.hbm [shape: bf16[256,256], index: 4, kind: input, shape index: {}]
  %s5 = inlined_call_operand.hbm [shape: bf16[256,512], index: 5, kind: input, shape index: {}]
  %s6 = inlined_call_operand.hbm [shape: bf16[256,128], index: 6, kind: input, shape index: {}]
  %s7 = inlined_call_operand.hbm [shape: bf16[256,128], index: 7, kind: input, shape index: {}]
  %s8 = inlined_call_operand.hbm [shape: bf16[256,128], index: 8, kind: input, shape index: {}]
  %s9 = inlined_call_operand.vmem [shape: bf16[128,128], index: 9, kind: input, shape index: {}]
  %s10 = inlined_call_operand.hbm [shape: bf16[128,128], index: 10, kind: input, shape index: {}]
  %s11 = inlined_call_operand.hbm [shape: f32[11,512], index: 11, kind: input, shape index: {}]
  %s12 = inlined_call_operand.vmem [shape: f32[128,8], index: 12, kind: output, shape index: {}]
  %s13 = sld [smem:[#allocation0]]
  $region94: #{albedo_net_forward.1} parent=0
    _
  %s15 = ssub.s32 1, %s13
  %s16 = scalar_select 0, %s15, %s13
  $region1: #{albedo_net_forward.1} parent=0
    #allocation2 [shape = 'u8[65536]{0}', space=vmem, size = 0x10000, scoped, tag = 'input window, operand 2, single buffered']
    #allocation3 [shape = 's32[1]{0}', space=sflag, size = 0x4, scoped, tag = 'scoped memory for albedo_net_forward.1']
    #allocation4 [shape = 'u8[131072]{0}', space=vmem, size = 0x20000, scoped, tag = 'input window, operand 3, single buffered']
    #allocation5 [shape = 's32[1]{0}', space=sflag, size = 0x4, scoped, tag = 'scoped memory for albedo_net_forward.1']
    #allocation6 [shape = 'u8[131072]{0}', space=vmem, size = 0x20000, scoped, tag = 'input window, operand 4, single buffered']
    #allocation7 [shape = 'u8[262144]{0}', space=vmem, size = 0x40000, scoped, tag = 'input window, operand 5, single buffered']
    #allocation8 [shape = 's32[1]{0}', space=sflag, size = 0x4, scoped, tag = 'scoped memory for albedo_net_forward.1']
    #allocation9 [shape = 'u8[65536]{0}', space=vmem, size = 0x10000, scoped, tag = 'input window, operand 6, single buffered']
    #allocation10 [shape = 'u8[65536]{0}', space=vmem, size = 0x10000, scoped, tag = 'input window, operand 7, single buffered']
    #allocation11 [shape = 's32[1]{0}', space=sflag, size = 0x4, scoped, tag = 'scoped memory for albedo_net_forward.1']
    #allocation12 [shape = 'u8[65536]{0}', space=vmem, size = 0x10000, scoped, tag = 'input window, operand 8, single buffered']
    #allocation13 [shape = 'u8[32768]{0}', space=vmem, size = 0x8000, scoped, tag = 'input window, operand 10, single buffered']
    #allocation14 [shape = 's32[1]{0}', space=sflag, size = 0x4, scoped, tag = 'scoped memory for albedo_net_forward.1']
    #allocation15 [shape = 'u8[32768]{0}', space=vmem, size = 0x8000, scoped, tag = 'input window, operand 11, single buffered']
    %17 = vsyncpa [#allocation3], 0
    %18 = vsyncpa [#allocation5], 0
    %19 = vsyncpa [#allocation8], 0
    %20 = vsyncpa [#allocation11], 0
    %21 = vsyncpa [#allocation14], 0
    // Predicated region
    $region2: #{albedo_net_forward.1} parent=1 // pred_check
      _
    $region3: #{albedo_net_forward.1} parent=1 // pred_check_branch
      %23 = sbr.rel (0) target = $region5
    $region4: #{albedo_net_forward.1} parent=1 // pred_region
      _
    $region5: #{albedo_net_forward.1} parent=1 // pred_fallthru
      _
    // Predicated region
    $region6: #{albedo_net_forward.1} parent=1 // pred_check
      _
    $region7: #{albedo_net_forward.1} parent=1 // pred_check_branch
      %25 = sbr.rel (0) target = $region9
    $region8: #{albedo_net_forward.1} parent=1 // pred_region
      _
    $region9: #{albedo_net_forward.1} parent=1 // pred_fallthru
      _
    // Predicated region
    $region10: #{albedo_net_forward.1} parent=1 // pred_check
      _
    $region11: #{albedo_net_forward.1} parent=1 // pred_check_branch
      %27 = sbr.rel (0) target = $region13
    $region12: #{albedo_net_forward.1} parent=1 // pred_region
      %s29 = ssub.s32 2048, 2048
      %30 = vsyncadd [#allocation3], %s29
      %s31 = sshll.u32 [#allocation2], 4
      %s32 = int_to_ptr.vmem [resolvable:$true] %s31
      %37 = dma.hbm_to_vmem [thread:$0]  %s2, 2048, %s32, [#allocation3], 128, 128, 8
    $region13: #{albedo_net_forward.1} parent=1 // pred_fallthru
      _
    // Predicated region
    $region14: #{albedo_net_forward.1} parent=1 // pred_check
      _
    $region15: #{albedo_net_forward.1} parent=1 // pred_check_branch
      %39 = sbr.rel (0) target = $region17
    $region16: #{albedo_net_forward.1} parent=1 // pred_region
      %s41 = ssub.s32 4096, 4096
      %42 = vsyncadd [#allocation5], %s41
      %s43 = sshll.u32 [#allocation4], 4
      %s44 = int_to_ptr.vmem [resolvable:$true] %s43
      %49 = dma.hbm_to_vmem [thread:$0]  %s3, 4096, %s44, [#allocation5], 128, 128, 8
    $region17: #{albedo_net_forward.1} parent=1 // pred_fallthru
      _
    // Predicated region
    $region18: #{albedo_net_forward.1} parent=1 // pred_check
      _
    $region19: #{albedo_net_forward.1} parent=1 // pred_check_branch
      %51 = sbr.rel (0) target = $region21
    $region20: #{albedo_net_forward.1} parent=1 // pred_region
      %s53 = ssub.s32 4096, 4096
      %54 = vsyncadd [#allocation5], %s53
      %s55 = sshll.u32 [#allocation6], 4
      %s56 = int_to_ptr.vmem [resolvable:$true] %s55
      %61 = dma.hbm_to_vmem [thread:$0]  %s4, 4096, %s56, [#allocation5], 128, 128, 8
    $region21: #{albedo_net_forward.1} parent=1 // pred_fallthru
      _
    // Predicated region
    $region22: #{albedo_net_forward.1} parent=1 // pred_check
      _
    $region23: #{albedo_net_forward.1} parent=1 // pred_check_branch
      %63 = sbr.rel (0) target = $region25
    $region24: #{albedo_net_forward.1} parent=1 // pred_region
      %s65 = ssub.s32 8192, 8192
      %66 = vsyncadd [#allocation8], %s65
      %s67 = sshll.u32 [#allocation7], 4
      %s68 = int_to_ptr.vmem [resolvable:$true] %s67
      %73 = dma.hbm_to_vmem [thread:$0]  %s5, 8192, %s68, [#allocation8], 256, 256, 16
    $region25: #{albedo_net_forward.1} parent=1 // pred_fallthru
      _
    // Predicated region
    $region26: #{albedo_net_forward.1} parent=1 // pred_check
      _
    $region27: #{albedo_net_forward.1} parent=1 // pred_check_branch
      %75 = sbr.rel (0) target = $region29
    $region28: #{albedo_net_forward.1} parent=1 // pred_region
      %s77 = ssub.s32 2048, 2048
      %78 = vsyncadd [#allocation8], %s77
      %s79 = sshll.u32 [#allocation9], 4
      %s80 = int_to_ptr.vmem [resolvable:$true] %s79
      %85 = dma.hbm_to_vmem [thread:$0]  %s6, 2048, %s80, [#allocation8], 64, 64, 4
    $region29: #{albedo_net_forward.1} parent=1 // pred_fallthru
      _
    // Predicated region
    $region30: #{albedo_net_forward.1} parent=1 // pred_check
      _
    $region31: #{albedo_net_forward.1} parent=1 // pred_check_branch
      %87 = sbr.rel (0) target = $region33
    $region32: #{albedo_net_forward.1} parent=1 // pred_region
      %s89 = ssub.s32 2048, 2048
      %90 = vsyncadd [#allocation11], %s89
      %s91 = sshll.u32 [#allocation10], 4
      %s92 = int_to_ptr.vmem [resolvable:$true] %s91
      %97 = dma.hbm_to_vmem [thread:$0]  %s7, 2048, %s92, [#allocation11], 64, 64, 4
    $region33: #{albedo_net_forward.1} parent=1 // pred_fallthru
      _
    // Predicated region
    $region34: #{albedo_net_forward.1} parent=1 // pred_check
      _
    $region35: #{albedo_net_forward.1} parent=1 // pred_check_branch
      %99 = sbr.rel (0) target = $region37
    $region36: #{albedo_net_forward.1} parent=1 // pred_region
      %s101 = ssub.s32 2048, 2048
      %102 = vsyncadd [#allocation11], %s101
      %s103 = sshll.u32 [#allocation12], 4
      %s104 = int_to_ptr.vmem [resolvable:$true] %s103
      %109 = dma.hbm_to_vmem [thread:$0]  %s8, 2048, %s104, [#allocation11], 64, 64, 4
    $region37: #{albedo_net_forward.1} parent=1 // pred_fallthru
      _
    // Predicated region
    $region38: #{albedo_net_forward.1} parent=1 // pred_check
      _
    $region39: #{albedo_net_forward.1} parent=1 // pred_check_branch
      %111 = sbr.rel (0) target = $region41
    $region40: #{albedo_net_forward.1} parent=1 // pred_region
      _
    $region41: #{albedo_net_forward.1} parent=1 // pred_fallthru
      _
    // Predicated region
    $region42: #{albedo_net_forward.1} parent=1 // pred_check
      _
    $region43: #{albedo_net_forward.1} parent=1 // pred_check_branch
      %113 = sbr.rel (0) target = $region45
    $region44: #{albedo_net_forward.1} parent=1 // pred_region
      %s115 = ssub.s32 1024, 1024
      %116 = vsyncadd [#allocation14], %s115
      %s117 = sshll.u32 [#allocation13], 4
      %s118 = int_to_ptr.vmem [resolvable:$true] %s117
      %123 = dma.hbm_to_vmem [thread:$0]  %s10, 1024, %s118, [#allocation14], 64, 64, 4
    $region45: #{albedo_net_forward.1} parent=1 // pred_fallthru
      _
    // Predicated region
    $region46: #{albedo_net_forward.1} parent=1 // pred_check
      _
    $region47: #{albedo_net_forward.1} parent=1 // pred_check_branch
      %125 = sbr.rel (0) target = $region49
    $region48: #{albedo_net_forward.1} parent=1 // pred_region
      %s127 = ssub.s32 1024, 1024
      %128 = vsyncadd [#allocation14], %s127
      %s129 = sshll.u32 [#allocation15], 4
      %s130 = int_to_ptr.vmem [resolvable:$true] %s129
      %135 = dma.hbm_to_vmem [thread:$0]  %s11, 1024, %s130, [#allocation14], 512, 512, 32
    $region49: #{albedo_net_forward.1} parent=1 // pred_fallthru
      _
    // Predicated region
    $region50: #{albedo_net_forward.1} parent=1 // pred_check
      _
    $region51: #{albedo_net_forward.1} parent=1 // pred_check_branch
      %137 = sbr.rel (0) target = $region53
    $region52: #{albedo_net_forward.1} parent=1 // pred_region
      %138 = dma.done [#allocation3], 2048
    $region53: #{albedo_net_forward.1} parent=1 // pred_fallthru
      _
    // Predicated region
    $region54: #{albedo_net_forward.1} parent=1 // pred_check
      _
    $region55: #{albedo_net_forward.1} parent=1 // pred_check_branch
      %140 = sbr.rel (0) target = $region57
    $region56: #{albedo_net_forward.1} parent=1 // pred_region
      %141 = dma.done [#allocation5], 4096
    $region57: #{albedo_net_forward.1} parent=1 // pred_fallthru
      _
    // Predicated region
    $region58: #{albedo_net_forward.1} parent=1 // pred_check
      _
    $region59: #{albedo_net_forward.1} parent=1 // pred_check_branch
      %143 = sbr.rel (0) target = $region61
    $region60: #{albedo_net_forward.1} parent=1 // pred_region
      %144 = dma.done [#allocation5], 4096
    $region61: #{albedo_net_forward.1} parent=1 // pred_fallthru
      _
    // Predicated region
    $region62: #{albedo_net_forward.1} parent=1 // pred_check
      _
    $region63: #{albedo_net_forward.1} parent=1 // pred_check_branch
      %146 = sbr.rel (0) target = $region65
    $region64: #{albedo_net_forward.1} parent=1 // pred_region
      %147 = dma.done [#allocation8], 8192
    $region65: #{albedo_net_forward.1} parent=1 // pred_fallthru
      _
    // Predicated region
    $region66: #{albedo_net_forward.1} parent=1 // pred_check
      _
    $region67: #{albedo_net_forward.1} parent=1 // pred_check_branch
      %149 = sbr.rel (0) target = $region69
    $region68: #{albedo_net_forward.1} parent=1 // pred_region
      %150 = dma.done [#allocation8], 2048
    $region69: #{albedo_net_forward.1} parent=1 // pred_fallthru
      _
    // Predicated region
    $region70: #{albedo_net_forward.1} parent=1 // pred_check
      _
    $region71: #{albedo_net_forward.1} parent=1 // pred_check_branch
      %152 = sbr.rel (0) target = $region73
    $region72: #{albedo_net_forward.1} parent=1 // pred_region
      %153 = dma.done [#allocation11], 2048
    $region73: #{albedo_net_forward.1} parent=1 // pred_fallthru
      _
    // Predicated region
    $region74: #{albedo_net_forward.1} parent=1 // pred_check
      _
    $region75: #{albedo_net_forward.1} parent=1 // pred_check_branch
      %155 = sbr.rel (0) target = $region77
    $region76: #{albedo_net_forward.1} parent=1 // pred_region
      %156 = dma.done [#allocation11], 2048
    $region77: #{albedo_net_forward.1} parent=1 // pred_fallthru
      _
    // Predicated region
    $region78: #{albedo_net_forward.1} parent=1 // pred_check
      _
    $region79: #{albedo_net_forward.1} parent=1 // pred_check_branch
      %158 = sbr.rel (0) target = $region81
    $region80: #{albedo_net_forward.1} parent=1 // pred_region
      %159 = dma.done [#allocation14], 1024
    $region81: #{albedo_net_forward.1} parent=1 // pred_fallthru
      _
    // Predicated region
    $region82: #{albedo_net_forward.1} parent=1 // pred_check
      _
    $region83: #{albedo_net_forward.1} parent=1 // pred_check_branch
      %161 = sbr.rel (0) target = $region85
    $region84: #{albedo_net_forward.1} parent=1 // pred_region
      %162 = dma.done [#allocation14], 1024
    $region85: #{albedo_net_forward.1} parent=1 // pred_fallthru
      _
    %v164 = vld [vmem:[%s0] sm:$0xf]
    %v165 = vld [vmem:[%s0 + $0x4] sm:$0xf]
    %v166 = vld [vmem:[%s0 + $0x8] sm:$0xf]
    %v167 = vld [vmem:[%s0 + $0xc] sm:$0xf]
    %v168 = vld [vmem:[%s0 + $0x10] sm:$0xf]
    %v169 = vld [vmem:[%s0 + $0x14] sm:$0xf]
    %v170 = vld [vmem:[%s0 + $0x18] sm:$0xf]
    %v171 = vld [vmem:[%s0 + $0x1c] sm:$0xf]
    %v172 = vld [vmem:[%s0 + $0x20] sm:$0xf]
    %v173 = vld [vmem:[%s0 + $0x24] sm:$0xf]
    %v174 = vld [vmem:[%s0 + $0x28] sm:$0xf]
    %v175 = vld [vmem:[%s0 + $0x2c] sm:$0xf]
    %v176 = vld [vmem:[%s0 + $0x30] sm:$0xf]
    %v177 = vld [vmem:[%s0 + $0x34] sm:$0xf]
    %v178 = vld [vmem:[%s0 + $0x38] sm:$0xf]
    %v179 = vld [vmem:[%s0 + $0x3c] sm:$0xf]
    %v180 = vld [vmem:[%s1] sm:$0xf]
    %v181 = vld [vmem:[%s1 + $0x4] sm:$0xf]
    %v182 = vld [vmem:[%s1 + $0x8] sm:$0xf]
    %v183 = vld [vmem:[%s1 + $0xc] sm:$0xf]
    %v184 = vld [vmem:[#allocation15] ss:$0 sm:$0xff]
    %v201 = vunpack.c.l.b16 %v164
    %v202 = vunpack.c.l.b16 %v165
    %v203 = vunpack.c.l.b16 %v166
    %v204 = vunpack.c.l.b16 %v167
    %v205 = vunpack.c.l.b16 %v168
    %v206 = vunpack.c.l.b16 %v169
    %v207 = vunpack.c.l.b16 %v170
    %v208 = vunpack.c.l.b16 %v171
    %v209 = vunpack.c.l.b16 %v172
    %v210 = vunpack.c.l.b16 %v173
    %v211 = vunpack.c.l.b16 %v174
    %v212 = vunpack.c.l.b16 %v175
    %v213 = vunpack.c.l.b16 %v176
    %v214 = vunpack.c.l.b16 %v177
    %v215 = vunpack.c.l.b16 %v178
    %v216 = vunpack.c.l.b16 %v179
    %v217 = vpack.c.b16 %v202, %v201
    %v218 = vpack.c.b16 %v204, %v203
    %v219 = vpack.c.b16 %v206, %v205
    %v220 = vpack.c.b16 %v208, %v207
    %v221 = vpack.c.b16 %v210, %v209
    %v222 = vpack.c.b16 %v212, %v211
    %v223 = vpack.c.b16 %v214, %v213
    %v224 = vpack.c.b16 %v216, %v215
    %v229 = vunpack.c.l.b16 %v180
    %v230 = vunpack.c.l.b16 %v181
    %v231 = vunpack.c.l.b16 %v182
    %v232 = vunpack.c.l.b16 %v183
    %v233 = vpack.c.b16 %v230, %v229
    %v234 = vpack.c.b16 %v232, %v231
    %vm237 = vcmask 261120
    %v239 = vsel %vm237, %v217, 0
    %v242 = vsel %vm237, %v218, 0
    %v245 = vsel %vm237, %v219, 0
    %v248 = vsel %vm237, %v220, 0
    %v251 = vsel %vm237, %v221, 0
    %v254 = vsel %vm237, %v222, 0
    %v257 = vsel %vm237, %v223, 0
    %v260 = vsel %vm237, %v224, 0
    %262 = vmatprep.subr.bf16.mxu0 0
    %263 = vmatpush1.bf16.msra.mxu0 %v233
    %264 = vmatprep.subr.bf16.mxu0 0
    %265 = vmatpush1.bf16.msra.mxu0 %v234
    %266 = vmatprep.subr.bf16.mxu0 0
    %267 = vmatpush1.bf16.msra.mxu0 0
    %268 = vmatprep.subr.bf16.mxu0 0
    %269 = vmatpush1.bf16.msra.mxu0 0
    %270 = vmatprep.subr.bf16.mxu0 0
    %271 = vmatpush1.bf16.msra.mxu0 0
    %272 = vmatprep.subr.bf16.mxu0 0
    %273 = vmatpush1.bf16.msra.mxu0 0
    %274 = vmatprep.subr.bf16.mxu0 0
    %275 = vmatpush1.bf16.msra.mxu0 0
    %276 = vmatprep.subr.bf16.mxu0 0
    %277 = vmatpush1.bf16.msra.mxu0 0
    %278 = vmatprep.subr.bf16.mxu0 0
    %279 = vmatpush1.bf16.msra.mxu0 0
    %280 = vmatprep.subr.bf16.mxu0 0
    %281 = vmatpush1.bf16.msra.mxu0 0
    %282 = vmatprep.subr.bf16.mxu0 0
    %283 = vmatpush1.bf16.msra.mxu0 0
    %284 = vmatprep.subr.bf16.mxu0 0
    %285 = vmatpush1.bf16.msra.mxu0 0
    %286 = vmatprep.subr.bf16.mxu0 0
    %287 = vmatpush1.bf16.msra.mxu0 0
    %288 = vmatprep.subr.bf16.mxu0 0
    %289 = vmatpush1.bf16.msra.mxu0 0
    %290 = vmatprep.subr.bf16.mxu0 0
    %291 = vmatpush1.bf16.msra.mxu0 0
    %292 = vmatprep.subr.bf16.mxu0 0
    %293 = vmatpush1.bf16.msra.mxu0 0
    %294 = vmatprep.mubr.bf16.mxu0 0
    %295 = vmatmul.mubr.bf16.gmra.mrb[0].mxu0 %v239
    %v296 = vpop.f32.mrb[0].mxu0
    %v297 = vadd.f32 %v184, %v296
    %v298 = vpop.f32.mrb[0].mxu0
    %v299 = vpop.f32.mrb[0].mxu0
    %v300 = vadd.f32 %v184, %v299
    %v301 = vpop.f32.mrb[0].mxu0
    %302 = vmatprep.mubr.bf16.mxu0 0
    %303 = vmatmul.mubr.bf16.gmra.mrb[0].mxu0 %v242
    %v304 = vpop.f32.mrb[0].mxu0
    %v305 = vadd.f32 %v184, %v304
    %v306 = vpop.f32.mrb[0].mxu0
    %v307 = vpop.f32.mrb[0].mxu0
    %v308 = vadd.f32 %v184, %v307
    %v309 = vpop.f32.mrb[0].mxu0
    %310 = vmatprep.mubr.bf16.mxu0 0
    %311 = vmatmul.mubr.bf16.gmra.mrb[0].mxu0 %v245
    %v312 = vpop.f32.mrb[0].mxu0
    %v313 = vadd.f32 %v184, %v312
    %v314 = vpop.f32.mrb[0].mxu0
    %v315 = vpop.f32.mrb[0].mxu0
    %v316 = vadd.f32 %v184, %v315
    %v317 = vpop.f32.mrb[0].mxu0
    %318 = vmatprep.mubr.bf16.mxu0 0
    %319 = vmatmul.mubr.bf16.gmra.mrb[0].mxu0 %v248
    %v320 = vpop.f32.mrb[0].mxu0
    %v321 = vadd.f32 %v184, %v320
    %v322 = vpop.f32.mrb[0].mxu0
    %v323 = vpop.f32.mrb[0].mxu0
    %v324 = vadd.f32 %v184, %v323
    %v325 = vpop.f32.mrb[0].mxu0
    %326 = vmatprep.mubr.bf16.mxu0 0
    %327 = vmatmul.mubr.bf16.gmra.mrb[0].mxu0 %v251
    %v328 = vpop.f32.mrb[0].mxu0
    %v329 = vadd.f32 %v184, %v328
    %v330 = vpop.f32.mrb[0].mxu0
    %v331 = vpop.f32.mrb[0].mxu0
    %v332 = vadd.f32 %v184, %v331
    %v333 = vpop.f32.mrb[0].mxu0
    %334 = vmatprep.mubr.bf16.mxu0 0
    %335 = vmatmul.mubr.bf16.gmra.mrb[0].mxu0 %v254
    %v336 = vpop.f32.mrb[0].mxu0
    %v337 = vadd.f32 %v184, %v336
    %v338 = vpop.f32.mrb[0].mxu0
    %v339 = vpop.f32.mrb[0].mxu0
    %v340 = vadd.f32 %v184, %v339
    %v341 = vpop.f32.mrb[0].mxu0
    %342 = vmatprep.mubr.bf16.mxu0 0
    %343 = vmatmul.mubr.bf16.gmra.mrb[0].mxu0 %v257
    %v344 = vpop.f32.mrb[0].mxu0
    %v345 = vadd.f32 %v184, %v344
    %v346 = vpop.f32.mrb[0].mxu0
    %v347 = vpop.f32.mrb[0].mxu0
    %v348 = vadd.f32 %v184, %v347
    %v349 = vpop.f32.mrb[0].mxu0
    %350 = vmatprep.mubr.bf16.mxu0 0
    %351 = vmatmul.mubr.bf16.gmra.mrb[0].mxu0 %v260
    %v352 = vpop.f32.mrb[0].mxu0
    %v353 = vadd.f32 %v184, %v352
    %v354 = vpop.f32.mrb[0].mxu0
    %v355 = vpop.f32.mrb[0].mxu0
    %v356 = vadd.f32 %v184, %v355
    %v357 = vpop.f32.mrb[0].mxu0
    %358 = vdwg.mxu0
    %v359 = vmul.f32 %v297, 0.2
    %v360 = vmul.f32 %v300, 0.2
    %v361 = vmul.f32 %v305, 0.2
    %v362 = vmul.f32 %v308, 0.2
    %v363 = vmul.f32 %v313, 0.2
    %v364 = vmul.f32 %v316, 0.2
    %v365 = vmul.f32 %v321, 0.2
    %v366 = vmul.f32 %v324, 0.2
    %v367 = vmul.f32 %v329, 0.2
    %v368 = vmul.f32 %v332, 0.2
    %v369 = vmul.f32 %v337, 0.2
    %v370 = vmul.f32 %v340, 0.2
    %v371 = vmul.f32 %v345, 0.2
    %v372 = vmul.f32 %v348, 0.2
    %v373 = vmul.f32 %v353, 0.2
    %v374 = vmul.f32 %v356, 0.2
    %v375 = vmax.f32 %v297, %v359
    %v376 = vmax.f32 %v300, %v360
    %v377 = vmax.f32 %v305, %v361
    %v378 = vmax.f32 %v308, %v362
    %v379 = vmax.f32 %v313, %v363
    %v380 = vmax.f32 %v316, %v364
    %v381 = vmax.f32 %v321, %v365
    %v382 = vmax.f32 %v324, %v366
    %v383 = vmax.f32 %v329, %v367
    %v384 = vmax.f32 %v332, %v368
    %v385 = vmax.f32 %v337, %v369
    %v386 = vmax.f32 %v340, %v370
    %v387 = vmax.f32 %v345, %v371
    %v388 = vmax.f32 %v348, %v372
    %v389 = vmax.f32 %v353, %v373
    %v390 = vmax.f32 %v356, %v374
    %v391 = vpack.c.bf16 %v376, %v375
    %v392 = vpack.c.bf16 %v378, %v377
    %v393 = vpack.c.bf16 %v380, %v379
    %v394 = vpack.c.bf16 %v382, %v381
    %v395 = vpack.c.bf16 %v384, %v383
    %v396 = vpack.c.bf16 %v386, %v385
    %v397 = vpack.c.bf16 %v388, %v387
    %v398 = vpack.c.bf16 %v390, %v389
    %v399 = vld [vmem:[#allocation2] sm:$0xff]
    %v400 = vld [vmem:[#allocation2 + $0x8] sm:$0xff]
    %v401 = vld [vmem:[#allocation2 + $0x10] sm:$0xff]
    %v402 = vld [vmem:[#allocation2 + $0x18] sm:$0xff]
    %v403 = vld [vmem:[#allocation2 + $0x20] sm:$0xff]
    %v404 = vld [vmem:[#allocation2 + $0x28] sm:$0xff]
    %v405 = vld [vmem:[#allocation2 + $0x30] sm:$0xff]
    %v406 = vld [vmem:[#allocation2 + $0x38] sm:$0xff]
    %v407 = vld [vmem:[#allocation2 + $0x40] sm:$0xff]
    %v408 = vld [vmem:[#allocation2 + $0x48] sm:$0xff]
    %v409 = vld [vmem:[#allocation2 + $0x50] sm:$0xff]
    %v410 = vld [vmem:[#allocation2 + $0x58] sm:$0xff]
    %v411 = vld [vmem:[#allocation2 + $0x60] sm:$0xff]
    %v412 = vld [vmem:[#allocation2 + $0x68] sm:$0xff]
    %v413 = vld [vmem:[#allocation2 + $0x70] sm:$0xff]
    %v414 = vld [vmem:[#allocation2 + $0x78] sm:$0xff]
    %s415 = scalar_lea.vmem [#allocation15], 1
    %v416 = vld [vmem:[%s415] ss:$8 sm:$0x3]
    %v418 = vlaneseq
    %v419 = vshrl.u32 %v418, 7
    %v420 = vsub.s32 0, %v419
    %v421 = vrot.slane %v416, %v420
    %v422 = vlaneseq
    %v423 = vshrl.u32 %v422, 7
    %v424 = vsub.s32 1, %v423
    %v425 = vrot.slane %v416, %v424
    %v444 = vunpack.c.l.b16 %v399
    %v445 = vunpack.c.h.b16 %v399
    %v446 = vunpack.c.l.b16 %v400
    %v447 = vunpack.c.h.b16 %v400
    %v448 = vunpack.c.l.b16 %v401
    %v449 = vunpack.c.h.b16 %v401
    %v450 = vunpack.c.l.b16 %v402
    %v451 = vunpack.c.h.b16 %v402
    %v452 = vunpack.c.l.b16 %v403
    %v453 = vunpack.c.h.b16 %v403
    %v454 = vunpack.c.l.b16 %v404
    %v455 = vunpack.c.h.b16 %v404
    %v456 = vunpack.c.l.b16 %v405
    %v457 = vunpack.c.h.b16 %v405
    %v458 = vunpack.c.l.b16 %v406
    %v459 = vunpack.c.h.b16 %v406
    %v460 = vunpack.c.l.b16 %v407
    %v461 = vunpack.c.h.b16 %v407
    %v462 = vunpack.c.l.b16 %v408
    %v463 = vunpack.c.h.b16 %v408
    %v464 = vunpack.c.l.b16 %v409
    %v465 = vunpack.c.h.b16 %v409
    %v466 = vunpack.c.l.b16 %v410
    %v467 = vunpack.c.h.b16 %v410
    %v468 = vunpack.c.l.b16 %v411
    %v469 = vunpack.c.h.b16 %v411
    %v470 = vunpack.c.l.b16 %v412
    %v471 = vunpack.c.h.b16 %v412
    %v472 = vunpack.c.l.b16 %v413
    %v473 = vunpack.c.h.b16 %v413
    %v474 = vunpack.c.l.b16 %v414
    %v475 = vunpack.c.h.b16 %v414
    %v476 = vpack.c.b16 %v446, %v444
    %v477 = vpack.c.b16 %v447, %v445
    %v478 = vpack.c.b16 %v450, %v448
    %v479 = vpack.c.b16 %v451, %v449
    %v480 = vpack.c.b16 %v454, %v452
    %v481 = vpack.c.b16 %v455, %v453
    %v482 = vpack.c.b16 %v458, %v456
    %v483 = vpack.c.b16 %v459, %v457
    %v484 = vpack.c.b16 %v462, %v460
    %v485 = vpack.c.b16 %v463, %v461
    %v486 = vpack.c.b16 %v466, %v464
    %v487 = vpack.c.b16 %v467, %v465
    %v488 = vpack.c.b16 %v470, %v468
    %v489 = vpack.c.b16 %v471, %v469
    %v490 = vpack.c.b16 %v474, %v472
    %v491 = vpack.c.b16 %v475, %v473
    %508 = vmatprep.subr.bf16.mxu0 %v477
    %509 = vmatpush1.bf16.msra.mxu0 %v476
    %510 = vmatprep.subr.bf16.mxu0 %v479
    %511 = vmatpush1.bf16.msra.mxu0 %v478
    %512 = vmatprep.subr.bf16.mxu0 %v481
    %513 = vmatpush1.bf16.msra.mxu0 %v480
    %514 = vmatprep.subr.bf16.mxu0 %v483
    %515 = vmatpush1.bf16.msra.mxu0 %v482
    %516 = vmatprep.subr.bf16.mxu0 %v485
    %517 = vmatpush1.bf16.msra.mxu0 %v484
    %518 = vmatprep.subr.bf16.mxu0 %v487
    %519 = vmatpush1.bf16.msra.mxu0 %v486
    %520 = vmatprep.subr.bf16.mxu0 %v489
    %521 = vmatpush1.bf16.msra.mxu0 %v488
    %522 = vmatprep.subr.bf16.mxu0 %v491
    %523 = vmatpush1.bf16.msra.mxu0 %v490
    %524 = vmatprep.subr.bf16.mxu0 0
    %525 = vmatpush1.bf16.msra.mxu0 0
    %526 = vmatprep.subr.bf16.mxu0 0
    %527 = vmatpush1.bf16.msra.mxu0 0
    %528 = vmatprep.subr.bf16.mxu0 0
    %529 = vmatpush1.bf16.msra.mxu0 0
    %530 = vmatprep.subr.bf16.mxu0 0
    %531 = vmatpush1.bf16.msra.mxu0 0
    %532 = vmatprep.subr.bf16.mxu0 0
    %533 = vmatpush1.bf16.msra.mxu0 0
    %534 = vmatprep.subr.bf16.mxu0 0
    %535 = vmatpush1.bf16.msra.mxu0 0
    %536 = vmatprep.subr.bf16.mxu0 0
    %537 = vmatpush1.bf16.msra.mxu0 0
    %538 = vmatprep.subr.bf16.mxu0 0
    %539 = vmatpush1.bf16.msra.mxu0 0
    %540 = vmatprep.mubr.bf16.mxu0 0
    %541 = vmatmul.mubr.bf16.gmra.mrb[0].mxu0 %v391
    %v542 = vpop.f32.mrb[0].mxu0
    %v543 = vadd.f32 %v421, %v542
    %v544 = vpop.f32.mrb[0].mxu0
    %v545 = vadd.f32 %v425, %v544
    %v546 = vpop.f32.mrb[0].mxu0
    %v547 = vadd.f32 %v421, %v546
    %v548 = vpop.f32.mrb[0].mxu0
    %v549 = vadd.f32 %v425, %v548
    %550 = vmatprep.mubr.bf16.mxu0 0
    %551 = vmatmul.mubr.bf16.gmra.mrb[0].mxu0 %v392
    %v552 = vpop.f32.mrb[0].mxu0
    %v553 = vadd.f32 %v421, %v552
    %v554 = vpop.f32.mrb[0].mxu0
    %v555 = vadd.f32 %v425, %v554
    %v556 = vpop.f32.mrb[0].mxu0
    %v557 = vadd.f32 %v421, %v556
    %v558 = vpop.f32.mrb[0].mxu0
    %v559 = vadd.f32 %v425, %v558
    %560 = vmatprep.mubr.bf16.mxu0 0
    %561 = vmatmul.mubr.bf16.gmra.mrb[0].mxu0 %v393
    %v562 = vpop.f32.mrb[0].mxu0
    %v563 = vadd.f32 %v421, %v562
    %v564 = vpop.f32.mrb[0].mxu0
    %v565 = vadd.f32 %v425, %v564
    %v566 = vpop.f32.mrb[0].mxu0
    %v567 = vadd.f32 %v421, %v566
    %v568 = vpop.f32.mrb[0].mxu0
    %v569 = vadd.f32 %v425, %v568
    %570 = vmatprep.mubr.bf16.mxu0 0
    %571 = vmatmul.mubr.bf16.gmra.mrb[0].mxu0 %v394
    %v572 = vpop.f32.mrb[0].mxu0
    %v573 = vadd.f32 %v421, %v572
    %v574 = vpop.f32.mrb[0].mxu0
    %v575 = vadd.f32 %v425, %v574
    %v576 = vpop.f32.mrb[0].mxu0
    %v577 = vadd.f32 %v421, %v576
    %v578 = vpop.f32.mrb[0].mxu0
    %v579 = vadd.f32 %v425, %v578
    %580 = vmatprep.mubr.bf16.mxu0 0
    %581 = vmatmul.mubr.bf16.gmra.mrb[0].mxu0 %v395
    %v582 = vpop.f32.mrb[0].mxu0
    %v583 = vadd.f32 %v421, %v582
    %v584 = vpop.f32.mrb[0].mxu0
    %v585 = vadd.f32 %v425, %v584
    %v586 = vpop.f32.mrb[0].mxu0
    %v587 = vadd.f32 %v421, %v586
    %v588 = vpop.f32.mrb[0].mxu0
    %v589 = vadd.f32 %v425, %v588
    %590 = vmatprep.mubr.bf16.mxu0 0
    %591 = vmatmul.mubr.bf16.gmra.mrb[0].mxu0 %v396
    %v592 = vpop.f32.mrb[0].mxu0
    %v593 = vadd.f32 %v421, %v592
    %v594 = vpop.f32.mrb[0].mxu0
    %v595 = vadd.f32 %v425, %v594
    %v596 = vpop.f32.mrb[0].mxu0
    %v597 = vadd.f32 %v421, %v596
    %v598 = vpop.f32.mrb[0].mxu0
    %v599 = vadd.f32 %v425, %v598
    %600 = vmatprep.mubr.bf16.mxu0 0
    %601 = vmatmul.mubr.bf16.gmra.mrb[0].mxu0 %v397
    %v602 = vpop.f32.mrb[0].mxu0
    %v603 = vadd.f32 %v421, %v602
    %v604 = vpop.f32.mrb[0].mxu0
    %v605 = vadd.f32 %v425, %v604
    %v606 = vpop.f32.mrb[0].mxu0
    %v607 = vadd.f32 %v421, %v606
    %v608 = vpop.f32.mrb[0].mxu0
    %v609 = vadd.f32 %v425, %v608
    %610 = vmatprep.mubr.bf16.mxu0 0
    %611 = vmatmul.mubr.bf16.gmra.mrb[0].mxu0 %v398
    %v612 = vpop.f32.mrb[0].mxu0
    %v613 = vadd.f32 %v421, %v612
    %v614 = vpop.f32.mrb[0].mxu0
    %v615 = vadd.f32 %v425, %v614
    %v616 = vpop.f32.mrb[0].mxu0
    %v617 = vadd.f32 %v421, %v616
    %v618 = vpop.f32.mrb[0].mxu0
    %v619 = vadd.f32 %v425, %v618
    %620 = vdwg.mxu0
    %v621 = vmul.f32 %v543, 0.2
    %v622 = vmul.f32 %v545, 0.2
    %v623 = vmul.f32 %v547, 0.2
    %v624 = vmul.f32 %v549, 0.2
    %v625 = vmul.f32 %v553, 0.2
    %v626 = vmul.f32 %v555, 0.2
    %v627 = vmul.f32 %v557, 0.2
    %v628 = vmul.f32 %v559, 0.2
    %v629 = vmul.f32 %v563, 0.2
    %v630 = vmul.f32 %v565, 0.2
    %v631 = vmul.f32 %v567, 0.2
    %v632 = vmul.f32 %v569, 0.2
    %v633 = vmul.f32 %v573, 0.2
    %v634 = vmul.f32 %v575, 0.2
    %v635 = vmul.f32 %v577, 0.2
    %v636 = vmul.f32 %v579, 0.2
    %v637 = vmul.f32 %v583, 0.2
    %v638 = vmul.f32 %v585, 0.2
    %v639 = vmul.f32 %v587, 0.2
    %v640 = vmul.f32 %v589, 0.2
    %v641 = vmul.f32 %v593, 0.2
    %v642 = vmul.f32 %v595, 0.2
    %v643 = vmul.f32 %v597, 0.2
    %v644 = vmul.f32 %v599, 0.2
    %v645 = vmul.f32 %v603, 0.2
    %v646 = vmul.f32 %v605, 0.2
    %v647 = vmul.f32 %v607, 0.2
    %v648 = vmul.f32 %v609, 0.2
    %v649 = vmul.f32 %v613, 0.2
    %v650 = vmul.f32 %v615, 0.2
    %v651 = vmul.f32 %v617, 0.2
    %v652 = vmul.f32 %v619, 0.2
    %v653 = vmax.f32 %v543, %v621
    %v654 = vmax.f32 %v545, %v622
    %v655 = vmax.f32 %v547, %v623
    %v656 = vmax.f32 %v549, %v624
    %v657 = vmax.f32 %v553, %v625
    %v658 = vmax.f32 %v555, %v626
    %v659 = vmax.f32 %v557, %v627
    %v660 = vmax.f32 %v559, %v628
    %v661 = vmax.f32 %v563, %v629
    %v662 = vmax.f32 %v565, %v630
    %v663 = vmax.f32 %v567, %v631
    %v664 = vmax.f32 %v569, %v632
    %v665 = vmax.f32 %v573, %v633
    %v666 = vmax.f32 %v575, %v634
    %v667 = vmax.f32 %v577, %v635
    %v668 = vmax.f32 %v579, %v636
    %v669 = vmax.f32 %v583, %v637
    %v670 = vmax.f32 %v585, %v638
    %v671 = vmax.f32 %v587, %v639
    %v672 = vmax.f32 %v589, %v640
    %v673 = vmax.f32 %v593, %v641
    %v674 = vmax.f32 %v595, %v642
    %v675 = vmax.f32 %v597, %v643
    %v676 = vmax.f32 %v599, %v644
    %v677 = vmax.f32 %v603, %v645
    %v678 = vmax.f32 %v605, %v646
    %v679 = vmax.f32 %v607, %v647
    %v680 = vmax.f32 %v609, %v648
    %v681 = vmax.f32 %v613, %v649
    %v682 = vmax.f32 %v615, %v650
    %v683 = vmax.f32 %v617, %v651
    %v684 = vmax.f32 %v619, %v652
    %v685 = vpack.c.bf16 %v655, %v653
    %v686 = vpack.c.bf16 %v656, %v654
    %v687 = vpack.c.bf16 %v659, %v657
    %v688 = vpack.c.bf16 %v660, %v658
    %v689 = vpack.c.bf16 %v663, %v661
    %v690 = vpack.c.bf16 %v664, %v662
    %v691 = vpack.c.bf16 %v667, %v665
    %v692 = vpack.c.bf16 %v668, %v666
    %v693 = vpack.c.bf16 %v671, %v669
    %v694 = vpack.c.bf16 %v672, %v670
    %v695 = vpack.c.bf16 %v675, %v673
    %v696 = vpack.c.bf16 %v676, %v674
    %v697 = vpack.c.bf16 %v679, %v677
    %v698 = vpack.c.bf16 %v680, %v678
    %v699 = vpack.c.bf16 %v683, %v681
    %v700 = vpack.c.bf16 %v684, %v682
    %v701 = vld [vmem:[#allocation4] sm:$0xff]
    %v702 = vld [vmem:[#allocation4 + $0x8] sm:$0xff]
    %v703 = vld [vmem:[#allocation4 + $0x10] sm:$0xff]
    %v704 = vld [vmem:[#allocation4 + $0x18] sm:$0xff]
    %v705 = vld [vmem:[#allocation4 + $0x20] sm:$0xff]
    %v706 = vld [vmem:[#allocation4 + $0x28] sm:$0xff]
    %v707 = vld [vmem:[#allocation4 + $0x30] sm:$0xff]
    %v708 = vld [vmem:[#allocation4 + $0x38] sm:$0xff]
    %v709 = vld [vmem:[#allocation4 + $0x40] sm:$0xff]
    %v710 = vld [vmem:[#allocation4 + $0x48] sm:$0xff]
    %v711 = vld [vmem:[#allocation4 + $0x50] sm:$0xff]
    %v712 = vld [vmem:[#allocation4 + $0x58] sm:$0xff]
    %v713 = vld [vmem:[#allocation4 + $0x60] sm:$0xff]
    %v714 = vld [vmem:[#allocation4 + $0x68] sm:$0xff]
    %v715 = vld [vmem:[#allocation4 + $0x70] sm:$0xff]
    %v716 = vld [vmem:[#allocation4 + $0x78] sm:$0xff]
    %v717 = vld [vmem:[#allocation4 + $0x80] sm:$0xff]
    %v718 = vld [vmem:[#allocation4 + $0x88] sm:$0xff]
    %v719 = vld [vmem:[#allocation4 + $0x90] sm:$0xff]
    %v720 = vld [vmem:[#allocation4 + $0x98] sm:$0xff]
    %v721 = vld [vmem:[#allocation4 + $0xa0] sm:$0xff]
    %v722 = vld [vmem:[#allocation4 + $0xa8] sm:$0xff]
    %v723 = vld [vmem:[#allocation4 + $0xb0] sm:$0xff]
    %v724 = vld [vmem:[#allocation4 + $0xb8] sm:$0xff]
    %v725 = vld [vmem:[#allocation4 + $0xc0] sm:$0xff]
    %v726 = vld [vmem:[#allocation4 + $0xc8] sm:$0xff]
    %v727 = vld [vmem:[#allocation4 + $0xd0] sm:$0xff]
    %v728 = vld [vmem:[#allocation4 + $0xd8] sm:$0xff]
    %v729 = vld [vmem:[#allocation4 + $0xe0] sm:$0xff]
    %v730 = vld [vmem:[#allocation4 + $0xe8] sm:$0xff]
    %v731 = vld [vmem:[#allocation4 + $0xf0] sm:$0xff]
    %v732 = vld [vmem:[#allocation4 + $0xf8] sm:$0xff]
    %s733 = scalar_lea.vmem [#allocation15], 2
    %v734 = vld [vmem:[%s733] ss:$8 sm:$0x3]
    %v736 = vlaneseq
    %v737 = vshrl.u32 %v736, 7
    %v738 = vsub.s32 0, %v737
    %v739 = vrot.slane %v734, %v738
    %v740 = vlaneseq
    %v741 = vshrl.u32 %v740, 7
    %v742 = vsub.s32 1, %v741
    %v743 = vrot.slane %v734, %v742
    %v778 = vunpack.c.l.b16 %v701
    %v779 = vunpack.c.h.b16 %v701
    %v780 = vunpack.c.l.b16 %v702
    %v781 = vunpack.c.h.b16 %v702
    %v782 = vunpack.c.l.b16 %v703
    %v783 = vunpack.c.h.b16 %v703
    %v784 = vunpack.c.l.b16 %v704
    %v785 = vunpack.c.h.b16 %v704
    %v786 = vunpack.c.l.b16 %v705
    %v787 = vunpack.c.h.b16 %v705
    %v788 = vunpack.c.l.b16 %v706
    %v789 = vunpack.c.h.b16 %v706
    %v790 = vunpack.c.l.b16 %v707
    %v791 = vunpack.c.h.b16 %v707
    %v792 = vunpack.c.l.b16 %v708
    %v793 = vunpack.c.h.b16 %v708
    %v794 = vunpack.c.l.b16 %v709
    %v795 = vunpack.c.h.b16 %v709
    %v796 = vunpack.c.l.b16 %v710
    %v797 = vunpack.c.h.b16 %v710
    %v798 = vunpack.c.l.b16 %v711
    %v799 = vunpack.c.h.b16 %v711
    %v800 = vunpack.c.l.b16 %v712
    %v801 = vunpack.c.h.b16 %v712
    %v802 = vunpack.c.l.b16 %v713
    %v803 = vunpack.c.h.b16 %v713
    %v804 = vunpack.c.l.b16 %v714
    %v805 = vunpack.c.h.b16 %v714
    %v806 = vunpack.c.l.b16 %v715
    %v807 = vunpack.c.h.b16 %v715
    %v808 = vunpack.c.l.b16 %v716
    %v809 = vunpack.c.h.b16 %v716
    %v810 = vunpack.c.l.b16 %v717
    %v811 = vunpack.c.h.b16 %v717
    %v812 = vunpack.c.l.b16 %v718
    %v813 = vunpack.c.h.b16 %v718
    %v814 = vunpack.c.l.b16 %v719
    %v815 = vunpack.c.h.b16 %v719
    %v816 = vunpack.c.l.b16 %v720
    %v817 = vunpack.c.h.b16 %v720
    %v818 = vunpack.c.l.b16 %v721
    %v819 = vunpack.c.h.b16 %v721
    %v820 = vunpack.c.l.b16 %v722
    %v821 = vunpack.c.h.b16 %v722
    %v822 = vunpack.c.l.b16 %v723
    %v823 = vunpack.c.h.b16 %v723
    %v824 = vunpack.c.l.b16 %v724
    %v825 = vunpack.c.h.b16 %v724
    %v826 = vunpack.c.l.b16 %v725
    %v827 = vunpack.c.h.b16 %v725
    %v828 = vunpack.c.l.b16 %v726
    %v829 = vunpack.c.h.b16 %v726
    %v830 = vunpack.c.l.b16 %v727
    %v831 = vunpack.c.h.b16 %v727
    %v832 = vunpack.c.l.b16 %v728
    %v833 = vunpack.c.h.b16 %v728
    %v834 = vunpack.c.l.b16 %v729
    %v835 = vunpack.c.h.b16 %v729
    %v836 = vunpack.c.l.b16 %v730
    %v837 = vunpack.c.h.b16 %v730
    %v838 = vunpack.c.l.b16 %v731
    %v839 = vunpack.c.h.b16 %v731
    %v840 = vunpack.c.l.b16 %v732
    %v841 = vunpack.c.h.b16 %v732
    %v842 = vpack.c.b16 %v780, %v778
    %v843 = vpack.c.b16 %v781, %v779
    %v844 = vpack.c.b16 %v784, %v782
    %v845 = vpack.c.b16 %v785, %v783
    %v846 = vpack.c.b16 %v788, %v786
    %v847 = vpack.c.b16 %v789, %v787
    %v848 = vpack.c.b16 %v792, %v790
    %v849 = vpack.c.b16 %v793, %v791
    %v850 = vpack.c.b16 %v796, %v794
    %v851 = vpack.c.b16 %v797, %v795
    %v852 = vpack.c.b16 %v800, %v798
    %v853 = vpack.c.b16 %v801, %v799
    %v854 = vpack.c.b16 %v804, %v802
    %v855 = vpack.c.b16 %v805, %v803
    %v856 = vpack.c.b16 %v808, %v806
    %v857 = vpack.c.b16 %v809, %v807
    %v858 = vpack.c.b16 %v812, %v810
    %v859 = vpack.c.b16 %v813, %v811
    %v860 = vpack.c.b16 %v816, %v814
    %v861 = vpack.c.b16 %v817, %v815
    %v862 = vpack.c.b16 %v820, %v818
    %v863 = vpack.c.b16 %v821, %v819
    %v864 = vpack.c.b16 %v824, %v822
    %v865 = vpack.c.b16 %v825, %v823
    %v866 = vpack.c.b16 %v828, %v826
    %v867 = vpack.c.b16 %v829, %v827
    %v868 = vpack.c.b16 %v832, %v830
    %v869 = vpack.c.b16 %v833, %v831
    %v870 = vpack.c.b16 %v836, %v834
    %v871 = vpack.c.b16 %v837, %v835
    %v872 = vpack.c.b16 %v840, %v838
    %v873 = vpack.c.b16 %v841, %v839
    %906 = vmatprep.subr.bf16.mxu0 %v843
    %907 = vmatpush1.bf16.msra.mxu0 %v842
    %908 = vmatprep.subr.bf16.mxu0 %v845
    %909 = vmatpush1.bf16.msra.mxu0 %v844
    %910 = vmatprep.subr.bf16.mxu0 %v847
    %911 = vmatpush1.bf16.msra.mxu0 %v846
    %912 = vmatprep.subr.bf16.mxu0 %v849
    %913 = vmatpush1.bf16.msra.mxu0 %v848
    %914 = vmatprep.subr.bf16.mxu0 %v851
    %915 = vmatpush1.bf16.msra.mxu0 %v850
    %916 = vmatprep.subr.bf16.mxu0 %v853
    %917 = vmatpush1.bf16.msra.mxu0 %v852
    %918 = vmatprep.subr.bf16.mxu0 %v855
    %919 = vmatpush1.bf16.msra.mxu0 %v854
    %920 = vmatprep.subr.bf16.mxu0 %v857
    %921 = vmatpush1.bf16.msra.mxu0 %v856
    %922 = vmatprep.subr.bf16.mxu0 %v859
    %923 = vmatpush1.bf16.msra.mxu0 %v858
    %924 = vmatprep.subr.bf16.mxu0 %v861
    %925 = vmatpush1.bf16.msra.mxu0 %v860
    %926 = vmatprep.subr.bf16.mxu0 %v863
    %927 = vmatpush1.bf16.msra.mxu0 %v862
    %928 = vmatprep.subr.bf16.mxu0 %v865
    %929 = vmatpush1.bf16.msra.mxu0 %v864
    %930 = vmatprep.subr.bf16.mxu0 %v867
    %931 = vmatpush1.bf16.msra.mxu0 %v866
    %932 = vmatprep.subr.bf16.mxu0 %v869
    %933 = vmatpush1.bf16.msra.mxu0 %v868
    %934 = vmatprep.subr.bf16.mxu0 %v871
    %935 = vmatpush1.bf16.msra.mxu0 %v870
    %936 = vmatprep.subr.bf16.mxu0 %v873
    %937 = vmatpush1.bf16.msra.mxu0 %v872
    %938 = vmatprep.mubr.bf16.mxu0 %v686
    %939 = vmatmul.mubr.bf16.gmra.mrb[0].mxu0 %v685
    %v940 = vpop.f32.mrb[0].mxu0
    %v941 = vadd.f32 %v739, %v940
    %v942 = vpop.f32.mrb[0].mxu0
    %v943 = vadd.f32 %v743, %v942
    %v944 = vpop.f32.mrb[0].mxu0
    %v945 = vadd.f32 %v739, %v944
    %v946 = vpop.f32.mrb[0].mxu0
    %v947 = vadd.f32 %v743, %v946
    %948 = vmatprep.mubr.bf16.mxu0 %v688
    %949 = vmatmul.mubr.bf16.gmra.mrb[0].mxu0 %v687
    %v950 = vpop.f32.mrb[0].mxu0
    %v951 = vadd.f32 %v739, %v950
    %v952 = vpop.f32.mrb[0].mxu0
    %v953 = vadd.f32 %v743, %v952
    %v954 = vpop.f32.mrb[0].mxu0
    %v955 = vadd.f32 %v739, %v954
    %v956 = vpop.f32.mrb[0].mxu0
    %v957 = vadd.f32 %v743, %v956
    %958 = vmatprep.mubr.bf16.mxu0 %v690
    %959 = vmatmul.mubr.bf16.gmra.mrb[0].mxu0 %v689
    %v960 = vpop.f32.mrb[0].mxu0
    %v961 = vadd.f32 %v739, %v960
    %v962 = vpop.f32.mrb[0].mxu0
    %v963 = vadd.f32 %v743, %v962
    %v964 = vpop.f32.mrb[0].mxu0
    %v965 = vadd.f32 %v739, %v964
    %v966 = vpop.f32.mrb[0].mxu0
    %v967 = vadd.f32 %v743, %v966
    %968 = vmatprep.mubr.bf16.mxu0 %v692
    %969 = vmatmul.mubr.bf16.gmra.mrb[0].mxu0 %v691
    %v970 = vpop.f32.mrb[0].mxu0
    %v971 = vadd.f32 %v739, %v970
    %v972 = vpop.f32.mrb[0].mxu0
    %v973 = vadd.f32 %v743, %v972
    %v974 = vpop.f32.mrb[0].mxu0
    %v975 = vadd.f32 %v739, %v974
    %v976 = vpop.f32.mrb[0].mxu0
    %v977 = vadd.f32 %v743, %v976
    %978 = vmatprep.mubr.bf16.mxu0 %v694
    %979 = vmatmul.mubr.bf16.gmra.mrb[0].mxu0 %v693
    %v980 = vpop.f32.mrb[0].mxu0
    %v981 = vadd.f32 %v739, %v980
    %v982 = vpop.f32.mrb[0].mxu0
    %v983 = vadd.f32 %v743, %v982
    %v984 = vpop.f32.mrb[0].mxu0
    %v985 = vadd.f32 %v739, %v984
    %v986 = vpop.f32.mrb[0].mxu0
    %v987 = vadd.f32 %v743, %v986
    %988 = vmatprep.mubr.bf16.mxu0 %v696
    %989 = vmatmul.mubr.bf16.gmra.mrb[0].mxu0 %v695
    %v990 = vpop.f32.mrb[0].mxu0
    %v991 = vadd.f32 %v739, %v990
    %v992 = vpop.f32.mrb[0].mxu0
    %v993 = vadd.f32 %v743, %v992
    %v994 = vpop.f32.mrb[0].mxu0
    %v995 = vadd.f32 %v739, %v994
    %v996 = vpop.f32.mrb[0].mxu0
    %v997 = vadd.f32 %v743, %v996
    %998 = vmatprep.mubr.bf16.mxu0 %v698
    %999 = vmatmul.mubr.bf16.gmra.mrb[0].mxu0 %v697
    %v1000 = vpop.f32.mrb[0].mxu0
    %v1001 = vadd.f32 %v739, %v1000
    %v1002 = vpop.f32.mrb[0].mxu0
    %v1003 = vadd.f32 %v743, %v1002
    %v1004 = vpop.f32.mrb[0].mxu0
    %v1005 = vadd.f32 %v739, %v1004
    %v1006 = vpop.f32.mrb[0].mxu0
    %v1007 = vadd.f32 %v743, %v1006
    %1008 = vmatprep.mubr.bf16.mxu0 %v700
    %1009 = vmatmul.mubr.bf16.gmra.mrb[0].mxu0 %v699
    %v1010 = vpop.f32.mrb[0].mxu0
    %v1011 = vadd.f32 %v739, %v1010
    %v1012 = vpop.f32.mrb[0].mxu0
    %v1013 = vadd.f32 %v743, %v1012
    %v1014 = vpop.f32.mrb[0].mxu0
    %v1015 = vadd.f32 %v739, %v1014
    %v1016 = vpop.f32.mrb[0].mxu0
    %v1017 = vadd.f32 %v743, %v1016
    %1018 = vdwg.mxu0
    %v1019 = vmul.f32 %v941, 0.2
    %v1020 = vmul.f32 %v943, 0.2
    %v1021 = vmul.f32 %v945, 0.2
    %v1022 = vmul.f32 %v947, 0.2
    %v1023 = vmul.f32 %v951, 0.2
    %v1024 = vmul.f32 %v953, 0.2
    %v1025 = vmul.f32 %v955, 0.2
    %v1026 = vmul.f32 %v957, 0.2
    %v1027 = vmul.f32 %v961, 0.2
    %v1028 = vmul.f32 %v963, 0.2
    %v1029 = vmul.f32 %v965, 0.2
    %v1030 = vmul.f32 %v967, 0.2
    %v1031 = vmul.f32 %v971, 0.2
    %v1032 = vmul.f32 %v973, 0.2
    %v1033 = vmul.f32 %v975, 0.2
    %v1034 = vmul.f32 %v977, 0.2
    %v1035 = vmul.f32 %v981, 0.2
    %v1036 = vmul.f32 %v983, 0.2
    %v1037 = vmul.f32 %v985, 0.2
    %v1038 = vmul.f32 %v987, 0.2
    %v1039 = vmul.f32 %v991, 0.2
    %v1040 = vmul.f32 %v993, 0.2
    %v1041 = vmul.f32 %v995, 0.2
    %v1042 = vmul.f32 %v997, 0.2
    %v1043 = vmul.f32 %v1001, 0.2
    %v1044 = vmul.f32 %v1003, 0.2
    %v1045 = vmul.f32 %v1005, 0.2
    %v1046 = vmul.f32 %v1007, 0.2
    %v1047 = vmul.f32 %v1011, 0.2
    %v1048 = vmul.f32 %v1013, 0.2
    %v1049 = vmul.f32 %v1015, 0.2
    %v1050 = vmul.f32 %v1017, 0.2
    %v1051 = vmax.f32 %v941, %v1019
    %v1052 = vmax.f32 %v943, %v1020
    %v1053 = vmax.f32 %v945, %v1021
    %v1054 = vmax.f32 %v947, %v1022
    %v1055 = vmax.f32 %v951, %v1023
    %v1056 = vmax.f32 %v953, %v1024
    %v1057 = vmax.f32 %v955, %v1025
    %v1058 = vmax.f32 %v957, %v1026
    %v1059 = vmax.f32 %v961, %v1027
    %v1060 = vmax.f32 %v963, %v1028
    %v1061 = vmax.f32 %v965, %v1029
    %v1062 = vmax.f32 %v967, %v1030
    %v1063 = vmax.f32 %v971, %v1031
    %v1064 = vmax.f32 %v973, %v1032
    %v1065 = vmax.f32 %v975, %v1033
    %v1066 = vmax.f32 %v977, %v1034
    %v1067 = vmax.f32 %v981, %v1035
    %v1068 = vmax.f32 %v983, %v1036
    %v1069 = vmax.f32 %v985, %v1037
    %v1070 = vmax.f32 %v987, %v1038
    %v1071 = vmax.f32 %v991, %v1039
    %v1072 = vmax.f32 %v993, %v1040
    %v1073 = vmax.f32 %v995, %v1041
    %v1074 = vmax.f32 %v997, %v1042
    %v1075 = vmax.f32 %v1001, %v1043
    %v1076 = vmax.f32 %v1003, %v1044
    %v1077 = vmax.f32 %v1005, %v1045
    %v1078 = vmax.f32 %v1007, %v1046
    %v1079 = vmax.f32 %v1011, %v1047
    %v1080 = vmax.f32 %v1013, %v1048
    %v1081 = vmax.f32 %v1015, %v1049
    %v1082 = vmax.f32 %v1017, %v1050
    %v1083 = vpack.c.bf16 %v1053, %v1051
    %v1084 = vpack.c.bf16 %v1054, %v1052
    %v1085 = vpack.c.bf16 %v1057, %v1055
    %v1086 = vpack.c.bf16 %v1058, %v1056
    %v1087 = vpack.c.bf16 %v1061, %v1059
    %v1088 = vpack.c.bf16 %v1062, %v1060
    %v1089 = vpack.c.bf16 %v1065, %v1063
    %v1090 = vpack.c.bf16 %v1066, %v1064
    %v1091 = vpack.c.bf16 %v1069, %v1067
    %v1092 = vpack.c.bf16 %v1070, %v1068
    %v1093 = vpack.c.bf16 %v1073, %v1071
    %v1094 = vpack.c.bf16 %v1074, %v1072
    %v1095 = vpack.c.bf16 %v1077, %v1075
    %v1096 = vpack.c.bf16 %v1078, %v1076
    %v1097 = vpack.c.bf16 %v1081, %v1079
    %v1098 = vpack.c.bf16 %v1082, %v1080
    %v1099 = vld [vmem:[#allocation6] sm:$0xff]
    %v1100 = vld [vmem:[#allocation6 + $0x8] sm:$0xff]
    %v1101 = vld [vmem:[#allocation6 + $0x10] sm:$0xff]
    %v1102 = vld [vmem:[#allocation6 + $0x18] sm:$0xff]
    %v1103 = vld [vmem:[#allocation6 + $0x20] sm:$0xff]
    %v1104 = vld [vmem:[#allocation6 + $0x28] sm:$0xff]
    %v1105 = vld [vmem:[#allocation6 + $0x30] sm:$0xff]
    %v1106 = vld [vmem:[#allocation6 + $0x38] sm:$0xff]
    %v1107 = vld [vmem:[#allocation6 + $0x40] sm:$0xff]
    %v1108 = vld [vmem:[#allocation6 + $0x48] sm:$0xff]
    %v1109 = vld [vmem:[#allocation6 + $0x50] sm:$0xff]
    %v1110 = vld [vmem:[#allocation6 + $0x58] sm:$0xff]
    %v1111 = vld [vmem:[#allocation6 + $0x60] sm:$0xff]
    %v1112 = vld [vmem:[#allocation6 + $0x68] sm:$0xff]
    %v1113 = vld [vmem:[#allocation6 + $0x70] sm:$0xff]
    %v1114 = vld [vmem:[#allocation6 + $0x78] sm:$0xff]
    %v1115 = vld [vmem:[#allocation6 + $0x80] sm:$0xff]
    %v1116 = vld [vmem:[#allocation6 + $0x88] sm:$0xff]
    %v1117 = vld [vmem:[#allocation6 + $0x90] sm:$0xff]
    %v1118 = vld [vmem:[#allocation6 + $0x98] sm:$0xff]
    %v1119 = vld [vmem:[#allocation6 + $0xa0] sm:$0xff]
    %v1120 = vld [vmem:[#allocation6 + $0xa8] sm:$0xff]
    %v1121 = vld [vmem:[#allocation6 + $0xb0] sm:$0xff]
    %v1122 = vld [vmem:[#allocation6 + $0xb8] sm:$0xff]
    %v1123 = vld [vmem:[#allocation6 + $0xc0] sm:$0xff]
    %v1124 = vld [vmem:[#allocation6 + $0xc8] sm:$0xff]
    %v1125 = vld [vmem:[#allocation6 + $0xd0] sm:$0xff]
    %v1126 = vld [vmem:[#allocation6 + $0xd8] sm:$0xff]
    %v1127 = vld [vmem:[#allocation6 + $0xe0] sm:$0xff]
    %v1128 = vld [vmem:[#allocation6 + $0xe8] sm:$0xff]
    %v1129 = vld [vmem:[#allocation6 + $0xf0] sm:$0xff]
    %v1130 = vld [vmem:[#allocation6 + $0xf8] sm:$0xff]
    %s1131 = scalar_lea.vmem [#allocation15], 3
    %v1132 = vld [vmem:[%s1131] ss:$8 sm:$0x3]
    %v1134 = vlaneseq
    %v1135 = vshrl.u32 %v1134, 7
    %v1136 = vsub.s32 0, %v1135
    %v1137 = vrot.slane %v1132, %v1136
    %v1138 = vlaneseq
    %v1139 = vshrl.u32 %v1138, 7
    %v1140 = vsub.s32 1, %v1139
    %v1141 = vrot.slane %v1132, %v1140
    %v1176 = vunpack.c.l.b16 %v1099
    %v1177 = vunpack.c.h.b16 %v1099
    %v1178 = vunpack.c.l.b16 %v1100
    %v1179 = vunpack.c.h.b16 %v1100
    %v1180 = vunpack.c.l.b16 %v1101
    %v1181 = vunpack.c.h.b16 %v1101
    %v1182 = vunpack.c.l.b16 %v1102
    %v1183 = vunpack.c.h.b16 %v1102
    %v1184 = vunpack.c.l.b16 %v1103
    %v1185 = vunpack.c.h.b16 %v1103
    %v1186 = vunpack.c.l.b16 %v1104
    %v1187 = vunpack.c.h.b16 %v1104
    %v1188 = vunpack.c.l.b16 %v1105
    %v1189 = vunpack.c.h.b16 %v1105
    %v1190 = vunpack.c.l.b16 %v1106
    %v1191 = vunpack.c.h.b16 %v1106
    %v1192 = vunpack.c.l.b16 %v1107
    %v1193 = vunpack.c.h.b16 %v1107
    %v1194 = vunpack.c.l.b16 %v1108
    %v1195 = vunpack.c.h.b16 %v1108
    %v1196 = vunpack.c.l.b16 %v1109
    %v1197 = vunpack.c.h.b16 %v1109
    %v1198 = vunpack.c.l.b16 %v1110
    %v1199 = vunpack.c.h.b16 %v1110
    %v1200 = vunpack.c.l.b16 %v1111
    %v1201 = vunpack.c.h.b16 %v1111
    %v1202 = vunpack.c.l.b16 %v1112
    %v1203 = vunpack.c.h.b16 %v1112
    %v1204 = vunpack.c.l.b16 %v1113
    %v1205 = vunpack.c.h.b16 %v1113
    %v1206 = vunpack.c.l.b16 %v1114
    %v1207 = vunpack.c.h.b16 %v1114
    %v1208 = vunpack.c.l.b16 %v1115
    %v1209 = vunpack.c.h.b16 %v1115
    %v1210 = vunpack.c.l.b16 %v1116
    %v1211 = vunpack.c.h.b16 %v1116
    %v1212 = vunpack.c.l.b16 %v1117
    %v1213 = vunpack.c.h.b16 %v1117
    %v1214 = vunpack.c.l.b16 %v1118
    %v1215 = vunpack.c.h.b16 %v1118
    %v1216 = vunpack.c.l.b16 %v1119
    %v1217 = vunpack.c.h.b16 %v1119
    %v1218 = vunpack.c.l.b16 %v1120
    %v1219 = vunpack.c.h.b16 %v1120
    %v1220 = vunpack.c.l.b16 %v1121
    %v1221 = vunpack.c.h.b16 %v1121
    %v1222 = vunpack.c.l.b16 %v1122
    %v1223 = vunpack.c.h.b16 %v1122
    %v1224 = vunpack.c.l.b16 %v1123
    %v1225 = vunpack.c.h.b16 %v1123
    %v1226 = vunpack.c.l.b16 %v1124
    %v1227 = vunpack.c.h.b16 %v1124
    %v1228 = vunpack.c.l.b16 %v1125
    %v1229 = vunpack.c.h.b16 %v1125
    %v1230 = vunpack.c.l.b16 %v1126
    %v1231 = vunpack.c.h.b16 %v1126
    %v1232 = vunpack.c.l.b16 %v1127
    %v1233 = vunpack.c.h.b16 %v1127
    %v1234 = vunpack.c.l.b16 %v1128
    %v1235 = vunpack.c.h.b16 %v1128
    %v1236 = vunpack.c.l.b16 %v1129
    %v1237 = vunpack.c.h.b16 %v1129
    %v1238 = vunpack.c.l.b16 %v1130
    %v1239 = vunpack.c.h.b16 %v1130
    %v1240 = vpack.c.b16 %v1178, %v1176
    %v1241 = vpack.c.b16 %v1179, %v1177
    %v1242 = vpack.c.b16 %v1182, %v1180
    %v1243 = vpack.c.b16 %v1183, %v1181
    %v1244 = vpack.c.b16 %v1186, %v1184
    %v1245 = vpack.c.b16 %v1187, %v1185
    %v1246 = vpack.c.b16 %v1190, %v1188
    %v1247 = vpack.c.b16 %v1191, %v1189
    %v1248 = vpack.c.b16 %v1194, %v1192
    %v1249 = vpack.c.b16 %v1195, %v1193
    %v1250 = vpack.c.b16 %v1198, %v1196
    %v1251 = vpack.c.b16 %v1199, %v1197
    %v1252 = vpack.c.b16 %v1202, %v1200
    %v1253 = vpack.c.b16 %v1203, %v1201
    %v1254 = vpack.c.b16 %v1206, %v1204
    %v1255 = vpack.c.b16 %v1207, %v1205
    %v1256 = vpack.c.b16 %v1210, %v1208
    %v1257 = vpack.c.b16 %v1211, %v1209
    %v1258 = vpack.c.b16 %v1214, %v1212
    %v1259 = vpack.c.b16 %v1215, %v1213
    %v1260 = vpack.c.b16 %v1218, %v1216
    %v1261 = vpack.c.b16 %v1219, %v1217
    %v1262 = vpack.c.b16 %v1222, %v1220
    %v1263 = vpack.c.b16 %v1223, %v1221
    %v1264 = vpack.c.b16 %v1226, %v1224
    %v1265 = vpack.c.b16 %v1227, %v1225
    %v1266 = vpack.c.b16 %v1230, %v1228
    %v1267 = vpack.c.b16 %v1231, %v1229
    %v1268 = vpack.c.b16 %v1234, %v1232
    %v1269 = vpack.c.b16 %v1235, %v1233
    %v1270 = vpack.c.b16 %v1238, %v1236
    %v1271 = vpack.c.b16 %v1239, %v1237
    %1304 = vmatprep.subr.bf16.mxu0 %v1241
    %1305 = vmatpush1.bf16.msra.mxu0 %v1240
    %1306 = vmatprep.subr.bf16.mxu0 %v1243
    %1307 = vmatpush1.bf16.msra.mxu0 %v1242
    %1308 = vmatprep.subr.bf16.mxu0 %v1245
    %1309 = vmatpush1.bf16.msra.mxu0 %v1244
    %1310 = vmatprep.subr.bf16.mxu0 %v1247
    %1311 = vmatpush1.bf16.msra.mxu0 %v1246
    %1312 = vmatprep.subr.bf16.mxu0 %v1249
    %1313 = vmatpush1.bf16.msra.mxu0 %v1248
    %1314 = vmatprep.subr.bf16.mxu0 %v1251
    %1315 = vmatpush1.bf16.msra.mxu0 %v1250
    %1316 = vmatprep.subr.bf16.mxu0 %v1253
    %1317 = vmatpush1.bf16.msra.mxu0 %v1252
    %1318 = vmatprep.subr.bf16.mxu0 %v1255
    %1319 = vmatpush1.bf16.msra.mxu0 %v1254
    %1320 = vmatprep.subr.bf16.mxu0 %v1257
    %1321 = vmatpush1.bf16.msra.mxu0 %v1256
    %1322 = vmatprep.subr.bf16.mxu0 %v1259
    %1323 = vmatpush1.bf16.msra.mxu0 %v1258
    %1324 = vmatprep.subr.bf16.mxu0 %v1261
    %1325 = vmatpush1.bf16.msra.mxu0 %v1260
    %1326 = vmatprep.subr.bf16.mxu0 %v1263
    %1327 = vmatpush1.bf16.msra.mxu0 %v1262
    %1328 = vmatprep.subr.bf16.mxu0 %v1265
    %1329 = vmatpush1.bf16.msra.mxu0 %v1264
    %1330 = vmatprep.subr.bf16.mxu0 %v1267
    %1331 = vmatpush1.bf16.msra.mxu0 %v1266
    %1332 = vmatprep.subr.bf16.mxu0 %v1269
    %1333 = vmatpush1.bf16.msra.mxu0 %v1268
    %1334 = vmatprep.subr.bf16.mxu0 %v1271
    %1335 = vmatpush1.bf16.msra.mxu0 %v1270
    %1336 = vmatprep.mubr.bf16.mxu0 %v1084
    %1337 = vmatmul.mubr.bf16.gmra.mrb[0].mxu0 %v1083
    %v1338 = vpop.f32.mrb[0].mxu0
    %v1339 = vadd.f32 %v1137, %v1338
    %v1340 = vpop.f32.mrb[0].mxu0
    %v1341 = vadd.f32 %v1141, %v1340
    %v1342 = vpop.f32.mrb[0].mxu0
    %v1343 = vadd.f32 %v1137, %v1342
    %v1344 = vpop.f32.mrb[0].mxu0
    %v1345 = vadd.f32 %v1141, %v1344
    %1346 = vmatprep.mubr.bf16.mxu0 %v1086
    %1347 = vmatmul.mubr.bf16.gmra.mrb[0].mxu0 %v1085
    %v1348 = vpop.f32.mrb[0].mxu0
    %v1349 = vadd.f32 %v1137, %v1348
    %v1350 = vpop.f32.mrb[0].mxu0
    %v1351 = vadd.f32 %v1141, %v1350
    %v1352 = vpop.f32.mrb[0].mxu0
    %v1353 = vadd.f32 %v1137, %v1352
    %v1354 = vpop.f32.mrb[0].mxu0
    %v1355 = vadd.f32 %v1141, %v1354
    %1356 = vmatprep.mubr.bf16.mxu0 %v1088
    %1357 = vmatmul.mubr.bf16.gmra.mrb[0].mxu0 %v1087
    %v1358 = vpop.f32.mrb[0].mxu0
    %v1359 = vadd.f32 %v1137, %v1358
    %v1360 = vpop.f32.mrb[0].mxu0
    %v1361 = vadd.f32 %v1141, %v1360
    %v1362 = vpop.f32.mrb[0].mxu0
    %v1363 = vadd.f32 %v1137, %v1362
    %v1364 = vpop.f32.mrb[0].mxu0
    %v1365 = vadd.f32 %v1141, %v1364
    %1366 = vmatprep.mubr.bf16.mxu0 %v1090
    %1367 = vmatmul.mubr.bf16.gmra.mrb[0].mxu0 %v1089
    %v1368 = vpop.f32.mrb[0].mxu0
    %v1369 = vadd.f32 %v1137, %v1368
    %v1370 = vpop.f32.mrb[0].mxu0
    %v1371 = vadd.f32 %v1141, %v1370
    %v1372 = vpop.f32.mrb[0].mxu0
    %v1373 = vadd.f32 %v1137, %v1372
    %v1374 = vpop.f32.mrb[0].mxu0
    %v1375 = vadd.f32 %v1141, %v1374
    %1376 = vmatprep.mubr.bf16.mxu0 %v1092
    %1377 = vmatmul.mubr.bf16.gmra.mrb[0].mxu0 %v1091
    %v1378 = vpop.f32.mrb[0].mxu0
    %v1379 = vadd.f32 %v1137, %v1378
    %v1380 = vpop.f32.mrb[0].mxu0
    %v1381 = vadd.f32 %v1141, %v1380
    %v1382 = vpop.f32.mrb[0].mxu0
    %v1383 = vadd.f32 %v1137, %v1382
    %v1384 = vpop.f32.mrb[0].mxu0
    %v1385 = vadd.f32 %v1141, %v1384
    %1386 = vmatprep.mubr.bf16.mxu0 %v1094
    %1387 = vmatmul.mubr.bf16.gmra.mrb[0].mxu0 %v1093
    %v1388 = vpop.f32.mrb[0].mxu0
    %v1389 = vadd.f32 %v1137, %v1388
    %v1390 = vpop.f32.mrb[0].mxu0
    %v1391 = vadd.f32 %v1141, %v1390
    %v1392 = vpop.f32.mrb[0].mxu0
    %v1393 = vadd.f32 %v1137, %v1392
    %v1394 = vpop.f32.mrb[0].mxu0
    %v1395 = vadd.f32 %v1141, %v1394
    %1396 = vmatprep.mubr.bf16.mxu0 %v1096
    %1397 = vmatmul.mubr.bf16.gmra.mrb[0].mxu0 %v1095
    %v1398 = vpop.f32.mrb[0].mxu0
    %v1399 = vadd.f32 %v1137, %v1398
    %v1400 = vpop.f32.mrb[0].mxu0
    %v1401 = vadd.f32 %v1141, %v1400
    %v1402 = vpop.f32.mrb[0].mxu0
    %v1403 = vadd.f32 %v1137, %v1402
    %v1404 = vpop.f32.mrb[0].mxu0
    %v1405 = vadd.f32 %v1141, %v1404
    %1406 = vmatprep.mubr.bf16.mxu0 %v1098
    %1407 = vmatmul.mubr.bf16.gmra.mrb[0].mxu0 %v1097
    %v1408 = vpop.f32.mrb[0].mxu0
    %v1409 = vadd.f32 %v1137, %v1408
    %v1410 = vpop.f32.mrb[0].mxu0
    %v1411 = vadd.f32 %v1141, %v1410
    %v1412 = vpop.f32.mrb[0].mxu0
    %v1413 = vadd.f32 %v1137, %v1412
    %v1414 = vpop.f32.mrb[0].mxu0
    %v1415 = vadd.f32 %v1141, %v1414
    %1416 = vdwg.mxu0
    %v1417 = vmul.f32 %v1339, 0.2
    %v1418 = vmul.f32 %v1341, 0.2
    %v1419 = vmul.f32 %v1343, 0.2
    %v1420 = vmul.f32 %v1345, 0.2
    %v1421 = vmul.f32 %v1349, 0.2
    %v1422 = vmul.f32 %v1351, 0.2
    %v1423 = vmul.f32 %v1353, 0.2
    %v1424 = vmul.f32 %v1355, 0.2
    %v1425 = vmul.f32 %v1359, 0.2
    %v1426 = vmul.f32 %v1361, 0.2
    %v1427 = vmul.f32 %v1363, 0.2
    %v1428 = vmul.f32 %v1365, 0.2
    %v1429 = vmul.f32 %v1369, 0.2
    %v1430 = vmul.f32 %v1371, 0.2
    %v1431 = vmul.f32 %v1373, 0.2
    %v1432 = vmul.f32 %v1375, 0.2
    %v1433 = vmul.f32 %v1379, 0.2
    %v1434 = vmul.f32 %v1381, 0.2
    %v1435 = vmul.f32 %v1383, 0.2
    %v1436 = vmul.f32 %v1385, 0.2
    %v1437 = vmul.f32 %v1389, 0.2
    %v1438 = vmul.f32 %v1391, 0.2
    %v1439 = vmul.f32 %v1393, 0.2
    %v1440 = vmul.f32 %v1395, 0.2
    %v1441 = vmul.f32 %v1399, 0.2
    %v1442 = vmul.f32 %v1401, 0.2
    %v1443 = vmul.f32 %v1403, 0.2
    %v1444 = vmul.f32 %v1405, 0.2
    %v1445 = vmul.f32 %v1409, 0.2
    %v1446 = vmul.f32 %v1411, 0.2
    %v1447 = vmul.f32 %v1413, 0.2
    %v1448 = vmul.f32 %v1415, 0.2
    %v1449 = vmax.f32 %v1339, %v1417
    %v1450 = vmax.f32 %v1341, %v1418
    %v1451 = vmax.f32 %v1343, %v1419
    %v1452 = vmax.f32 %v1345, %v1420
    %v1453 = vmax.f32 %v1349, %v1421
    %v1454 = vmax.f32 %v1351, %v1422
    %v1455 = vmax.f32 %v1353, %v1423
    %v1456 = vmax.f32 %v1355, %v1424
    %v1457 = vmax.f32 %v1359, %v1425
    %v1458 = vmax.f32 %v1361, %v1426
    %v1459 = vmax.f32 %v1363, %v1427
    %v1460 = vmax.f32 %v1365, %v1428
    %v1461 = vmax.f32 %v1369, %v1429
    %v1462 = vmax.f32 %v1371, %v1430
    %v1463 = vmax.f32 %v1373, %v1431
    %v1464 = vmax.f32 %v1375, %v1432
    %v1465 = vmax.f32 %v1379, %v1433
    %v1466 = vmax.f32 %v1381, %v1434
    %v1467 = vmax.f32 %v1383, %v1435
    %v1468 = vmax.f32 %v1385, %v1436
    %v1469 = vmax.f32 %v1389, %v1437
    %v1470 = vmax.f32 %v1391, %v1438
    %v1471 = vmax.f32 %v1393, %v1439
    %v1472 = vmax.f32 %v1395, %v1440
    %v1473 = vmax.f32 %v1399, %v1441
    %v1474 = vmax.f32 %v1401, %v1442
    %v1475 = vmax.f32 %v1403, %v1443
    %v1476 = vmax.f32 %v1405, %v1444
    %v1477 = vmax.f32 %v1409, %v1445
    %v1478 = vmax.f32 %v1411, %v1446
    %v1479 = vmax.f32 %v1413, %v1447
    %v1480 = vmax.f32 %v1415, %v1448
    %v1481 = vpack.c.bf16 %v1451, %v1449
    %v1482 = vpack.c.bf16 %v1452, %v1450
    %v1483 = vpack.c.bf16 %v1455, %v1453
    %v1484 = vpack.c.bf16 %v1456, %v1454
    %v1485 = vpack.c.bf16 %v1459, %v1457
    %v1486 = vpack.c.bf16 %v1460, %v1458
    %v1487 = vpack.c.bf16 %v1463, %v1461
    %v1488 = vpack.c.bf16 %v1464, %v1462
    %v1489 = vpack.c.bf16 %v1467, %v1465
    %v1490 = vpack.c.bf16 %v1468, %v1466
    %v1491 = vpack.c.bf16 %v1471, %v1469
    %v1492 = vpack.c.bf16 %v1472, %v1470
    %v1493 = vpack.c.bf16 %v1475, %v1473
    %v1494 = vpack.c.bf16 %v1476, %v1474
    %v1495 = vpack.c.bf16 %v1479, %v1477
    %v1496 = vpack.c.bf16 %v1480, %v1478
    %v1497 = vld [vmem:[#allocation7] sm:$0xff]
    %v1498 = vld [vmem:[#allocation7 + $0x8] sm:$0xff]
    %v1499 = vld [vmem:[#allocation7 + $0x10] sm:$0xff]
    %v1500 = vld [vmem:[#allocation7 + $0x18] sm:$0xff]
    %v1501 = vld [vmem:[#allocation7 + $0x20] sm:$0xff]
    %v1502 = vld [vmem:[#allocation7 + $0x28] sm:$0xff]
    %v1503 = vld [vmem:[#allocation7 + $0x30] sm:$0xff]
    %v1504 = vld [vmem:[#allocation7 + $0x38] sm:$0xff]
    %v1505 = vld [vmem:[#allocation7 + $0x40] sm:$0xff]
    %v1506 = vld [vmem:[#allocation7 + $0x48] sm:$0xff]
    %v1507 = vld [vmem:[#allocation7 + $0x50] sm:$0xff]
    %v1508 = vld [vmem:[#allocation7 + $0x58] sm:$0xff]
    %v1509 = vld [vmem:[#allocation7 + $0x60] sm:$0xff]
    %v1510 = vld [vmem:[#allocation7 + $0x68] sm:$0xff]
    %v1511 = vld [vmem:[#allocation7 + $0x70] sm:$0xff]
    %v1512 = vld [vmem:[#allocation7 + $0x78] sm:$0xff]
    %v1513 = vld [vmem:[#allocation7 + $0x80] sm:$0xff]
    %v1514 = vld [vmem:[#allocation7 + $0x88] sm:$0xff]
    %v1515 = vld [vmem:[#allocation7 + $0x90] sm:$0xff]
    %v1516 = vld [vmem:[#allocation7 + $0x98] sm:$0xff]
    %v1517 = vld [vmem:[#allocation7 + $0xa0] sm:$0xff]
    %v1518 = vld [vmem:[#allocation7 + $0xa8] sm:$0xff]
    %v1519 = vld [vmem:[#allocation7 + $0xb0] sm:$0xff]
    %v1520 = vld [vmem:[#allocation7 + $0xb8] sm:$0xff]
    %v1521 = vld [vmem:[#allocation7 + $0xc0] sm:$0xff]
    %v1522 = vld [vmem:[#allocation7 + $0xc8] sm:$0xff]
    %v1523 = vld [vmem:[#allocation7 + $0xd0] sm:$0xff]
    %v1524 = vld [vmem:[#allocation7 + $0xd8] sm:$0xff]
    %v1525 = vld [vmem:[#allocation7 + $0xe0] sm:$0xff]
    %v1526 = vld [vmem:[#allocation7 + $0xe8] sm:$0xff]
    %v1527 = vld [vmem:[#allocation7 + $0xf0] sm:$0xff]
    %v1528 = vld [vmem:[#allocation7 + $0xf8] sm:$0xff]
    %v1529 = vld [vmem:[#allocation7 + $0x100] sm:$0xff]
    %v1530 = vld [vmem:[#allocation7 + $0x108] sm:$0xff]
    %v1531 = vld [vmem:[#allocation7 + $0x110] sm:$0xff]
    %v1532 = vld [vmem:[#allocation7 + $0x118] sm:$0xff]
    %v1533 = vld [vmem:[#allocation7 + $0x120] sm:$0xff]
    %v1534 = vld [vmem:[#allocation7 + $0x128] sm:$0xff]
    %v1535 = vld [vmem:[#allocation7 + $0x130] sm:$0xff]
    %v1536 = vld [vmem:[#allocation7 + $0x138] sm:$0xff]
    %v1537 = vld [vmem:[#allocation7 + $0x140] sm:$0xff]
    %v1538 = vld [vmem:[#allocation7 + $0x148] sm:$0xff]
    %v1539 = vld [vmem:[#allocation7 + $0x150] sm:$0xff]
    %v1540 = vld [vmem:[#allocation7 + $0x158] sm:$0xff]
    %v1541 = vld [vmem:[#allocation7 + $0x160] sm:$0xff]
    %v1542 = vld [vmem:[#allocation7 + $0x168] sm:$0xff]
    %v1543 = vld [vmem:[#allocation7 + $0x170] sm:$0xff]
    %v1544 = vld [vmem:[#allocation7 + $0x178] sm:$0xff]
    %v1545 = vld [vmem:[#allocation7 + $0x180] sm:$0xff]
    %v1546 = vld [vmem:[#allocation7 + $0x188] sm:$0xff]
    %v1547 = vld [vmem:[#allocation7 + $0x190] sm:$0xff]
    %v1548 = vld [vmem:[#allocation7 + $0x198] sm:$0xff]
    %v1549 = vld [vmem:[#allocation7 + $0x1a0] sm:$0xff]
    %v1550 = vld [vmem:[#allocation7 + $0x1a8] sm:$0xff]
    %v1551 = vld [vmem:[#allocation7 + $0x1b0] sm:$0xff]
    %v1552 = vld [vmem:[#allocation7 + $0x1b8] sm:$0xff]
    %v1553 = vld [vmem:[#allocation7 + $0x1c0] sm:$0xff]
    %v1554 = vld [vmem:[#allocation7 + $0x1c8] sm:$0xff]
    %v1555 = vld [vmem:[#allocation7 + $0x1d0] sm:$0xff]
    %v1556 = vld [vmem:[#allocation7 + $0x1d8] sm:$0xff]
    %v1557 = vld [vmem:[#allocation7 + $0x1e0] sm:$0xff]
    %v1558 = vld [vmem:[#allocation7 + $0x1e8] sm:$0xff]
    %v1559 = vld [vmem:[#allocation7 + $0x1f0] sm:$0xff]
    %v1560 = vld [vmem:[#allocation7 + $0x1f8] sm:$0xff]
    %s1561 = scalar_lea.vmem [#allocation15], 4
    %v1562 = vld [vmem:[%s1561] ss:$8 sm:$0xf]
    %v1564 = vlaneseq
    %v1565 = vshrl.u32 %v1564, 7
    %v1566 = vsub.s32 0, %v1565
    %v1567 = vrot.slane %v1562, %v1566
    %v1568 = vlaneseq
    %v1569 = vshrl.u32 %v1568, 7
    %v1570 = vsub.s32 1, %v1569
    %v1571 = vrot.slane %v1562, %v1570
    %v1572 = vlaneseq
    %v1573 = vshrl.u32 %v1572, 7
    %v1574 = vsub.s32 2, %v1573
    %v1575 = vrot.slane %v1562, %v1574
    %v1576 = vlaneseq
    %v1577 = vshrl.u32 %v1576, 7
    %v1578 = vsub.s32 3, %v1577
    %v1579 = vrot.slane %v1562, %v1578
    %v1648 = vunpack.c.l.b16 %v1497
    %v1649 = vunpack.c.h.b16 %v1497
    %v1650 = vunpack.c.l.b16 %v1498
    %v1651 = vunpack.c.h.b16 %v1498
    %v1652 = vunpack.c.l.b16 %v1499
    %v1653 = vunpack.c.h.b16 %v1499
    %v1654 = vunpack.c.l.b16 %v1500
    %v1655 = vunpack.c.h.b16 %v1500
    %v1656 = vunpack.c.l.b16 %v1501
    %v1657 = vunpack.c.h.b16 %v1501
    %v1658 = vunpack.c.l.b16 %v1502
    %v1659 = vunpack.c.h.b16 %v1502
    %v1660 = vunpack.c.l.b16 %v1503
    %v1661 = vunpack.c.h.b16 %v1503
    %v1662 = vunpack.c.l.b16 %v1504
    %v1663 = vunpack.c.h.b16 %v1504
    %v1664 = vunpack.c.l.b16 %v1505
    %v1665 = vunpack.c.h.b16 %v1505
    %v1666 = vunpack.c.l.b16 %v1506
    %v1667 = vunpack.c.h.b16 %v1506
    %v1668 = vunpack.c.l.b16 %v1507
    %v1669 = vunpack.c.h.b16 %v1507
    %v1670 = vunpack.c.l.b16 %v1508
    %v1671 = vunpack.c.h.b16 %v1508
    %v1672 = vunpack.c.l.b16 %v1509
    %v1673 = vunpack.c.h.b16 %v1509
    %v1674 = vunpack.c.l.b16 %v1510
    %v1675 = vunpack.c.h.b16 %v1510
    %v1676 = vunpack.c.l.b16 %v1511
    %v1677 = vunpack.c.h.b16 %v1511
    %v1678 = vunpack.c.l.b16 %v1512
    %v1679 = vunpack.c.h.b16 %v1512
    %v1680 = vunpack.c.l.b16 %v1513
    %v1681 = vunpack.c.h.b16 %v1513
    %v1682 = vunpack.c.l.b16 %v1514
    %v1683 = vunpack.c.h.b16 %v1514
    %v1684 = vunpack.c.l.b16 %v1515
    %v1685 = vunpack.c.h.b16 %v1515
    %v1686 = vunpack.c.l.b16 %v1516
    %v1687 = vunpack.c.h.b16 %v1516
    %v1688 = vunpack.c.l.b16 %v1517
    %v1689 = vunpack.c.h.b16 %v1517
    %v1690 = vunpack.c.l.b16 %v1518
    %v1691 = vunpack.c.h.b16 %v1518
    %v1692 = vunpack.c.l.b16 %v1519
    %v1693 = vunpack.c.h.b16 %v1519
    %v1694 = vunpack.c.l.b16 %v1520
    %v1695 = vunpack.c.h.b16 %v1520
    %v1696 = vunpack.c.l.b16 %v1521
    %v1697 = vunpack.c.h.b16 %v1521
    %v1698 = vunpack.c.l.b16 %v1522
    %v1699 = vunpack.c.h.b16 %v1522
    %v1700 = vunpack.c.l.b16 %v1523
    %v1701 = vunpack.c.h.b16 %v1523
    %v1702 = vunpack.c.l.b16 %v1524
    %v1703 = vunpack.c.h.b16 %v1524
    %v1704 = vunpack.c.l.b16 %v1525
    %v1705 = vunpack.c.h.b16 %v1525
    %v1706 = vunpack.c.l.b16 %v1526
    %v1707 = vunpack.c.h.b16 %v1526
    %v1708 = vunpack.c.l.b16 %v1527
    %v1709 = vunpack.c.h.b16 %v1527
    %v1710 = vunpack.c.l.b16 %v1528
    %v1711 = vunpack.c.h.b16 %v1528
    %v1712 = vunpack.c.l.b16 %v1529
    %v1713 = vunpack.c.h.b16 %v1529
    %v1714 = vunpack.c.l.b16 %v1530
    %v1715 = vunpack.c.h.b16 %v1530
    %v1716 = vunpack.c.l.b16 %v1531
    %v1717 = vunpack.c.h.b16 %v1531
    %v1718 = vunpack.c.l.b16 %v1532
    %v1719 = vunpack.c.h.b16 %v1532
    %v1720 = vunpack.c.l.b16 %v1533
    %v1721 = vunpack.c.h.b16 %v1533
    %v1722 = vunpack.c.l.b16 %v1534
    %v1723 = vunpack.c.h.b16 %v1534
    %v1724 = vunpack.c.l.b16 %v1535
    %v1725 = vunpack.c.h.b16 %v1535
    %v1726 = vunpack.c.l.b16 %v1536
    %v1727 = vunpack.c.h.b16 %v1536
    %v1728 = vunpack.c.l.b16 %v1537
    %v1729 = vunpack.c.h.b16 %v1537
    %v1730 = vunpack.c.l.b16 %v1538
    %v1731 = vunpack.c.h.b16 %v1538
    %v1732 = vunpack.c.l.b16 %v1539
    %v1733 = vunpack.c.h.b16 %v1539
    %v1734 = vunpack.c.l.b16 %v1540
    %v1735 = vunpack.c.h.b16 %v1540
    %v1736 = vunpack.c.l.b16 %v1541
    %v1737 = vunpack.c.h.b16 %v1541
    %v1738 = vunpack.c.l.b16 %v1542
    %v1739 = vunpack.c.h.b16 %v1542
    %v1740 = vunpack.c.l.b16 %v1543
    %v1741 = vunpack.c.h.b16 %v1543
    %v1742 = vunpack.c.l.b16 %v1544
    %v1743 = vunpack.c.h.b16 %v1544
    %v1744 = vunpack.c.l.b16 %v1545
    %v1745 = vunpack.c.h.b16 %v1545
    %v1746 = vunpack.c.l.b16 %v1546
    %v1747 = vunpack.c.h.b16 %v1546
    %v1748 = vunpack.c.l.b16 %v1547
    %v1749 = vunpack.c.h.b16 %v1547
    %v1750 = vunpack.c.l.b16 %v1548
    %v1751 = vunpack.c.h.b16 %v1548
    %v1752 = vunpack.c.l.b16 %v1549
    %v1753 = vunpack.c.h.b16 %v1549
    %v1754 = vunpack.c.l.b16 %v1550
    %v1755 = vunpack.c.h.b16 %v1550
    %v1756 = vunpack.c.l.b16 %v1551
    %v1757 = vunpack.c.h.b16 %v1551
    %v1758 = vunpack.c.l.b16 %v1552
    %v1759 = vunpack.c.h.b16 %v1552
    %v1760 = vunpack.c.l.b16 %v1553
    %v1761 = vunpack.c.h.b16 %v1553
    %v1762 = vunpack.c.l.b16 %v1554
    %v1763 = vunpack.c.h.b16 %v1554
    %v1764 = vunpack.c.l.b16 %v1555
    %v1765 = vunpack.c.h.b16 %v1555
    %v1766 = vunpack.c.l.b16 %v1556
    %v1767 = vunpack.c.h.b16 %v1556
    %v1768 = vunpack.c.l.b16 %v1557
    %v1769 = vunpack.c.h.b16 %v1557
    %v1770 = vunpack.c.l.b16 %v1558
    %v1771 = vunpack.c.h.b16 %v1558
    %v1772 = vunpack.c.l.b16 %v1559
    %v1773 = vunpack.c.h.b16 %v1559
    %v1774 = vunpack.c.l.b16 %v1560
    %v1775 = vunpack.c.h.b16 %v1560
    %v1776 = vpack.c.b16 %v1652, %v1648
    %v1777 = vpack.c.b16 %v1653, %v1649
    %v1778 = vpack.c.b16 %v1654, %v1650
    %v1779 = vpack.c.b16 %v1655, %v1651
    %v1780 = vpack.c.b16 %v1660, %v1656
    %v1781 = vpack.c.b16 %v1661, %v1657
    %v1782 = vpack.c.b16 %v1662, %v1658
    %v1783 = vpack.c.b16 %v1663, %v1659
    %v1784 = vpack.c.b16 %v1668, %v1664
    %v1785 = vpack.c.b16 %v1669, %v1665
    %v1786 = vpack.c.b16 %v1670, %v1666
    %v1787 = vpack.c.b16 %v1671, %v1667
    %v1788 = vpack.c.b16 %v1676, %v1672
    %v1789 = vpack.c.b16 %v1677, %v1673
    %v1790 = vpack.c.b16 %v1678, %v1674
    %v1791 = vpack.c.b16 %v1679, %v1675
    %v1792 = vpack.c.b16 %v1684, %v1680
    %v1793 = vpack.c.b16 %v1685, %v1681
    %v1794 = vpack.c.b16 %v1686, %v1682
    %v1795 = vpack.c.b16 %v1687, %v1683
    %v1796 = vpack.c.b16 %v1692, %v1688
    %v1797 = vpack.c.b16 %v1693, %v1689
    %v1798 = vpack.c.b16 %v1694, %v1690
    %v1799 = vpack.c.b16 %v1695, %v1691
    %v1800 = vpack.c.b16 %v1700, %v1696
    %v1801 = vpack.c.b16 %v1701, %v1697
    %v1802 = vpack.c.b16 %v1702, %v1698
    %v1803 = vpack.c.b16 %v1703, %v1699
    %v1804 = vpack.c.b16 %v1708, %v1704
    %v1805 = vpack.c.b16 %v1709, %v1705
    %v1806 = vpack.c.b16 %v1710, %v1706
    %v1807 = vpack.c.b16 %v1711, %v1707
    %v1808 = vpack.c.b16 %v1716, %v1712
    %v1809 = vpack.c.b16 %v1717, %v1713
    %v1810 = vpack.c.b16 %v1718, %v1714
    %v1811 = vpack.c.b16 %v1719, %v1715
    %v1812 = vpack.c.b16 %v1724, %v1720
    %v1813 = vpack.c.b16 %v1725, %v1721
    %v1814 = vpack.c.b16 %v1726, %v1722
    %v1815 = vpack.c.b16 %v1727, %v1723
    %v1816 = vpack.c.b16 %v1732, %v1728
    %v1817 = vpack.c.b16 %v1733, %v1729
    %v1818 = vpack.c.b16 %v1734, %v1730
    %v1819 = vpack.c.b16 %v1735, %v1731
    %v1820 = vpack.c.b16 %v1740, %v1736
    %v1821 = vpack.c.b16 %v1741, %v1737
    %v1822 = vpack.c.b16 %v1742, %v1738
    %v1823 = vpack.c.b16 %v1743, %v1739
    %v1824 = vpack.c.b16 %v1748, %v1744
    %v1825 = vpack.c.b16 %v1749, %v1745
    %v1826 = vpack.c.b16 %v1750, %v1746
    %v1827 = vpack.c.b16 %v1751, %v1747
    %v1828 = vpack.c.b16 %v1756, %v1752
    %v1829 = vpack.c.b16 %v1757, %v1753
    %v1830 = vpack.c.b16 %v1758, %v1754
    %v1831 = vpack.c.b16 %v1759, %v1755
    %v1832 = vpack.c.b16 %v1764, %v1760
    %v1833 = vpack.c.b16 %v1765, %v1761
    %v1834 = vpack.c.b16 %v1766, %v1762
    %v1835 = vpack.c.b16 %v1767, %v1763
    %v1836 = vpack.c.b16 %v1772, %v1768
    %v1837 = vpack.c.b16 %v1773, %v1769
    %v1838 = vpack.c.b16 %v1774, %v1770
    %v1839 = vpack.c.b16 %v1775, %v1771
    %1904 = vmatprep.subr.bf16.mxu0 %v1777
    %1905 = vmatpush1.bf16.msra.mxu0 %v1776
    %1906 = vmatprep.subr.bf16.mxu0 %v1781
    %1907 = vmatpush1.bf16.msra.mxu0 %v1780
    %1908 = vmatprep.subr.bf16.mxu0 %v1785
    %1909 = vmatpush1.bf16.msra.mxu0 %v1784
    %1910 = vmatprep.subr.bf16.mxu0 %v1789
    %1911 = vmatpush1.bf16.msra.mxu0 %v1788
    %1912 = vmatprep.subr.bf16.mxu0 %v1793
    %1913 = vmatpush1.bf16.msra.mxu0 %v1792
    %1914 = vmatprep.subr.bf16.mxu0 %v1797
    %1915 = vmatpush1.bf16.msra.mxu0 %v1796
    %1916 = vmatprep.subr.bf16.mxu0 %v1801
    %1917 = vmatpush1.bf16.msra.mxu0 %v1800
    %1918 = vmatprep.subr.bf16.mxu0 %v1805
    %1919 = vmatpush1.bf16.msra.mxu0 %v1804
    %1920 = vmatprep.subr.bf16.mxu0 %v1809
    %1921 = vmatpush1.bf16.msra.mxu0 %v1808
    %1922 = vmatprep.subr.bf16.mxu0 %v1813
    %1923 = vmatpush1.bf16.msra.mxu0 %v1812
    %1924 = vmatprep.subr.bf16.mxu0 %v1817
    %1925 = vmatpush1.bf16.msra.mxu0 %v1816
    %1926 = vmatprep.subr.bf16.mxu0 %v1821
    %1927 = vmatpush1.bf16.msra.mxu0 %v1820
    %1928 = vmatprep.subr.bf16.mxu0 %v1825
    %1929 = vmatpush1.bf16.msra.mxu0 %v1824
    %1930 = vmatprep.subr.bf16.mxu0 %v1829
    %1931 = vmatpush1.bf16.msra.mxu0 %v1828
    %1932 = vmatprep.subr.bf16.mxu0 %v1833
    %1933 = vmatpush1.bf16.msra.mxu0 %v1832
    %1934 = vmatprep.subr.bf16.mxu0 %v1837
    %1935 = vmatpush1.bf16.msra.mxu0 %v1836
    %1936 = vmatprep.mubr.bf16.mxu0 %v1482
    %1937 = vmatmul.mubr.bf16.gmra.mrb[0].mxu0 %v1481
    %v1938 = vpop.f32.mrb[0].mxu0
    %v1939 = vadd.f32 %v1567, %v1938
    %v1940 = vpop.f32.mrb[0].mxu0
    %v1941 = vadd.f32 %v1571, %v1940
    %v1942 = vpop.f32.mrb[0].mxu0
    %v1943 = vadd.f32 %v1567, %v1942
    %v1944 = vpop.f32.mrb[0].mxu0
    %v1945 = vadd.f32 %v1571, %v1944
    %1946 = vmatprep.mubr.bf16.mxu0 %v1484
    %1947 = vmatmul.mubr.bf16.gmra.mrb[0].mxu0 %v1483
    %v1948 = vpop.f32.mrb[0].mxu0
    %v1949 = vadd.f32 %v1567, %v1948
    %v1950 = vpop.f32.mrb[0].mxu0
    %v1951 = vadd.f32 %v1571, %v1950
    %v1952 = vpop.f32.mrb[0].mxu0
    %v1953 = vadd.f32 %v1567, %v1952
    %v1954 = vpop.f32.mrb[0].mxu0
    %v1955 = vadd.f32 %v1571, %v1954
    %1956 = vmatprep.mubr.bf16.mxu0 %v1486
    %1957 = vmatmul.mubr.bf16.gmra.mrb[0].mxu0 %v1485
    %v1958 = vpop.f32.mrb[0].mxu0
    %v1959 = vadd.f32 %v1567, %v1958
    %v1960 = vpop.f32.mrb[0].mxu0
    %v1961 = vadd.f32 %v1571, %v1960
    %v1962 = vpop.f32.mrb[0].mxu0
    %v1963 = vadd.f32 %v1567, %v1962
    %v1964 = vpop.f32.mrb[0].mxu0
    %v1965 = vadd.f32 %v1571, %v1964
    %1966 = vmatprep.mubr.bf16.mxu0 %v1488
    %1967 = vmatmul.mubr.bf16.gmra.mrb[0].mxu0 %v1487
    %v1968 = vpop.f32.mrb[0].mxu0
    %v1969 = vadd.f32 %v1567, %v1968
    %v1970 = vpop.f32.mrb[0].mxu0
    %v1971 = vadd.f32 %v1571, %v1970
    %v1972 = vpop.f32.mrb[0].mxu0
    %v1973 = vadd.f32 %v1567, %v1972
    %v1974 = vpop.f32.mrb[0].mxu0
    %v1975 = vadd.f32 %v1571, %v1974
    %1976 = vmatprep.mubr.bf16.mxu0 %v1490
    %1977 = vmatmul.mubr.bf16.gmra.mrb[0].mxu0 %v1489
    %v1978 = vpop.f32.mrb[0].mxu0
    %v1979 = vadd.f32 %v1567, %v1978
    %v1980 = vpop.f32.mrb[0].mxu0
    %v1981 = vadd.f32 %v1571, %v1980
    %v1982 = vpop.f32.mrb[0].mxu0
    %v1983 = vadd.f32 %v1567, %v1982
    %v1984 = vpop.f32.mrb[0].mxu0
    %v1985 = vadd.f32 %v1571, %v1984
    %1986 = vmatprep.mubr.bf16.mxu0 %v1492
    %1987 = vmatmul.mubr.bf16.gmra.mrb[0].mxu0 %v1491
    %v1988 = vpop.f32.mrb[0].mxu0
    %v1989 = vadd.f32 %v1567, %v1988
    %v1990 = vpop.f32.mrb[0].mxu0
    %v1991 = vadd.f32 %v1571, %v1990
    %v1992 = vpop.f32.mrb[0].mxu0
    %v1993 = vadd.f32 %v1567, %v1992
    %v1994 = vpop.f32.mrb[0].mxu0
    %v1995 = vadd.f32 %v1571, %v1994
    %1996 = vmatprep.mubr.bf16.mxu0 %v1494
    %1997 = vmatmul.mubr.bf16.gmra.mrb[0].mxu0 %v1493
    %v1998 = vpop.f32.mrb[0].mxu0
    %v1999 = vadd.f32 %v1567, %v1998
    %v2000 = vpop.f32.mrb[0].mxu0
    %v2001 = vadd.f32 %v1571, %v2000
    %v2002 = vpop.f32.mrb[0].mxu0
    %v2003 = vadd.f32 %v1567, %v2002
    %v2004 = vpop.f32.mrb[0].mxu0
    %v2005 = vadd.f32 %v1571, %v2004
    %2006 = vmatprep.mubr.bf16.mxu0 %v1496
    %2007 = vmatmul.mubr.bf16.gmra.mrb[0].mxu0 %v1495
    %v2008 = vpop.f32.mrb[0].mxu0
    %v2009 = vadd.f32 %v1567, %v2008
    %v2010 = vpop.f32.mrb[0].mxu0
    %v2011 = vadd.f32 %v1571, %v2010
    %v2012 = vpop.f32.mrb[0].mxu0
    %v2013 = vadd.f32 %v1567, %v2012
    %v2014 = vpop.f32.mrb[0].mxu0
    %v2015 = vadd.f32 %v1571, %v2014
    %2016 = vdwg.mxu0
    %2017 = vmatprep.subr.bf16.mxu0 %v1779
    %2018 = vmatpush1.bf16.msra.mxu0 %v1778
    %2019 = vmatprep.subr.bf16.mxu0 %v1783
    %2020 = vmatpush1.bf16.msra.mxu0 %v1782
    %2021 = vmatprep.subr.bf16.mxu0 %v1787
    %2022 = vmatpush1.bf16.msra.mxu0 %v1786
    %2023 = vmatprep.subr.bf16.mxu0 %v1791
    %2024 = vmatpush1.bf16.msra.mxu0 %v1790
    %2025 = vmatprep.subr.bf16.mxu0 %v1795
    %2026 = vmatpush1.bf16.msra.mxu0 %v1794
    %2027 = vmatprep.subr.bf16.mxu0 %v1799
    %2028 = vmatpush1.bf16.msra.mxu0 %v1798
    %2029 = vmatprep.subr.bf16.mxu0 %v1803
    %2030 = vmatpush1.bf16.msra.mxu0 %v1802
    %2031 = vmatprep.subr.bf16.mxu0 %v1807
    %2032 = vmatpush1.bf16.msra.mxu0 %v1806
    %2033 = vmatprep.subr.bf16.mxu0 %v1811
    %2034 = vmatpush1.bf16.msra.mxu0 %v1810
    %2035 = vmatprep.subr.bf16.mxu0 %v1815
    %2036 = vmatpush1.bf16.msra.mxu0 %v1814
    %2037 = vmatprep.subr.bf16.mxu0 %v1819
    %2038 = vmatpush1.bf16.msra.mxu0 %v1818
    %2039 = vmatprep.subr.bf16.mxu0 %v1823
    %2040 = vmatpush1.bf16.msra.mxu0 %v1822
    %2041 = vmatprep.subr.bf16.mxu0 %v1827
    %2042 = vmatpush1.bf16.msra.mxu0 %v1826
    %2043 = vmatprep.subr.bf16.mxu0 %v1831
    %2044 = vmatpush1.bf16.msra.mxu0 %v1830
    %2045 = vmatprep.subr.bf16.mxu0 %v1835
    %2046 = vmatpush1.bf16.msra.mxu0 %v1834
    %2047 = vmatprep.subr.bf16.mxu0 %v1839
    %2048 = vmatpush1.bf16.msra.mxu0 %v1838
    %2049 = vmatprep.mubr.bf16.mxu0 %v1482
    %2050 = vmatmul.mubr.bf16.gmra.mrb[0].mxu0 %v1481
    %v2051 = vpop.f32.mrb[0].mxu0
    %v2052 = vadd.f32 %v1575, %v2051
    %v2053 = vpop.f32.mrb[0].mxu0
    %v2054 = vadd.f32 %v1579, %v2053
    %v2055 = vpop.f32.mrb[0].mxu0
    %v2056 = vadd.f32 %v1575, %v2055
    %v2057 = vpop.f32.mrb[0].mxu0
    %v2058 = vadd.f32 %v1579, %v2057
    %2059 = vmatprep.mubr.bf16.mxu0 %v1484
    %2060 = vmatmul.mubr.bf16.gmra.mrb[0].mxu0 %v1483
    %v2061 = vpop.f32.mrb[0].mxu0
    %v2062 = vadd.f32 %v1575, %v2061
    %v2063 = vpop.f32.mrb[0].mxu0
    %v2064 = vadd.f32 %v1579, %v2063
    %v2065 = vpop.f32.mrb[0].mxu0
    %v2066 = vadd.f32 %v1575, %v2065
    %v2067 = vpop.f32.mrb[0].mxu0
    %v2068 = vadd.f32 %v1579, %v2067
    %2069 = vmatprep.mubr.bf16.mxu0 %v1486
    %2070 = vmatmul.mubr.bf16.gmra.mrb[0].mxu0 %v1485
    %v2071 = vpop.f32.mrb[0].mxu0
    %v2072 = vadd.f32 %v1575, %v2071
    %v2073 = vpop.f32.mrb[0].mxu0
    %v2074 = vadd.f32 %v1579, %v2073
    %v2075 = vpop.f32.mrb[0].mxu0
    %v2076 = vadd.f32 %v1575, %v2075
    %v2077 = vpop.f32.mrb[0].mxu0
    %v2078 = vadd.f32 %v1579, %v2077
    %2079 = vmatprep.mubr.bf16.mxu0 %v1488
    %2080 = vmatmul.mubr.bf16.gmra.mrb[0].mxu0 %v1487
    %v2081 = vpop.f32.mrb[0].mxu0
    %v2082 = vadd.f32 %v1575, %v2081
    %v2083 = vpop.f32.mrb[0].mxu0
    %v2084 = vadd.f32 %v1579, %v2083
    %v2085 = vpop.f32.mrb[0].mxu0
    %v2086 = vadd.f32 %v1575, %v2085
    %v2087 = vpop.f32.mrb[0].mxu0
    %v2088 = vadd.f32 %v1579, %v2087
    %2089 = vmatprep.mubr.bf16.mxu0 %v1490
    %2090 = vmatmul.mubr.bf16.gmra.mrb[0].mxu0 %v1489
    %v2091 = vpop.f32.mrb[0].mxu0
    %v2092 = vadd.f32 %v1575, %v2091
    %v2093 = vpop.f32.mrb[0].mxu0
    %v2094 = vadd.f32 %v1579, %v2093
    %v2095 = vpop.f32.mrb[0].mxu0
    %v2096 = vadd.f32 %v1575, %v2095
    %v2097 = vpop.f32.mrb[0].mxu0
    %v2098 = vadd.f32 %v1579, %v2097
    %2099 = vmatprep.mubr.bf16.mxu0 %v1492
    %2100 = vmatmul.mubr.bf16.gmra.mrb[0].mxu0 %v1491
    %v2101 = vpop.f32.mrb[0].mxu0
    %v2102 = vadd.f32 %v1575, %v2101
    %v2103 = vpop.f32.mrb[0].mxu0
    %v2104 = vadd.f32 %v1579, %v2103
    %v2105 = vpop.f32.mrb[0].mxu0
    %v2106 = vadd.f32 %v1575, %v2105
    %v2107 = vpop.f32.mrb[0].mxu0
    %v2108 = vadd.f32 %v1579, %v2107
    %2109 = vmatprep.mubr.bf16.mxu0 %v1494
    %2110 = vmatmul.mubr.bf16.gmra.mrb[0].mxu0 %v1493
    %v2111 = vpop.f32.mrb[0].mxu0
    %v2112 = vadd.f32 %v1575, %v2111
    %v2113 = vpop.f32.mrb[0].mxu0
    %v2114 = vadd.f32 %v1579, %v2113
    %v2115 = vpop.f32.mrb[0].mxu0
    %v2116 = vadd.f32 %v1575, %v2115
    %v2117 = vpop.f32.mrb[0].mxu0
    %v2118 = vadd.f32 %v1579, %v2117
    %2119 = vmatprep.mubr.bf16.mxu0 %v1496
    %2120 = vmatmul.mubr.bf16.gmra.mrb[0].mxu0 %v1495
    %v2121 = vpop.f32.mrb[0].mxu0
    %v2122 = vadd.f32 %v1575, %v2121
    %v2123 = vpop.f32.mrb[0].mxu0
    %v2124 = vadd.f32 %v1579, %v2123
    %v2125 = vpop.f32.mrb[0].mxu0
    %v2126 = vadd.f32 %v1575, %v2125
    %v2127 = vpop.f32.mrb[0].mxu0
    %v2128 = vadd.f32 %v1579, %v2127
    %2129 = vdwg.mxu0
    %v2130 = vmul.f32 %v1939, 0.2
    %v2131 = vmul.f32 %v1941, 0.2
    %v2132 = vmul.f32 %v2052, 0.2
    %v2133 = vmul.f32 %v2054, 0.2
    %v2134 = vmul.f32 %v1943, 0.2
    %v2135 = vmul.f32 %v1945, 0.2
    %v2136 = vmul.f32 %v2056, 0.2
    %v2137 = vmul.f32 %v2058, 0.2
    %v2138 = vmul.f32 %v1949, 0.2
    %v2139 = vmul.f32 %v1951, 0.2
    %v2140 = vmul.f32 %v2062, 0.2
    %v2141 = vmul.f32 %v2064, 0.2
    %v2142 = vmul.f32 %v1953, 0.2
    %v2143 = vmul.f32 %v1955, 0.2
    %v2144 = vmul.f32 %v2066, 0.2
    %v2145 = vmul.f32 %v2068, 0.2
    %v2146 = vmul.f32 %v1959, 0.2
    %v2147 = vmul.f32 %v1961, 0.2
    %v2148 = vmul.f32 %v2072, 0.2
    %v2149 = vmul.f32 %v2074, 0.2
    %v2150 = vmul.f32 %v1963, 0.2
    %v2151 = vmul.f32 %v1965, 0.2
    %v2152 = vmul.f32 %v2076, 0.2
    %v2153 = vmul.f32 %v2078, 0.2
    %v2154 = vmul.f32 %v1969, 0.2
    %v2155 = vmul.f32 %v1971, 0.2
    %v2156 = vmul.f32 %v2082, 0.2
    %v2157 = vmul.f32 %v2084, 0.2
    %v2158 = vmul.f32 %v1973, 0.2
    %v2159 = vmul.f32 %v1975, 0.2
    %v2160 = vmul.f32 %v2086, 0.2
    %v2161 = vmul.f32 %v2088, 0.2
    %v2162 = vmul.f32 %v1979, 0.2
    %v2163 = vmul.f32 %v1981, 0.2
    %v2164 = vmul.f32 %v2092, 0.2
    %v2165 = vmul.f32 %v2094, 0.2
    %v2166 = vmul.f32 %v1983, 0.2
    %v2167 = vmul.f32 %v1985, 0.2
    %v2168 = vmul.f32 %v2096, 0.2
    %v2169 = vmul.f32 %v2098, 0.2
    %v2170 = vmul.f32 %v1989, 0.2
    %v2171 = vmul.f32 %v1991, 0.2
    %v2172 = vmul.f32 %v2102, 0.2
    %v2173 = vmul.f32 %v2104, 0.2
    %v2174 = vmul.f32 %v1993, 0.2
    %v2175 = vmul.f32 %v1995, 0.2
    %v2176 = vmul.f32 %v2106, 0.2
    %v2177 = vmul.f32 %v2108, 0.2
    %v2178 = vmul.f32 %v1999, 0.2
    %v2179 = vmul.f32 %v2001, 0.2
    %v2180 = vmul.f32 %v2112, 0.2
    %v2181 = vmul.f32 %v2114, 0.2
    %v2182 = vmul.f32 %v2003, 0.2
    %v2183 = vmul.f32 %v2005, 0.2
    %v2184 = vmul.f32 %v2116, 0.2
    %v2185 = vmul.f32 %v2118, 0.2
    %v2186 = vmul.f32 %v2009, 0.2
    %v2187 = vmul.f32 %v2011, 0.2
    %v2188 = vmul.f32 %v2122, 0.2
    %v2189 = vmul.f32 %v2124, 0.2
    %v2190 = vmul.f32 %v2013, 0.2
    %v2191 = vmul.f32 %v2015, 0.2
    %v2192 = vmul.f32 %v2126, 0.2
    %v2193 = vmul.f32 %v2128, 0.2
    %v2194 = vmax.f32 %v1939, %v2130
    %v2195 = vmax.f32 %v1941, %v2131
    %v2196 = vmax.f32 %v2052, %v2132
    %v2197 = vmax.f32 %v2054, %v2133
    %v2198 = vmax.f32 %v1943, %v2134
    %v2199 = vmax.f32 %v1945, %v2135
    %v2200 = vmax.f32 %v2056, %v2136
    %v2201 = vmax.f32 %v2058, %v2137
    %v2202 = vmax.f32 %v1949, %v2138
    %v2203 = vmax.f32 %v1951, %v2139
    %v2204 = vmax.f32 %v2062, %v2140
    %v2205 = vmax.f32 %v2064, %v2141
    %v2206 = vmax.f32 %v1953, %v2142
    %v2207 = vmax.f32 %v1955, %v2143
    %v2208 = vmax.f32 %v2066, %v2144
    %v2209 = vmax.f32 %v2068, %v2145
    %v2210 = vmax.f32 %v1959, %v2146
    %v2211 = vmax.f32 %v1961, %v2147
    %v2212 = vmax.f32 %v2072, %v2148
    %v2213 = vmax.f32 %v2074, %v2149
    %v2214 = vmax.f32 %v1963, %v2150
    %v2215 = vmax.f32 %v1965, %v2151
    %v2216 = vmax.f32 %v2076, %v2152
    %v2217 = vmax.f32 %v2078, %v2153
    %v2218 = vmax.f32 %v1969, %v2154
    %v2219 = vmax.f32 %v1971, %v2155
    %v2220 = vmax.f32 %v2082, %v2156
    %v2221 = vmax.f32 %v2084, %v2157
    %v2222 = vmax.f32 %v1973, %v2158
    %v2223 = vmax.f32 %v1975, %v2159
    %v2224 = vmax.f32 %v2086, %v2160
    %v2225 = vmax.f32 %v2088, %v2161
    %v2226 = vmax.f32 %v1979, %v2162
    %v2227 = vmax.f32 %v1981, %v2163
    %v2228 = vmax.f32 %v2092, %v2164
    %v2229 = vmax.f32 %v2094, %v2165
    %v2230 = vmax.f32 %v1983, %v2166
    %v2231 = vmax.f32 %v1985, %v2167
    %v2232 = vmax.f32 %v2096, %v2168
    %v2233 = vmax.f32 %v2098, %v2169
    %v2234 = vmax.f32 %v1989, %v2170
    %v2235 = vmax.f32 %v1991, %v2171
    %v2236 = vmax.f32 %v2102, %v2172
    %v2237 = vmax.f32 %v2104, %v2173
    %v2238 = vmax.f32 %v1993, %v2174
    %v2239 = vmax.f32 %v1995, %v2175
    %v2240 = vmax.f32 %v2106, %v2176
    %v2241 = vmax.f32 %v2108, %v2177
    %v2242 = vmax.f32 %v1999, %v2178
    %v2243 = vmax.f32 %v2001, %v2179
    %v2244 = vmax.f32 %v2112, %v2180
    %v2245 = vmax.f32 %v2114, %v2181
    %v2246 = vmax.f32 %v2003, %v2182
    %v2247 = vmax.f32 %v2005, %v2183
    %v2248 = vmax.f32 %v2116, %v2184
    %v2249 = vmax.f32 %v2118, %v2185
    %v2250 = vmax.f32 %v2009, %v2186
    %v2251 = vmax.f32 %v2011, %v2187
    %v2252 = vmax.f32 %v2122, %v2188
    %v2253 = vmax.f32 %v2124, %v2189
    %v2254 = vmax.f32 %v2013, %v2190
    %v2255 = vmax.f32 %v2015, %v2191
    %v2256 = vmax.f32 %v2126, %v2192
    %v2257 = vmax.f32 %v2128, %v2193
    %v2258 = vpack.c.bf16 %v2198, %v2194
    %v2259 = vpack.c.bf16 %v2199, %v2195
    %v2260 = vpack.c.bf16 %v2200, %v2196
    %v2261 = vpack.c.bf16 %v2201, %v2197
    %v2262 = vpack.c.bf16 %v2206, %v2202
    %v2263 = vpack.c.bf16 %v2207, %v2203
    %v2264 = vpack.c.bf16 %v2208, %v2204
    %v2265 = vpack.c.bf16 %v2209, %v2205
    %v2266 = vpack.c.bf16 %v2214, %v2210
    %v2267 = vpack.c.bf16 %v2215, %v2211
    %v2268 = vpack.c.bf16 %v2216, %v2212
    %v2269 = vpack.c.bf16 %v2217, %v2213
    %v2270 = vpack.c.bf16 %v2222, %v2218
    %v2271 = vpack.c.bf16 %v2223, %v2219
    %v2272 = vpack.c.bf16 %v2224, %v2220
    %v2273 = vpack.c.bf16 %v2225, %v2221
    %v2274 = vpack.c.bf16 %v2230, %v2226
    %v2275 = vpack.c.bf16 %v2231, %v2227
    %v2276 = vpack.c.bf16 %v2232, %v2228
    %v2277 = vpack.c.bf16 %v2233, %v2229
    %v2278 = vpack.c.bf16 %v2238, %v2234
    %v2279 = vpack.c.bf16 %v2239, %v2235
    %v2280 = vpack.c.bf16 %v2240, %v2236
    %v2281 = vpack.c.bf16 %v2241, %v2237
    %v2282 = vpack.c.bf16 %v2246, %v2242
    %v2283 = vpack.c.bf16 %v2247, %v2243
    %v2284 = vpack.c.bf16 %v2248, %v2244
    %v2285 = vpack.c.bf16 %v2249, %v2245
    %v2286 = vpack.c.bf16 %v2254, %v2250
    %v2287 = vpack.c.bf16 %v2255, %v2251
    %v2288 = vpack.c.bf16 %v2256, %v2252
    %v2289 = vpack.c.bf16 %v2257, %v2253
    %v2290 = vld [vmem:[#allocation9] sm:$0xf]
    %v2291 = vld [vmem:[#allocation9 + $0x4] sm:$0xf]
    %v2292 = vld [vmem:[#allocation9 + $0x8] sm:$0xf]
    %v2293 = vld [vmem:[#allocation9 + $0xc] sm:$0xf]
    %v2294 = vld [vmem:[#allocation9 + $0x10] sm:$0xf]
    %v2295 = vld [vmem:[#allocation9 + $0x14] sm:$0xf]
    %v2296 = vld [vmem:[#allocation9 + $0x18] sm:$0xf]
    %v2297 = vld [vmem:[#allocation9 + $0x1c] sm:$0xf]
    %v2298 = vld [vmem:[#allocation9 + $0x20] sm:$0xf]
    %v2299 = vld [vmem:[#allocation9 + $0x24] sm:$0xf]
    %v2300 = vld [vmem:[#allocation9 + $0x28] sm:$0xf]
    %v2301 = vld [vmem:[#allocation9 + $0x2c] sm:$0xf]
    %v2302 = vld [vmem:[#allocation9 + $0x30] sm:$0xf]
    %v2303 = vld [vmem:[#allocation9 + $0x34] sm:$0xf]
    %v2304 = vld [vmem:[#allocation9 + $0x38] sm:$0xf]
    %v2305 = vld [vmem:[#allocation9 + $0x3c] sm:$0xf]
    %v2306 = vld [vmem:[#allocation9 + $0x40] sm:$0xf]
    %v2307 = vld [vmem:[#allocation9 + $0x44] sm:$0xf]
    %v2308 = vld [vmem:[#allocation9 + $0x48] sm:$0xf]
    %v2309 = vld [vmem:[#allocation9 + $0x4c] sm:$0xf]
    %v2310 = vld [vmem:[#allocation9 + $0x50] sm:$0xf]
    %v2311 = vld [vmem:[#allocation9 + $0x54] sm:$0xf]
    %v2312 = vld [vmem:[#allocation9 + $0x58] sm:$0xf]
    %v2313 = vld [vmem:[#allocation9 + $0x5c] sm:$0xf]
    %v2314 = vld [vmem:[#allocation9 + $0x60] sm:$0xf]
    %v2315 = vld [vmem:[#allocation9 + $0x64] sm:$0xf]
    %v2316 = vld [vmem:[#allocation9 + $0x68] sm:$0xf]
    %v2317 = vld [vmem:[#allocation9 + $0x6c] sm:$0xf]
    %v2318 = vld [vmem:[#allocation9 + $0x70] sm:$0xf]
    %v2319 = vld [vmem:[#allocation9 + $0x74] sm:$0xf]
    %v2320 = vld [vmem:[#allocation9 + $0x78] sm:$0xf]
    %v2321 = vld [vmem:[#allocation9 + $0x7c] sm:$0xf]
    %v2354 = vunpack.c.l.b16 %v2290
    %v2355 = vunpack.c.l.b16 %v2291
    %v2356 = vunpack.c.l.b16 %v2292
    %v2357 = vunpack.c.l.b16 %v2293
    %v2358 = vunpack.c.l.b16 %v2294
    %v2359 = vunpack.c.l.b16 %v2295
    %v2360 = vunpack.c.l.b16 %v2296
    %v2361 = vunpack.c.l.b16 %v2297
    %v2362 = vunpack.c.l.b16 %v2298
    %v2363 = vunpack.c.l.b16 %v2299
    %v2364 = vunpack.c.l.b16 %v2300
    %v2365 = vunpack.c.l.b16 %v2301
    %v2366 = vunpack.c.l.b16 %v2302
    %v2367 = vunpack.c.l.b16 %v2303
    %v2368 = vunpack.c.l.b16 %v2304
    %v2369 = vunpack.c.l.b16 %v2305
    %v2370 = vunpack.c.l.b16 %v2306
    %v2371 = vunpack.c.l.b16 %v2307
    %v2372 = vunpack.c.l.b16 %v2308
    %v2373 = vunpack.c.l.b16 %v2309
    %v2374 = vunpack.c.l.b16 %v2310
    %v2375 = vunpack.c.l.b16 %v2311
    %v2376 = vunpack.c.l.b16 %v2312
    %v2377 = vunpack.c.l.b16 %v2313
    %v2378 = vunpack.c.l.b16 %v2314
    %v2379 = vunpack.c.l.b16 %v2315
    %v2380 = vunpack.c.l.b16 %v2316
    %v2381 = vunpack.c.l.b16 %v2317
    %v2382 = vunpack.c.l.b16 %v2318
    %v2383 = vunpack.c.l.b16 %v2319
    %v2384 = vunpack.c.l.b16 %v2320
    %v2385 = vunpack.c.l.b16 %v2321
    %v2386 = vpack.c.b16 %v2355, %v2354
    %v2387 = vpack.c.b16 %v2357, %v2356
    %v2388 = vpack.c.b16 %v2359, %v2358
    %v2389 = vpack.c.b16 %v2361, %v2360
    %v2390 = vpack.c.b16 %v2363, %v2362
    %v2391 = vpack.c.b16 %v2365, %v2364
    %v2392 = vpack.c.b16 %v2367, %v2366
    %v2393 = vpack.c.b16 %v2369, %v2368
    %v2394 = vpack.c.b16 %v2371, %v2370
    %v2395 = vpack.c.b16 %v2373, %v2372
    %v2396 = vpack.c.b16 %v2375, %v2374
    %v2397 = vpack.c.b16 %v2377, %v2376
    %v2398 = vpack.c.b16 %v2379, %v2378
    %v2399 = vpack.c.b16 %v2381, %v2380
    %v2400 = vpack.c.b16 %v2383, %v2382
    %v2401 = vpack.c.b16 %v2385, %v2384
    %2418 = vmatprep.subr.bf16.mxu0 0
    %2419 = vmatpush1.bf16.msra.mxu0 %v2386
    %2420 = vmatprep.subr.bf16.mxu0 0
    %2421 = vmatpush1.bf16.msra.mxu0 %v2387
    %2422 = vmatprep.subr.bf16.mxu0 0
    %2423 = vmatpush1.bf16.msra.mxu0 %v2388
    %2424 = vmatprep.subr.bf16.mxu0 0
    %2425 = vmatpush1.bf16.msra.mxu0 %v2389
    %2426 = vmatprep.subr.bf16.mxu0 0
    %2427 = vmatpush1.bf16.msra.mxu0 %v2390
    %2428 = vmatprep.subr.bf16.mxu0 0
    %2429 = vmatpush1.bf16.msra.mxu0 %v2391
    %2430 = vmatprep.subr.bf16.mxu0 0
    %2431 = vmatpush1.bf16.msra.mxu0 %v2392
    %2432 = vmatprep.subr.bf16.mxu0 0
    %2433 = vmatpush1.bf16.msra.mxu0 %v2393
    %2434 = vmatprep.subr.bf16.mxu0 0
    %2435 = vmatpush1.bf16.msra.mxu0 %v2394
    %2436 = vmatprep.subr.bf16.mxu0 0
    %2437 = vmatpush1.bf16.msra.mxu0 %v2395
    %2438 = vmatprep.subr.bf16.mxu0 0
    %2439 = vmatpush1.bf16.msra.mxu0 %v2396
    %2440 = vmatprep.subr.bf16.mxu0 0
    %2441 = vmatpush1.bf16.msra.mxu0 %v2397
    %2442 = vmatprep.subr.bf16.mxu0 0
    %2443 = vmatpush1.bf16.msra.mxu0 %v2398
    %2444 = vmatprep.subr.bf16.mxu0 0
    %2445 = vmatpush1.bf16.msra.mxu0 %v2399
    %2446 = vmatprep.subr.bf16.mxu0 0
    %2447 = vmatpush1.bf16.msra.mxu0 %v2400
    %2448 = vmatprep.subr.bf16.mxu0 0
    %2449 = vmatpush1.bf16.msra.mxu0 %v2401
    %2450 = vmatprep.mubr.bf16.mxu0 %v2259
    %2451 = vmatmul.mubr.bf16.gmra.mrb[0].mxu0 %v2258
    %v2452 = vpop.f32.mrb[0].mxu0
    %v2453 = vadd.f32 0.0, %v2452
    %v2454 = vpop.f32.mrb[0].mxu0
    %v2455 = vpop.f32.mrb[0].mxu0
    %v2456 = vadd.f32 0.0, %v2455
    %v2457 = vpop.f32.mrb[0].mxu0
    %2458 = vmatprep.mubr.bf16.mxu0 %v2263
    %2459 = vmatmul.mubr.bf16.gmra.mrb[0].mxu0 %v2262
    %v2460 = vpop.f32.mrb[0].mxu0
    %v2461 = vadd.f32 0.0, %v2460
    %v2462 = vpop.f32.mrb[0].mxu0
    %v2463 = vpop.f32.mrb[0].mxu0
    %v2464 = vadd.f32 0.0, %v2463
    %v2465 = vpop.f32.mrb[0].mxu0
    %2466 = vmatprep.mubr.bf16.mxu0 %v2267
    %2467 = vmatmul.mubr.bf16.gmra.mrb[0].mxu0 %v2266
    %v2468 = vpop.f32.mrb[0].mxu0
    %v2469 = vadd.f32 0.0, %v2468
    %v2470 = vpop.f32.mrb[0].mxu0
    %v2471 = vpop.f32.mrb[0].mxu0
    %v2472 = vadd.f32 0.0, %v2471
    %v2473 = vpop.f32.mrb[0].mxu0
    %2474 = vmatprep.mubr.bf16.mxu0 %v2271
    %2475 = vmatmul.mubr.bf16.gmra.mrb[0].mxu0 %v2270
    %v2476 = vpop.f32.mrb[0].mxu0
    %v2477 = vadd.f32 0.0, %v2476
    %v2478 = vpop.f32.mrb[0].mxu0
    %v2479 = vpop.f32.mrb[0].mxu0
    %v2480 = vadd.f32 0.0, %v2479
    %v2481 = vpop.f32.mrb[0].mxu0
    %2482 = vmatprep.mubr.bf16.mxu0 %v2275
    %2483 = vmatmul.mubr.bf16.gmra.mrb[0].mxu0 %v2274
    %v2484 = vpop.f32.mrb[0].mxu0
    %v2485 = vadd.f32 0.0, %v2484
    %v2486 = vpop.f32.mrb[0].mxu0
    %v2487 = vpop.f32.mrb[0].mxu0
    %v2488 = vadd.f32 0.0, %v2487
    %v2489 = vpop.f32.mrb[0].mxu0
    %2490 = vmatprep.mubr.bf16.mxu0 %v2279
    %2491 = vmatmul.mubr.bf16.gmra.mrb[0].mxu0 %v2278
    %v2492 = vpop.f32.mrb[0].mxu0
    %v2493 = vadd.f32 0.0, %v2492
    %v2494 = vpop.f32.mrb[0].mxu0
    %v2495 = vpop.f32.mrb[0].mxu0
    %v2496 = vadd.f32 0.0, %v2495
    %v2497 = vpop.f32.mrb[0].mxu0
    %2498 = vmatprep.mubr.bf16.mxu0 %v2283
    %2499 = vmatmul.mubr.bf16.gmra.mrb[0].mxu0 %v2282
    %v2500 = vpop.f32.mrb[0].mxu0
    %v2501 = vadd.f32 0.0, %v2500
    %v2502 = vpop.f32.mrb[0].mxu0
    %v2503 = vpop.f32.mrb[0].mxu0
    %v2504 = vadd.f32 0.0, %v2503
    %v2505 = vpop.f32.mrb[0].mxu0
    %2506 = vmatprep.mubr.bf16.mxu0 %v2287
    %2507 = vmatmul.mubr.bf16.gmra.mrb[0].mxu0 %v2286
    %v2508 = vpop.f32.mrb[0].mxu0
    %v2509 = vadd.f32 0.0, %v2508
    %v2510 = vpop.f32.mrb[0].mxu0
    %v2511 = vpop.f32.mrb[0].mxu0
    %v2512 = vadd.f32 0.0, %v2511
    %v2513 = vpop.f32.mrb[0].mxu0
    %2514 = vdwg.mxu0
    %v2515 = vld [vmem:[#allocation10] sm:$0xf]
    %v2516 = vld [vmem:[#allocation10 + $0x4] sm:$0xf]
    %v2517 = vld [vmem:[#allocation10 + $0x8] sm:$0xf]
    %v2518 = vld [vmem:[#allocation10 + $0xc] sm:$0xf]
    %v2519 = vld [vmem:[#allocation10 + $0x10] sm:$0xf]
    %v2520 = vld [vmem:[#allocation10 + $0x14] sm:$0xf]
    %v2521 = vld [vmem:[#allocation10 + $0x18] sm:$0xf]
    %v2522 = vld [vmem:[#allocation10 + $0x1c] sm:$0xf]
    %v2523 = vld [vmem:[#allocation10 + $0x20] sm:$0xf]
    %v2524 = vld [vmem:[#allocation10 + $0x24] sm:$0xf]
    %v2525 = vld [vmem:[#allocation10 + $0x28] sm:$0xf]
    %v2526 = vld [vmem:[#allocation10 + $0x2c] sm:$0xf]
    %v2527 = vld [vmem:[#allocation10 + $0x30] sm:$0xf]
    %v2528 = vld [vmem:[#allocation10 + $0x34] sm:$0xf]
    %v2529 = vld [vmem:[#allocation10 + $0x38] sm:$0xf]
    %v2530 = vld [vmem:[#allocation10 + $0x3c] sm:$0xf]
    %v2531 = vld [vmem:[#allocation10 + $0x40] sm:$0xf]
    %v2532 = vld [vmem:[#allocation10 + $0x44] sm:$0xf]
    %v2533 = vld [vmem:[#allocation10 + $0x48] sm:$0xf]
    %v2534 = vld [vmem:[#allocation10 + $0x4c] sm:$0xf]
    %v2535 = vld [vmem:[#allocation10 + $0x50] sm:$0xf]
    %v2536 = vld [vmem:[#allocation10 + $0x54] sm:$0xf]
    %v2537 = vld [vmem:[#allocation10 + $0x58] sm:$0xf]
    %v2538 = vld [vmem:[#allocation10 + $0x5c] sm:$0xf]
    %v2539 = vld [vmem:[#allocation10 + $0x60] sm:$0xf]
    %v2540 = vld [vmem:[#allocation10 + $0x64] sm:$0xf]
    %v2541 = vld [vmem:[#allocation10 + $0x68] sm:$0xf]
    %v2542 = vld [vmem:[#allocation10 + $0x6c] sm:$0xf]
    %v2543 = vld [vmem:[#allocation10 + $0x70] sm:$0xf]
    %v2544 = vld [vmem:[#allocation10 + $0x74] sm:$0xf]
    %v2545 = vld [vmem:[#allocation10 + $0x78] sm:$0xf]
    %v2546 = vld [vmem:[#allocation10 + $0x7c] sm:$0xf]
    %v2579 = vunpack.c.l.b16 %v2515
    %v2580 = vunpack.c.l.b16 %v2516
    %v2581 = vunpack.c.l.b16 %v2517
    %v2582 = vunpack.c.l.b16 %v2518
    %v2583 = vunpack.c.l.b16 %v2519
    %v2584 = vunpack.c.l.b16 %v2520
    %v2585 = vunpack.c.l.b16 %v2521
    %v2586 = vunpack.c.l.b16 %v2522
    %v2587 = vunpack.c.l.b16 %v2523
    %v2588 = vunpack.c.l.b16 %v2524
    %v2589 = vunpack.c.l.b16 %v2525
    %v2590 = vunpack.c.l.b16 %v2526
    %v2591 = vunpack.c.l.b16 %v2527
    %v2592 = vunpack.c.l.b16 %v2528
    %v2593 = vunpack.c.l.b16 %v2529
    %v2594 = vunpack.c.l.b16 %v2530
    %v2595 = vunpack.c.l.b16 %v2531
    %v2596 = vunpack.c.l.b16 %v2532
    %v2597 = vunpack.c.l.b16 %v2533
    %v2598 = vunpack.c.l.b16 %v2534
    %v2599 = vunpack.c.l.b16 %v2535
    %v2600 = vunpack.c.l.b16 %v2536
    %v2601 = vunpack.c.l.b16 %v2537
    %v2602 = vunpack.c.l.b16 %v2538
    %v2603 = vunpack.c.l.b16 %v2539
    %v2604 = vunpack.c.l.b16 %v2540
    %v2605 = vunpack.c.l.b16 %v2541
    %v2606 = vunpack.c.l.b16 %v2542
    %v2607 = vunpack.c.l.b16 %v2543
    %v2608 = vunpack.c.l.b16 %v2544
    %v2609 = vunpack.c.l.b16 %v2545
    %v2610 = vunpack.c.l.b16 %v2546
    %v2611 = vpack.c.b16 %v2580, %v2579
    %v2612 = vpack.c.b16 %v2582, %v2581
    %v2613 = vpack.c.b16 %v2584, %v2583
    %v2614 = vpack.c.b16 %v2586, %v2585
    %v2615 = vpack.c.b16 %v2588, %v2587
    %v2616 = vpack.c.b16 %v2590, %v2589
    %v2617 = vpack.c.b16 %v2592, %v2591
    %v2618 = vpack.c.b16 %v2594, %v2593
    %v2619 = vpack.c.b16 %v2596, %v2595
    %v2620 = vpack.c.b16 %v2598, %v2597
    %v2621 = vpack.c.b16 %v2600, %v2599
    %v2622 = vpack.c.b16 %v2602, %v2601
    %v2623 = vpack.c.b16 %v2604, %v2603
    %v2624 = vpack.c.b16 %v2606, %v2605
    %v2625 = vpack.c.b16 %v2608, %v2607
    %v2626 = vpack.c.b16 %v2610, %v2609
    %2643 = vmatprep.subr.bf16.mxu0 0
    %2644 = vmatpush1.bf16.msra.mxu0 %v2611
    %2645 = vmatprep.subr.bf16.mxu0 0
    %2646 = vmatpush1.bf16.msra.mxu0 %v2612
    %2647 = vmatprep.subr.bf16.mxu0 0
    %2648 = vmatpush1.bf16.msra.mxu0 %v2613
    %2649 = vmatprep.subr.bf16.mxu0 0
    %2650 = vmatpush1.bf16.msra.mxu0 %v2614
    %2651 = vmatprep.subr.bf16.mxu0 0
    %2652 = vmatpush1.bf16.msra.mxu0 %v2615
    %2653 = vmatprep.subr.bf16.mxu0 0
    %2654 = vmatpush1.bf16.msra.mxu0 %v2616
    %2655 = vmatprep.subr.bf16.mxu0 0
    %2656 = vmatpush1.bf16.msra.mxu0 %v2617
    %2657 = vmatprep.subr.bf16.mxu0 0
    %2658 = vmatpush1.bf16.msra.mxu0 %v2618
    %2659 = vmatprep.subr.bf16.mxu0 0
    %2660 = vmatpush1.bf16.msra.mxu0 %v2619
    %2661 = vmatprep.subr.bf16.mxu0 0
    %2662 = vmatpush1.bf16.msra.mxu0 %v2620
    %2663 = vmatprep.subr.bf16.mxu0 0
    %2664 = vmatpush1.bf16.msra.mxu0 %v2621
    %2665 = vmatprep.subr.bf16.mxu0 0
    %2666 = vmatpush1.bf16.msra.mxu0 %v2622
    %2667 = vmatprep.subr.bf16.mxu0 0
    %2668 = vmatpush1.bf16.msra.mxu0 %v2623
    %2669 = vmatprep.subr.bf16.mxu0 0
    %2670 = vmatpush1.bf16.msra.mxu0 %v2624
    %2671 = vmatprep.subr.bf16.mxu0 0
    %2672 = vmatpush1.bf16.msra.mxu0 %v2625
    %2673 = vmatprep.subr.bf16.mxu0 0
    %2674 = vmatpush1.bf16.msra.mxu0 %v2626
    %2675 = vmatprep.mubr.bf16.mxu0 %v2261
    %2676 = vmatmul.mubr.bf16.gmra.mrb[0].mxu0 %v2260
    %v2677 = vpop.f32.mrb[0].mxu0
    %v2678 = vadd.f32 0.0, %v2677
    %v2679 = vpop.f32.mrb[0].mxu0
    %v2680 = vpop.f32.mrb[0].mxu0
    %v2681 = vadd.f32 0.0, %v2680
    %v2682 = vpop.f32.mrb[0].mxu0
    %2683 = vmatprep.mubr.bf16.mxu0 %v2265
    %2684 = vmatmul.mubr.bf16.gmra.mrb[0].mxu0 %v2264
    %v2685 = vpop.f32.mrb[0].mxu0
    %v2686 = vadd.f32 0.0, %v2685
    %v2687 = vpop.f32.mrb[0].mxu0
    %v2688 = vpop.f32.mrb[0].mxu0
    %v2689 = vadd.f32 0.0, %v2688
    %v2690 = vpop.f32.mrb[0].mxu0
    %2691 = vmatprep.mubr.bf16.mxu0 %v2269
    %2692 = vmatmul.mubr.bf16.gmra.mrb[0].mxu0 %v2268
    %v2693 = vpop.f32.mrb[0].mxu0
    %v2694 = vadd.f32 0.0, %v2693
    %v2695 = vpop.f32.mrb[0].mxu0
    %v2696 = vpop.f32.mrb[0].mxu0
    %v2697 = vadd.f32 0.0, %v2696
    %v2698 = vpop.f32.mrb[0].mxu0
    %2699 = vmatprep.mubr.bf16.mxu0 %v2273
    %2700 = vmatmul.mubr.bf16.gmra.mrb[0].mxu0 %v2272
    %v2701 = vpop.f32.mrb[0].mxu0
    %v2702 = vadd.f32 0.0, %v2701
    %v2703 = vpop.f32.mrb[0].mxu0
    %v2704 = vpop.f32.mrb[0].mxu0
    %v2705 = vadd.f32 0.0, %v2704
    %v2706 = vpop.f32.mrb[0].mxu0
    %2707 = vmatprep.mubr.bf16.mxu0 %v2277
    %2708 = vmatmul.mubr.bf16.gmra.mrb[0].mxu0 %v2276
    %v2709 = vpop.f32.mrb[0].mxu0
    %v2710 = vadd.f32 0.0, %v2709
    %v2711 = vpop.f32.mrb[0].mxu0
    %v2712 = vpop.f32.mrb[0].mxu0
    %v2713 = vadd.f32 0.0, %v2712
    %v2714 = vpop.f32.mrb[0].mxu0
    %2715 = vmatprep.mubr.bf16.mxu0 %v2281
    %2716 = vmatmul.mubr.bf16.gmra.mrb[0].mxu0 %v2280
    %v2717 = vpop.f32.mrb[0].mxu0
    %v2718 = vadd.f32 0.0, %v2717
    %v2719 = vpop.f32.mrb[0].mxu0
    %v2720 = vpop.f32.mrb[0].mxu0
    %v2721 = vadd.f32 0.0, %v2720
    %v2722 = vpop.f32.mrb[0].mxu0
    %2723 = vmatprep.mubr.bf16.mxu0 %v2285
    %2724 = vmatmul.mubr.bf16.gmra.mrb[0].mxu0 %v2284
    %v2725 = vpop.f32.mrb[0].mxu0
    %v2726 = vadd.f32 0.0, %v2725
    %v2727 = vpop.f32.mrb[0].mxu0
    %v2728 = vpop.f32.mrb[0].mxu0
    %v2729 = vadd.f32 0.0, %v2728
    %v2730 = vpop.f32.mrb[0].mxu0
    %2731 = vmatprep.mubr.bf16.mxu0 %v2289
    %2732 = vmatmul.mubr.bf16.gmra.mrb[0].mxu0 %v2288
    %v2733 = vpop.f32.mrb[0].mxu0
    %v2734 = vadd.f32 0.0, %v2733
    %v2735 = vpop.f32.mrb[0].mxu0
    %v2736 = vpop.f32.mrb[0].mxu0
    %v2737 = vadd.f32 0.0, %v2736
    %v2738 = vpop.f32.mrb[0].mxu0
    %2739 = vdwg.mxu0
    %s2740 = scalar_lea.vmem [#allocation15], 5
    %v2741 = vld [vmem:[%s2740] ss:$8 sm:$0x3]
    %v2743 = vlaneseq
    %v2744 = vshrl.u32 %v2743, 7
    %v2745 = vsub.s32 0, %v2744
    %v2746 = vrot.slane %v2741, %v2745
    %v2747 = vlaneseq
    %v2748 = vshrl.u32 %v2747, 7
    %v2749 = vsub.s32 1, %v2748
    %v2750 = vrot.slane %v2741, %v2749
    %v2753 = vadd.f32 %v2453, %v2746
    %v2754 = vadd.f32 %v2678, %v2750
    %v2755 = vadd.f32 %v2456, %v2746
    %v2756 = vadd.f32 %v2681, %v2750
    %v2757 = vadd.f32 %v2461, %v2746
    %v2758 = vadd.f32 %v2686, %v2750
    %v2759 = vadd.f32 %v2464, %v2746
    %v2760 = vadd.f32 %v2689, %v2750
    %v2761 = vadd.f32 %v2469, %v2746
    %v2762 = vadd.f32 %v2694, %v2750
    %v2763 = vadd.f32 %v2472, %v2746
    %v2764 = vadd.f32 %v2697, %v2750
    %v2765 = vadd.f32 %v2477, %v2746
    %v2766 = vadd.f32 %v2702, %v2750
    %v2767 = vadd.f32 %v2480, %v2746
    %v2768 = vadd.f32 %v2705, %v2750
    %v2769 = vadd.f32 %v2485, %v2746
    %v2770 = vadd.f32 %v2710, %v2750
    %v2771 = vadd.f32 %v2488, %v2746
    %v2772 = vadd.f32 %v2713, %v2750
    %v2773 = vadd.f32 %v2493, %v2746
    %v2774 = vadd.f32 %v2718, %v2750
    %v2775 = vadd.f32 %v2496, %v2746
    %v2776 = vadd.f32 %v2721, %v2750
    %v2777 = vadd.f32 %v2501, %v2746
    %v2778 = vadd.f32 %v2726, %v2750
    %v2779 = vadd.f32 %v2504, %v2746
    %v2780 = vadd.f32 %v2729, %v2750
    %v2781 = vadd.f32 %v2509, %v2746
    %v2782 = vadd.f32 %v2734, %v2750
    %v2783 = vadd.f32 %v2512, %v2746
    %v2784 = vadd.f32 %v2737, %v2750
    %v2785 = vmul.f32 %v2753, 0.2
    %v2786 = vmul.f32 %v2754, 0.2
    %v2787 = vmul.f32 %v2755, 0.2
    %v2788 = vmul.f32 %v2756, 0.2
    %v2789 = vmul.f32 %v2757, 0.2
    %v2790 = vmul.f32 %v2758, 0.2
    %v2791 = vmul.f32 %v2759, 0.2
    %v2792 = vmul.f32 %v2760, 0.2
    %v2793 = vmul.f32 %v2761, 0.2
    %v2794 = vmul.f32 %v2762, 0.2
    %v2795 = vmul.f32 %v2763, 0.2
    %v2796 = vmul.f32 %v2764, 0.2
    %v2797 = vmul.f32 %v2765, 0.2
    %v2798 = vmul.f32 %v2766, 0.2
    %v2799 = vmul.f32 %v2767, 0.2
    %v2800 = vmul.f32 %v2768, 0.2
    %v2801 = vmul.f32 %v2769, 0.2
    %v2802 = vmul.f32 %v2770, 0.2
    %v2803 = vmul.f32 %v2771, 0.2
    %v2804 = vmul.f32 %v2772, 0.2
    %v2805 = vmul.f32 %v2773, 0.2
    %v2806 = vmul.f32 %v2774, 0.2
    %v2807 = vmul.f32 %v2775, 0.2
    %v2808 = vmul.f32 %v2776, 0.2
    %v2809 = vmul.f32 %v2777, 0.2
    %v2810 = vmul.f32 %v2778, 0.2
    %v2811 = vmul.f32 %v2779, 0.2
    %v2812 = vmul.f32 %v2780, 0.2
    %v2813 = vmul.f32 %v2781, 0.2
    %v2814 = vmul.f32 %v2782, 0.2
    %v2815 = vmul.f32 %v2783, 0.2
    %v2816 = vmul.f32 %v2784, 0.2
    %v2817 = vmax.f32 %v2753, %v2785
    %v2818 = vmax.f32 %v2754, %v2786
    %v2819 = vmax.f32 %v2755, %v2787
    %v2820 = vmax.f32 %v2756, %v2788
    %v2821 = vmax.f32 %v2757, %v2789
    %v2822 = vmax.f32 %v2758, %v2790
    %v2823 = vmax.f32 %v2759, %v2791
    %v2824 = vmax.f32 %v2760, %v2792
    %v2825 = vmax.f32 %v2761, %v2793
    %v2826 = vmax.f32 %v2762, %v2794
    %v2827 = vmax.f32 %v2763, %v2795
    %v2828 = vmax.f32 %v2764, %v2796
    %v2829 = vmax.f32 %v2765, %v2797
    %v2830 = vmax.f32 %v2766, %v2798
    %v2831 = vmax.f32 %v2767, %v2799
    %v2832 = vmax.f32 %v2768, %v2800
    %v2833 = vmax.f32 %v2769, %v2801
    %v2834 = vmax.f32 %v2770, %v2802
    %v2835 = vmax.f32 %v2771, %v2803
    %v2836 = vmax.f32 %v2772, %v2804
    %v2837 = vmax.f32 %v2773, %v2805
    %v2838 = vmax.f32 %v2774, %v2806
    %v2839 = vmax.f32 %v2775, %v2807
    %v2840 = vmax.f32 %v2776, %v2808
    %v2841 = vmax.f32 %v2777, %v2809
    %v2842 = vmax.f32 %v2778, %v2810
    %v2843 = vmax.f32 %v2779, %v2811
    %v2844 = vmax.f32 %v2780, %v2812
    %v2845 = vmax.f32 %v2781, %v2813
    %v2846 = vmax.f32 %v2782, %v2814
    %v2847 = vmax.f32 %v2783, %v2815
    %v2848 = vmax.f32 %v2784, %v2816
    %v2849 = vpack.c.bf16 %v2819, %v2817
    %v2850 = vpack.c.bf16 %v2820, %v2818
    %v2851 = vpack.c.bf16 %v2823, %v2821
    %v2852 = vpack.c.bf16 %v2824, %v2822
    %v2853 = vpack.c.bf16 %v2827, %v2825
    %v2854 = vpack.c.bf16 %v2828, %v2826
    %v2855 = vpack.c.bf16 %v2831, %v2829
    %v2856 = vpack.c.bf16 %v2832, %v2830
    %v2857 = vpack.c.bf16 %v2835, %v2833
    %v2858 = vpack.c.bf16 %v2836, %v2834
    %v2859 = vpack.c.bf16 %v2839, %v2837
    %v2860 = vpack.c.bf16 %v2840, %v2838
    %v2861 = vpack.c.bf16 %v2843, %v2841
    %v2862 = vpack.c.bf16 %v2844, %v2842
    %v2863 = vpack.c.bf16 %v2847, %v2845
    %v2864 = vpack.c.bf16 %v2848, %v2846
    %v2865 = vld [vmem:[#allocation12] sm:$0xf]
    %v2866 = vld [vmem:[#allocation12 + $0x4] sm:$0xf]
    %v2867 = vld [vmem:[#allocation12 + $0x8] sm:$0xf]
    %v2868 = vld [vmem:[#allocation12 + $0xc] sm:$0xf]
    %v2869 = vld [vmem:[#allocation12 + $0x10] sm:$0xf]
    %v2870 = vld [vmem:[#allocation12 + $0x14] sm:$0xf]
    %v2871 = vld [vmem:[#allocation12 + $0x18] sm:$0xf]
    %v2872 = vld [vmem:[#allocation12 + $0x1c] sm:$0xf]
    %v2873 = vld [vmem:[#allocation12 + $0x20] sm:$0xf]
    %v2874 = vld [vmem:[#allocation12 + $0x24] sm:$0xf]
    %v2875 = vld [vmem:[#allocation12 + $0x28] sm:$0xf]
    %v2876 = vld [vmem:[#allocation12 + $0x2c] sm:$0xf]
    %v2877 = vld [vmem:[#allocation12 + $0x30] sm:$0xf]
    %v2878 = vld [vmem:[#allocation12 + $0x34] sm:$0xf]
    %v2879 = vld [vmem:[#allocation12 + $0x38] sm:$0xf]
    %v2880 = vld [vmem:[#allocation12 + $0x3c] sm:$0xf]
    %v2881 = vld [vmem:[#allocation12 + $0x40] sm:$0xf]
    %v2882 = vld [vmem:[#allocation12 + $0x44] sm:$0xf]
    %v2883 = vld [vmem:[#allocation12 + $0x48] sm:$0xf]
    %v2884 = vld [vmem:[#allocation12 + $0x4c] sm:$0xf]
    %v2885 = vld [vmem:[#allocation12 + $0x50] sm:$0xf]
    %v2886 = vld [vmem:[#allocation12 + $0x54] sm:$0xf]
    %v2887 = vld [vmem:[#allocation12 + $0x58] sm:$0xf]
    %v2888 = vld [vmem:[#allocation12 + $0x5c] sm:$0xf]
    %v2889 = vld [vmem:[#allocation12 + $0x60] sm:$0xf]
    %v2890 = vld [vmem:[#allocation12 + $0x64] sm:$0xf]
    %v2891 = vld [vmem:[#allocation12 + $0x68] sm:$0xf]
    %v2892 = vld [vmem:[#allocation12 + $0x6c] sm:$0xf]
    %v2893 = vld [vmem:[#allocation12 + $0x70] sm:$0xf]
    %v2894 = vld [vmem:[#allocation12 + $0x74] sm:$0xf]
    %v2895 = vld [vmem:[#allocation12 + $0x78] sm:$0xf]
    %v2896 = vld [vmem:[#allocation12 + $0x7c] sm:$0xf]
    %v2897 = vld [vmem:[#allocation15 + $0x6] ss:$0 sm:$0xff]
    %v2930 = vunpack.c.l.b16 %v2865
    %v2931 = vunpack.c.l.b16 %v2866
    %v2932 = vunpack.c.l.b16 %v2867
    %v2933 = vunpack.c.l.b16 %v2868
    %v2934 = vunpack.c.l.b16 %v2869
    %v2935 = vunpack.c.l.b16 %v2870
    %v2936 = vunpack.c.l.b16 %v2871
    %v2937 = vunpack.c.l.b16 %v2872
    %v2938 = vunpack.c.l.b16 %v2873
    %v2939 = vunpack.c.l.b16 %v2874
    %v2940 = vunpack.c.l.b16 %v2875
    %v2941 = vunpack.c.l.b16 %v2876
    %v2942 = vunpack.c.l.b16 %v2877
    %v2943 = vunpack.c.l.b16 %v2878
    %v2944 = vunpack.c.l.b16 %v2879
    %v2945 = vunpack.c.l.b16 %v2880
    %v2946 = vunpack.c.l.b16 %v2881
    %v2947 = vunpack.c.l.b16 %v2882
    %v2948 = vunpack.c.l.b16 %v2883
    %v2949 = vunpack.c.l.b16 %v2884
    %v2950 = vunpack.c.l.b16 %v2885
    %v2951 = vunpack.c.l.b16 %v2886
    %v2952 = vunpack.c.l.b16 %v2887
    %v2953 = vunpack.c.l.b16 %v2888
    %v2954 = vunpack.c.l.b16 %v2889
    %v2955 = vunpack.c.l.b16 %v2890
    %v2956 = vunpack.c.l.b16 %v2891
    %v2957 = vunpack.c.l.b16 %v2892
    %v2958 = vunpack.c.l.b16 %v2893
    %v2959 = vunpack.c.l.b16 %v2894
    %v2960 = vunpack.c.l.b16 %v2895
    %v2961 = vunpack.c.l.b16 %v2896
    %v2962 = vpack.c.b16 %v2931, %v2930
    %v2963 = vpack.c.b16 %v2933, %v2932
    %v2964 = vpack.c.b16 %v2935, %v2934
    %v2965 = vpack.c.b16 %v2937, %v2936
    %v2966 = vpack.c.b16 %v2939, %v2938
    %v2967 = vpack.c.b16 %v2941, %v2940
    %v2968 = vpack.c.b16 %v2943, %v2942
    %v2969 = vpack.c.b16 %v2945, %v2944
    %v2970 = vpack.c.b16 %v2947, %v2946
    %v2971 = vpack.c.b16 %v2949, %v2948
    %v2972 = vpack.c.b16 %v2951, %v2950
    %v2973 = vpack.c.b16 %v2953, %v2952
    %v2974 = vpack.c.b16 %v2955, %v2954
    %v2975 = vpack.c.b16 %v2957, %v2956
    %v2976 = vpack.c.b16 %v2959, %v2958
    %v2977 = vpack.c.b16 %v2961, %v2960
    %2994 = vmatprep.subr.bf16.mxu0 0
    %2995 = vmatpush1.bf16.msra.mxu0 %v2962
    %2996 = vmatprep.subr.bf16.mxu0 0
    %2997 = vmatpush1.bf16.msra.mxu0 %v2963
    %2998 = vmatprep.subr.bf16.mxu0 0
    %2999 = vmatpush1.bf16.msra.mxu0 %v2964
    %3000 = vmatprep.subr.bf16.mxu0 0
    %3001 = vmatpush1.bf16.msra.mxu0 %v2965
    %3002 = vmatprep.subr.bf16.mxu0 0
    %3003 = vmatpush1.bf16.msra.mxu0 %v2966
    %3004 = vmatprep.subr.bf16.mxu0 0
    %3005 = vmatpush1.bf16.msra.mxu0 %v2967
    %3006 = vmatprep.subr.bf16.mxu0 0
    %3007 = vmatpush1.bf16.msra.mxu0 %v2968
    %3008 = vmatprep.subr.bf16.mxu0 0
    %3009 = vmatpush1.bf16.msra.mxu0 %v2969
    %3010 = vmatprep.subr.bf16.mxu0 0
    %3011 = vmatpush1.bf16.msra.mxu0 %v2970
    %3012 = vmatprep.subr.bf16.mxu0 0
    %3013 = vmatpush1.bf16.msra.mxu0 %v2971
    %3014 = vmatprep.subr.bf16.mxu0 0
    %3015 = vmatpush1.bf16.msra.mxu0 %v2972
    %3016 = vmatprep.subr.bf16.mxu0 0
    %3017 = vmatpush1.bf16.msra.mxu0 %v2973
    %3018 = vmatprep.subr.bf16.mxu0 0
    %3019 = vmatpush1.bf16.msra.mxu0 %v2974
    %3020 = vmatprep.subr.bf16.mxu0 0
    %3021 = vmatpush1.bf16.msra.mxu0 %v2975
    %3022 = vmatprep.subr.bf16.mxu0 0
    %3023 = vmatpush1.bf16.msra.mxu0 %v2976
    %3024 = vmatprep.subr.bf16.mxu0 0
    %3025 = vmatpush1.bf16.msra.mxu0 %v2977
    %3026 = vmatprep.mubr.bf16.mxu0 %v2850
    %3027 = vmatmul.mubr.bf16.gmra.mrb[0].mxu0 %v2849
    %v3028 = vpop.f32.mrb[0].mxu0
    %v3029 = vadd.f32 %v2897, %v3028
    %v3030 = vpop.f32.mrb[0].mxu0
    %v3031 = vpop.f32.mrb[0].mxu0
    %v3032 = vadd.f32 %v2897, %v3031
    %v3033 = vpop.f32.mrb[0].mxu0
    %3034 = vmatprep.mubr.bf16.mxu0 %v2852
    %3035 = vmatmul.mubr.bf16.gmra.mrb[0].mxu0 %v2851
    %v3036 = vpop.f32.mrb[0].mxu0
    %v3037 = vadd.f32 %v2897, %v3036
    %v3038 = vpop.f32.mrb[0].mxu0
    %v3039 = vpop.f32.mrb[0].mxu0
    %v3040 = vadd.f32 %v2897, %v3039
    %v3041 = vpop.f32.mrb[0].mxu0
    %3042 = vmatprep.mubr.bf16.mxu0 %v2854
    %3043 = vmatmul.mubr.bf16.gmra.mrb[0].mxu0 %v2853
    %v3044 = vpop.f32.mrb[0].mxu0
    %v3045 = vadd.f32 %v2897, %v3044
    %v3046 = vpop.f32.mrb[0].mxu0
    %v3047 = vpop.f32.mrb[0].mxu0
    %v3048 = vadd.f32 %v2897, %v3047
    %v3049 = vpop.f32.mrb[0].mxu0
    %3050 = vmatprep.mubr.bf16.mxu0 %v2856
    %3051 = vmatmul.mubr.bf16.gmra.mrb[0].mxu0 %v2855
    %v3052 = vpop.f32.mrb[0].mxu0
    %v3053 = vadd.f32 %v2897, %v3052
    %v3054 = vpop.f32.mrb[0].mxu0
    %v3055 = vpop.f32.mrb[0].mxu0
    %v3056 = vadd.f32 %v2897, %v3055
    %v3057 = vpop.f32.mrb[0].mxu0
    %3058 = vmatprep.mubr.bf16.mxu0 %v2858
    %3059 = vmatmul.mubr.bf16.gmra.mrb[0].mxu0 %v2857
    %v3060 = vpop.f32.mrb[0].mxu0
    %v3061 = vadd.f32 %v2897, %v3060
    %v3062 = vpop.f32.mrb[0].mxu0
    %v3063 = vpop.f32.mrb[0].mxu0
    %v3064 = vadd.f32 %v2897, %v3063
    %v3065 = vpop.f32.mrb[0].mxu0
    %3066 = vmatprep.mubr.bf16.mxu0 %v2860
    %3067 = vmatmul.mubr.bf16.gmra.mrb[0].mxu0 %v2859
    %v3068 = vpop.f32.mrb[0].mxu0
    %v3069 = vadd.f32 %v2897, %v3068
    %v3070 = vpop.f32.mrb[0].mxu0
    %v3071 = vpop.f32.mrb[0].mxu0
    %v3072 = vadd.f32 %v2897, %v3071
    %v3073 = vpop.f32.mrb[0].mxu0
    %3074 = vmatprep.mubr.bf16.mxu0 %v2862
    %3075 = vmatmul.mubr.bf16.gmra.mrb[0].mxu0 %v2861
    %v3076 = vpop.f32.mrb[0].mxu0
    %v3077 = vadd.f32 %v2897, %v3076
    %v3078 = vpop.f32.mrb[0].mxu0
    %v3079 = vpop.f32.mrb[0].mxu0
    %v3080 = vadd.f32 %v2897, %v3079
    %v3081 = vpop.f32.mrb[0].mxu0
    %3082 = vmatprep.mubr.bf16.mxu0 %v2864
    %3083 = vmatmul.mubr.bf16.gmra.mrb[0].mxu0 %v2863
    %v3084 = vpop.f32.mrb[0].mxu0
    %v3085 = vadd.f32 %v2897, %v3084
    %v3086 = vpop.f32.mrb[0].mxu0
    %v3087 = vpop.f32.mrb[0].mxu0
    %v3088 = vadd.f32 %v2897, %v3087
    %v3089 = vpop.f32.mrb[0].mxu0
    %3090 = vdwg.mxu0
    %v3091 = vmul.f32 %v3029, 0.2
    %v3092 = vmul.f32 %v3032, 0.2
    %v3093 = vmul.f32 %v3037, 0.2
    %v3094 = vmul.f32 %v3040, 0.2
    %v3095 = vmul.f32 %v3045, 0.2
    %v3096 = vmul.f32 %v3048, 0.2
    %v3097 = vmul.f32 %v3053, 0.2
    %v3098 = vmul.f32 %v3056, 0.2
    %v3099 = vmul.f32 %v3061, 0.2
    %v3100 = vmul.f32 %v3064, 0.2
    %v3101 = vmul.f32 %v3069, 0.2
    %v3102 = vmul.f32 %v3072, 0.2
    %v3103 = vmul.f32 %v3077, 0.2
    %v3104 = vmul.f32 %v3080, 0.2
    %v3105 = vmul.f32 %v3085, 0.2
    %v3106 = vmul.f32 %v3088, 0.2
    %v3107 = vmax.f32 %v3029, %v3091
    %v3108 = vmax.f32 %v3032, %v3092
    %v3109 = vmax.f32 %v3037, %v3093
    %v3110 = vmax.f32 %v3040, %v3094
    %v3111 = vmax.f32 %v3045, %v3095
    %v3112 = vmax.f32 %v3048, %v3096
    %v3113 = vmax.f32 %v3053, %v3097
    %v3114 = vmax.f32 %v3056, %v3098
    %v3115 = vmax.f32 %v3061, %v3099
    %v3116 = vmax.f32 %v3064, %v3100
    %v3117 = vmax.f32 %v3069, %v3101
    %v3118 = vmax.f32 %v3072, %v3102
    %v3119 = vmax.f32 %v3077, %v3103
    %v3120 = vmax.f32 %v3080, %v3104
    %v3121 = vmax.f32 %v3085, %v3105
    %v3122 = vmax.f32 %v3088, %v3106
    %v3123 = vpack.c.bf16 %v3108, %v3107
    %v3124 = vpack.c.bf16 %v3110, %v3109
    %v3125 = vpack.c.bf16 %v3112, %v3111
    %v3126 = vpack.c.bf16 %v3114, %v3113
    %v3127 = vpack.c.bf16 %v3116, %v3115
    %v3128 = vpack.c.bf16 %v3118, %v3117
    %v3129 = vpack.c.bf16 %v3120, %v3119
    %v3130 = vpack.c.bf16 %v3122, %v3121
    %v3131 = vld [vmem:[%s9] sm:$0xf]
    %v3132 = vld [vmem:[%s9 + $0x4] sm:$0xf]
    %v3133 = vld [vmem:[%s9 + $0x8] sm:$0xf]
    %v3134 = vld [vmem:[%s9 + $0xc] sm:$0xf]
    %v3135 = vld [vmem:[%s9 + $0x10] sm:$0xf]
    %v3136 = vld [vmem:[%s9 + $0x14] sm:$0xf]
    %v3137 = vld [vmem:[%s9 + $0x18] sm:$0xf]
    %v3138 = vld [vmem:[%s9 + $0x1c] sm:$0xf]
    %v3139 = vld [vmem:[%s9 + $0x20] sm:$0xf]
    %v3140 = vld [vmem:[%s9 + $0x24] sm:$0xf]
    %v3141 = vld [vmem:[%s9 + $0x28] sm:$0xf]
    %v3142 = vld [vmem:[%s9 + $0x2c] sm:$0xf]
    %v3143 = vld [vmem:[%s9 + $0x30] sm:$0xf]
    %v3144 = vld [vmem:[%s9 + $0x34] sm:$0xf]
    %v3145 = vld [vmem:[%s9 + $0x38] sm:$0xf]
    %v3146 = vld [vmem:[%s9 + $0x3c] sm:$0xf]
    %v3147 = vld [vmem:[#allocation15 + $0x7] ss:$0 sm:$0xff]
    %v3164 = vunpack.c.l.b16 %v3131
    %v3165 = vunpack.c.l.b16 %v3132
    %v3166 = vunpack.c.l.b16 %v3133
    %v3167 = vunpack.c.l.b16 %v3134
    %v3168 = vunpack.c.l.b16 %v3135
    %v3169 = vunpack.c.l.b16 %v3136
    %v3170 = vunpack.c.l.b16 %v3137
    %v3171 = vunpack.c.l.b16 %v3138
    %v3172 = vunpack.c.l.b16 %v3139
    %v3173 = vunpack.c.l.b16 %v3140
    %v3174 = vunpack.c.l.b16 %v3141
    %v3175 = vunpack.c.l.b16 %v3142
    %v3176 = vunpack.c.l.b16 %v3143
    %v3177 = vunpack.c.l.b16 %v3144
    %v3178 = vunpack.c.l.b16 %v3145
    %v3179 = vunpack.c.l.b16 %v3146
    %v3180 = vpack.c.b16 %v3165, %v3164
    %v3181 = vpack.c.b16 %v3167, %v3166
    %v3182 = vpack.c.b16 %v3169, %v3168
    %v3183 = vpack.c.b16 %v3171, %v3170
    %v3184 = vpack.c.b16 %v3173, %v3172
    %v3185 = vpack.c.b16 %v3175, %v3174
    %v3186 = vpack.c.b16 %v3177, %v3176
    %v3187 = vpack.c.b16 %v3179, %v3178
    %3196 = vmatprep.subr.bf16.mxu0 0
    %3197 = vmatpush1.bf16.msra.mxu0 %v3180
    %3198 = vmatprep.subr.bf16.mxu0 0
    %3199 = vmatpush1.bf16.msra.mxu0 %v3181
    %3200 = vmatprep.subr.bf16.mxu0 0
    %3201 = vmatpush1.bf16.msra.mxu0 %v3182
    %3202 = vmatprep.subr.bf16.mxu0 0
    %3203 = vmatpush1.bf16.msra.mxu0 %v3183
    %3204 = vmatprep.subr.bf16.mxu0 0
    %3205 = vmatpush1.bf16.msra.mxu0 %v3184
    %3206 = vmatprep.subr.bf16.mxu0 0
    %3207 = vmatpush1.bf16.msra.mxu0 %v3185
    %3208 = vmatprep.subr.bf16.mxu0 0
    %3209 = vmatpush1.bf16.msra.mxu0 %v3186
    %3210 = vmatprep.subr.bf16.mxu0 0
    %3211 = vmatpush1.bf16.msra.mxu0 %v3187
    %3212 = vmatprep.subr.bf16.mxu0 0
    %3213 = vmatpush1.bf16.msra.mxu0 0
    %3214 = vmatprep.subr.bf16.mxu0 0
    %3215 = vmatpush1.bf16.msra.mxu0 0
    %3216 = vmatprep.subr.bf16.mxu0 0
    %3217 = vmatpush1.bf16.msra.mxu0 0
    %3218 = vmatprep.subr.bf16.mxu0 0
    %3219 = vmatpush1.bf16.msra.mxu0 0
    %3220 = vmatprep.subr.bf16.mxu0 0
    %3221 = vmatpush1.bf16.msra.mxu0 0
    %3222 = vmatprep.subr.bf16.mxu0 0
    %3223 = vmatpush1.bf16.msra.mxu0 0
    %3224 = vmatprep.subr.bf16.mxu0 0
    %3225 = vmatpush1.bf16.msra.mxu0 0
    %3226 = vmatprep.subr.bf16.mxu0 0
    %3227 = vmatpush1.bf16.msra.mxu0 0
    %3228 = vmatprep.mubr.bf16.mxu0 0
    %3229 = vmatmul.mubr.bf16.gmra.mrb[0].mxu0 %v3123
    %v3230 = vpop.f32.mrb[0].mxu0
    %v3231 = vadd.f32 %v3147, %v3230
    %v3232 = vpop.f32.mrb[0].mxu0
    %v3233 = vpop.f32.mrb[0].mxu0
    %v3234 = vadd.f32 %v3147, %v3233
    %v3235 = vpop.f32.mrb[0].mxu0
    %3236 = vmatprep.mubr.bf16.mxu0 0
    %3237 = vmatmul.mubr.bf16.gmra.mrb[0].mxu0 %v3124
    %v3238 = vpop.f32.mrb[0].mxu0
    %v3239 = vadd.f32 %v3147, %v3238
    %v3240 = vpop.f32.mrb[0].mxu0
    %v3241 = vpop.f32.mrb[0].mxu0
    %v3242 = vadd.f32 %v3147, %v3241
    %v3243 = vpop.f32.mrb[0].mxu0
    %3244 = vmatprep.mubr.bf16.mxu0 0
    %3245 = vmatmul.mubr.bf16.gmra.mrb[0].mxu0 %v3125
    %v3246 = vpop.f32.mrb[0].mxu0
    %v3247 = vadd.f32 %v3147, %v3246
    %v3248 = vpop.f32.mrb[0].mxu0
    %v3249 = vpop.f32.mrb[0].mxu0
    %v3250 = vadd.f32 %v3147, %v3249
    %v3251 = vpop.f32.mrb[0].mxu0
    %3252 = vmatprep.mubr.bf16.mxu0 0
    %3253 = vmatmul.mubr.bf16.gmra.mrb[0].mxu0 %v3126
    %v3254 = vpop.f32.mrb[0].mxu0
    %v3255 = vadd.f32 %v3147, %v3254
    %v3256 = vpop.f32.mrb[0].mxu0
    %v3257 = vpop.f32.mrb[0].mxu0
    %v3258 = vadd.f32 %v3147, %v3257
    %v3259 = vpop.f32.mrb[0].mxu0
    %3260 = vmatprep.mubr.bf16.mxu0 0
    %3261 = vmatmul.mubr.bf16.gmra.mrb[0].mxu0 %v3127
    %v3262 = vpop.f32.mrb[0].mxu0
    %v3263 = vadd.f32 %v3147, %v3262
    %v3264 = vpop.f32.mrb[0].mxu0
    %v3265 = vpop.f32.mrb[0].mxu0
    %v3266 = vadd.f32 %v3147, %v3265
    %v3267 = vpop.f32.mrb[0].mxu0
    %3268 = vmatprep.mubr.bf16.mxu0 0
    %3269 = vmatmul.mubr.bf16.gmra.mrb[0].mxu0 %v3128
    %v3270 = vpop.f32.mrb[0].mxu0
    %v3271 = vadd.f32 %v3147, %v3270
    %v3272 = vpop.f32.mrb[0].mxu0
    %v3273 = vpop.f32.mrb[0].mxu0
    %v3274 = vadd.f32 %v3147, %v3273
    %v3275 = vpop.f32.mrb[0].mxu0
    %3276 = vmatprep.mubr.bf16.mxu0 0
    %3277 = vmatmul.mubr.bf16.gmra.mrb[0].mxu0 %v3129
    %v3278 = vpop.f32.mrb[0].mxu0
    %v3279 = vadd.f32 %v3147, %v3278
    %v3280 = vpop.f32.mrb[0].mxu0
    %v3281 = vpop.f32.mrb[0].mxu0
    %v3282 = vadd.f32 %v3147, %v3281
    %v3283 = vpop.f32.mrb[0].mxu0
    %3284 = vmatprep.mubr.bf16.mxu0 0
    %3285 = vmatmul.mubr.bf16.gmra.mrb[0].mxu0 %v3130
    %v3286 = vpop.f32.mrb[0].mxu0
    %v3287 = vadd.f32 %v3147, %v3286
    %v3288 = vpop.f32.mrb[0].mxu0
    %v3289 = vpop.f32.mrb[0].mxu0
    %v3290 = vadd.f32 %v3147, %v3289
    %v3291 = vpop.f32.mrb[0].mxu0
    %3292 = vdwg.mxu0
    %v3293 = vmul.f32 %v3231, 0.2
    %v3294 = vmul.f32 %v3234, 0.2
    %v3295 = vmul.f32 %v3239, 0.2
    %v3296 = vmul.f32 %v3242, 0.2
    %v3297 = vmul.f32 %v3247, 0.2
    %v3298 = vmul.f32 %v3250, 0.2
    %v3299 = vmul.f32 %v3255, 0.2
    %v3300 = vmul.f32 %v3258, 0.2
    %v3301 = vmul.f32 %v3263, 0.2
    %v3302 = vmul.f32 %v3266, 0.2
    %v3303 = vmul.f32 %v3271, 0.2
    %v3304 = vmul.f32 %v3274, 0.2
    %v3305 = vmul.f32 %v3279, 0.2
    %v3306 = vmul.f32 %v3282, 0.2
    %v3307 = vmul.f32 %v3287, 0.2
    %v3308 = vmul.f32 %v3290, 0.2
    %v3309 = vmax.f32 %v3231, %v3293
    %v3310 = vmax.f32 %v3234, %v3294
    %v3311 = vmax.f32 %v3239, %v3295
    %v3312 = vmax.f32 %v3242, %v3296
    %v3313 = vmax.f32 %v3247, %v3297
    %v3314 = vmax.f32 %v3250, %v3298
    %v3315 = vmax.f32 %v3255, %v3299
    %v3316 = vmax.f32 %v3258, %v3300
    %v3317 = vmax.f32 %v3263, %v3301
    %v3318 = vmax.f32 %v3266, %v3302
    %v3319 = vmax.f32 %v3271, %v3303
    %v3320 = vmax.f32 %v3274, %v3304
    %v3321 = vmax.f32 %v3279, %v3305
    %v3322 = vmax.f32 %v3282, %v3306
    %v3323 = vmax.f32 %v3287, %v3307
    %v3324 = vmax.f32 %v3290, %v3308
    %v3325 = vpack.c.bf16 %v3310, %v3309
    %v3326 = vpack.c.bf16 %v3312, %v3311
    %v3327 = vpack.c.bf16 %v3314, %v3313
    %v3328 = vpack.c.bf16 %v3316, %v3315
    %v3329 = vpack.c.bf16 %v3318, %v3317
    %v3330 = vpack.c.bf16 %v3320, %v3319
    %v3331 = vpack.c.bf16 %v3322, %v3321
    %v3332 = vpack.c.bf16 %v3324, %v3323
    %v3333 = vld [vmem:[#allocation13] sm:$0xf]
    %v3334 = vld [vmem:[#allocation13 + $0x4] sm:$0xf]
    %v3335 = vld [vmem:[#allocation13 + $0x8] sm:$0xf]
    %v3336 = vld [vmem:[#allocation13 + $0xc] sm:$0xf]
    %v3337 = vld [vmem:[#allocation13 + $0x10] sm:$0xf]
    %v3338 = vld [vmem:[#allocation13 + $0x14] sm:$0xf]
    %v3339 = vld [vmem:[#allocation13 + $0x18] sm:$0xf]
    %v3340 = vld [vmem:[#allocation13 + $0x1c] sm:$0xf]
    %v3341 = vld [vmem:[#allocation13 + $0x20] sm:$0xf]
    %v3342 = vld [vmem:[#allocation13 + $0x24] sm:$0xf]
    %v3343 = vld [vmem:[#allocation13 + $0x28] sm:$0xf]
    %v3344 = vld [vmem:[#allocation13 + $0x2c] sm:$0xf]
    %v3345 = vld [vmem:[#allocation13 + $0x30] sm:$0xf]
    %v3346 = vld [vmem:[#allocation13 + $0x34] sm:$0xf]
    %v3347 = vld [vmem:[#allocation13 + $0x38] sm:$0xf]
    %v3348 = vld [vmem:[#allocation13 + $0x3c] sm:$0xf]
    %v3349 = vld [vmem:[#allocation15 + $0x20] ss:$0 sm:$0xff]
    %v3366 = vunpack.c.l.b16 %v3333
    %v3367 = vunpack.c.l.b16 %v3334
    %v3368 = vunpack.c.l.b16 %v3335
    %v3369 = vunpack.c.l.b16 %v3336
    %v3370 = vunpack.c.l.b16 %v3337
    %v3371 = vunpack.c.l.b16 %v3338
    %v3372 = vunpack.c.l.b16 %v3339
    %v3373 = vunpack.c.l.b16 %v3340
    %v3374 = vunpack.c.l.b16 %v3341
    %v3375 = vunpack.c.l.b16 %v3342
    %v3376 = vunpack.c.l.b16 %v3343
    %v3377 = vunpack.c.l.b16 %v3344
    %v3378 = vunpack.c.l.b16 %v3345
    %v3379 = vunpack.c.l.b16 %v3346
    %v3380 = vunpack.c.l.b16 %v3347
    %v3381 = vunpack.c.l.b16 %v3348
    %v3382 = vpack.c.b16 %v3367, %v3366
    %v3383 = vpack.c.b16 %v3369, %v3368
    %v3384 = vpack.c.b16 %v3371, %v3370
    %v3385 = vpack.c.b16 %v3373, %v3372
    %v3386 = vpack.c.b16 %v3375, %v3374
    %v3387 = vpack.c.b16 %v3377, %v3376
    %v3388 = vpack.c.b16 %v3379, %v3378
    %v3389 = vpack.c.b16 %v3381, %v3380
    %3398 = vmatprep.subr.bf16.mxu0 0
    %3399 = vmatpush1.bf16.msra.mxu0 %v3382
    %3400 = vmatprep.subr.bf16.mxu0 0
    %3401 = vmatpush1.bf16.msra.mxu0 %v3383
    %3402 = vmatprep.subr.bf16.mxu0 0
    %3403 = vmatpush1.bf16.msra.mxu0 %v3384
    %3404 = vmatprep.subr.bf16.mxu0 0
    %3405 = vmatpush1.bf16.msra.mxu0 %v3385
    %3406 = vmatprep.subr.bf16.mxu0 0
    %3407 = vmatpush1.bf16.msra.mxu0 %v3386
    %3408 = vmatprep.subr.bf16.mxu0 0
    %3409 = vmatpush1.bf16.msra.mxu0 %v3387
    %3410 = vmatprep.subr.bf16.mxu0 0
    %3411 = vmatpush1.bf16.msra.mxu0 %v3388
    %3412 = vmatprep.subr.bf16.mxu0 0
    %3413 = vmatpush1.bf16.msra.mxu0 %v3389
    %3414 = vmatprep.subr.bf16.mxu0 0
    %3415 = vmatpush1.bf16.msra.mxu0 0
    %3416 = vmatprep.subr.bf16.mxu0 0
    %3417 = vmatpush1.bf16.msra.mxu0 0
    %3418 = vmatprep.subr.bf16.mxu0 0
    %3419 = vmatpush1.bf16.msra.mxu0 0
    %3420 = vmatprep.subr.bf16.mxu0 0
    %3421 = vmatpush1.bf16.msra.mxu0 0
    %3422 = vmatprep.subr.bf16.mxu0 0
    %3423 = vmatpush1.bf16.msra.mxu0 0
    %3424 = vmatprep.subr.bf16.mxu0 0
    %3425 = vmatpush1.bf16.msra.mxu0 0
    %3426 = vmatprep.subr.bf16.mxu0 0
    %3427 = vmatpush1.bf16.msra.mxu0 0
    %3428 = vmatprep.subr.bf16.mxu0 0
    %3429 = vmatpush1.bf16.msra.mxu0 0
    %3430 = vmatprep.mubr.bf16.mxu0 0
    %3431 = vmatmul.mubr.bf16.gmra.mrb[0].mxu0 %v3325
    %v3432 = vpop.f32.mrb[0].mxu0
    %v3433 = vadd.f32 %v3349, %v3432
    %v3434 = vpop.f32.mrb[0].mxu0
    %v3435 = vpop.f32.mrb[0].mxu0
    %v3436 = vadd.f32 %v3349, %v3435
    %v3437 = vpop.f32.mrb[0].mxu0
    %3438 = vmatprep.mubr.bf16.mxu0 0
    %3439 = vmatmul.mubr.bf16.gmra.mrb[0].mxu0 %v3326
    %v3440 = vpop.f32.mrb[0].mxu0
    %v3441 = vadd.f32 %v3349, %v3440
    %v3442 = vpop.f32.mrb[0].mxu0
    %v3443 = vpop.f32.mrb[0].mxu0
    %v3444 = vadd.f32 %v3349, %v3443
    %v3445 = vpop.f32.mrb[0].mxu0
    %3446 = vmatprep.mubr.bf16.mxu0 0
    %3447 = vmatmul.mubr.bf16.gmra.mrb[0].mxu0 %v3327
    %v3448 = vpop.f32.mrb[0].mxu0
    %v3449 = vadd.f32 %v3349, %v3448
    %v3450 = vpop.f32.mrb[0].mxu0
    %v3451 = vpop.f32.mrb[0].mxu0
    %v3452 = vadd.f32 %v3349, %v3451
    %v3453 = vpop.f32.mrb[0].mxu0
    %3454 = vmatprep.mubr.bf16.mxu0 0
    %3455 = vmatmul.mubr.bf16.gmra.mrb[0].mxu0 %v3328
    %v3456 = vpop.f32.mrb[0].mxu0
    %v3457 = vadd.f32 %v3349, %v3456
    %v3458 = vpop.f32.mrb[0].mxu0
    %v3459 = vpop.f32.mrb[0].mxu0
    %v3460 = vadd.f32 %v3349, %v3459
    %v3461 = vpop.f32.mrb[0].mxu0
    %3462 = vmatprep.mubr.bf16.mxu0 0
    %3463 = vmatmul.mubr.bf16.gmra.mrb[0].mxu0 %v3329
    %v3464 = vpop.f32.mrb[0].mxu0
    %v3465 = vadd.f32 %v3349, %v3464
    %v3466 = vpop.f32.mrb[0].mxu0
    %v3467 = vpop.f32.mrb[0].mxu0
    %v3468 = vadd.f32 %v3349, %v3467
    %v3469 = vpop.f32.mrb[0].mxu0
    %3470 = vmatprep.mubr.bf16.mxu0 0
    %3471 = vmatmul.mubr.bf16.gmra.mrb[0].mxu0 %v3330
    %v3472 = vpop.f32.mrb[0].mxu0
    %v3473 = vadd.f32 %v3349, %v3472
    %v3474 = vpop.f32.mrb[0].mxu0
    %v3475 = vpop.f32.mrb[0].mxu0
    %v3476 = vadd.f32 %v3349, %v3475
    %v3477 = vpop.f32.mrb[0].mxu0
    %3478 = vmatprep.mubr.bf16.mxu0 0
    %3479 = vmatmul.mubr.bf16.gmra.mrb[0].mxu0 %v3331
    %v3480 = vpop.f32.mrb[0].mxu0
    %v3481 = vadd.f32 %v3349, %v3480
    %v3482 = vpop.f32.mrb[0].mxu0
    %v3483 = vpop.f32.mrb[0].mxu0
    %v3484 = vadd.f32 %v3349, %v3483
    %v3485 = vpop.f32.mrb[0].mxu0
    %3486 = vmatprep.mubr.bf16.mxu0 0
    %3487 = vmatmul.mubr.bf16.gmra.mrb[0].mxu0 %v3332
    %v3488 = vpop.f32.mrb[0].mxu0
    %v3489 = vadd.f32 %v3349, %v3488
    %v3490 = vpop.f32.mrb[0].mxu0
    %v3491 = vpop.f32.mrb[0].mxu0
    %v3492 = vadd.f32 %v3349, %v3491
    %v3493 = vpop.f32.mrb[0].mxu0
    %3494 = vdwg.mxu0
    %v3495 = vsub.f32 0.0, %v3433
    %v3496 = vsub.f32 0.0, %v3436
    %v3497 = vsub.f32 0.0, %v3441
    %v3498 = vsub.f32 0.0, %v3444
    %v3499 = vsub.f32 0.0, %v3449
    %v3500 = vsub.f32 0.0, %v3452
    %v3501 = vsub.f32 0.0, %v3457
    %v3502 = vsub.f32 0.0, %v3460
    %v3503 = vsub.f32 0.0, %v3465
    %v3504 = vsub.f32 0.0, %v3468
    %v3505 = vsub.f32 0.0, %v3473
    %v3506 = vsub.f32 0.0, %v3476
    %v3507 = vsub.f32 0.0, %v3481
    %v3508 = vsub.f32 0.0, %v3484
    %v3509 = vsub.f32 0.0, %v3489
    %v3510 = vsub.f32 0.0, %v3492
    %v3511 = vmul.f32 %v3495, 1.442695
    %v3512 = vpow.pop %v3511
    %v3513 = vmul.f32 %v3496, 1.442695
    %v3514 = vpow.pop %v3513
    %v3515 = vmul.f32 %v3497, 1.442695
    %v3516 = vpow.pop %v3515
    %v3517 = vmul.f32 %v3498, 1.442695
    %v3518 = vpow.pop %v3517
    %v3519 = vmul.f32 %v3499, 1.442695
    %v3520 = vpow.pop %v3519
    %v3521 = vmul.f32 %v3500, 1.442695
    %v3522 = vpow.pop %v3521
    %v3523 = vmul.f32 %v3501, 1.442695
    %v3524 = vpow.pop %v3523
    %v3525 = vmul.f32 %v3502, 1.442695
    %v3526 = vpow.pop %v3525
    %v3527 = vmul.f32 %v3503, 1.442695
    %v3528 = vpow.pop %v3527
    %v3529 = vmul.f32 %v3504, 1.442695
    %v3530 = vpow.pop %v3529
    %v3531 = vmul.f32 %v3505, 1.442695
    %v3532 = vpow.pop %v3531
    %v3533 = vmul.f32 %v3506, 1.442695
    %v3534 = vpow.pop %v3533
    %v3535 = vmul.f32 %v3507, 1.442695
    %v3536 = vpow.pop %v3535
    %v3537 = vmul.f32 %v3508, 1.442695
    %v3538 = vpow.pop %v3537
    %v3539 = vmul.f32 %v3509, 1.442695
    %v3540 = vpow.pop %v3539
    %v3541 = vmul.f32 %v3510, 1.442695
    %v3542 = vpow.pop %v3541
    %v3543 = vadd.f32 %v3512, 1.0
    %v3544 = vadd.f32 %v3514, 1.0
    %v3545 = vadd.f32 %v3516, 1.0
    %v3546 = vadd.f32 %v3518, 1.0
    %v3547 = vadd.f32 %v3520, 1.0
    %v3548 = vadd.f32 %v3522, 1.0
    %v3549 = vadd.f32 %v3524, 1.0
    %v3550 = vadd.f32 %v3526, 1.0
    %v3551 = vadd.f32 %v3528, 1.0
    %v3552 = vadd.f32 %v3530, 1.0
    %v3553 = vadd.f32 %v3532, 1.0
    %v3554 = vadd.f32 %v3534, 1.0
    %v3555 = vadd.f32 %v3536, 1.0
    %v3556 = vadd.f32 %v3538, 1.0
    %v3557 = vadd.f32 %v3540, 1.0
    %v3558 = vadd.f32 %v3542, 1.0
    %v3559 = vrcp.pop %v3543
    %v3560 = vmul.f32 1.0, %v3559
    %v3561 = vrcp.pop %v3544
    %v3562 = vmul.f32 1.0, %v3561
    %v3563 = vrcp.pop %v3545
    %v3564 = vmul.f32 1.0, %v3563
    %v3565 = vrcp.pop %v3546
    %v3566 = vmul.f32 1.0, %v3565
    %v3567 = vrcp.pop %v3547
    %v3568 = vmul.f32 1.0, %v3567
    %v3569 = vrcp.pop %v3548
    %v3570 = vmul.f32 1.0, %v3569
    %v3571 = vrcp.pop %v3549
    %v3572 = vmul.f32 1.0, %v3571
    %v3573 = vrcp.pop %v3550
    %v3574 = vmul.f32 1.0, %v3573
    %v3575 = vrcp.pop %v3551
    %v3576 = vmul.f32 1.0, %v3575
    %v3577 = vrcp.pop %v3552
    %v3578 = vmul.f32 1.0, %v3577
    %v3579 = vrcp.pop %v3553
    %v3580 = vmul.f32 1.0, %v3579
    %v3581 = vrcp.pop %v3554
    %v3582 = vmul.f32 1.0, %v3581
    %v3583 = vrcp.pop %v3555
    %v3584 = vmul.f32 1.0, %v3583
    %v3585 = vrcp.pop %v3556
    %v3586 = vmul.f32 1.0, %v3585
    %v3587 = vrcp.pop %v3557
    %v3588 = vmul.f32 1.0, %v3587
    %v3589 = vrcp.pop %v3558
    %v3590 = vmul.f32 1.0, %v3589
    %v3591 = vld [vmem:[#allocation15 + $0x21] ss:$0 sm:$0xff]
    %v3592 = vmul.f32 %v3560, %v3591
    %v3593 = vmul.f32 %v3562, %v3591
    %v3594 = vmul.f32 %v3564, %v3591
    %v3595 = vmul.f32 %v3566, %v3591
    %v3596 = vmul.f32 %v3568, %v3591
    %v3597 = vmul.f32 %v3570, %v3591
    %v3598 = vmul.f32 %v3572, %v3591
    %v3599 = vmul.f32 %v3574, %v3591
    %v3600 = vmul.f32 %v3576, %v3591
    %v3601 = vmul.f32 %v3578, %v3591
    %v3602 = vmul.f32 %v3580, %v3591
    %v3603 = vmul.f32 %v3582, %v3591
    %v3604 = vmul.f32 %v3584, %v3591
    %v3605 = vmul.f32 %v3586, %v3591
    %v3606 = vmul.f32 %v3588, %v3591
    %v3607 = vmul.f32 %v3590, %v3591
    %v3608 = vld [vmem:[#allocation15 + $0x22] ss:$0 sm:$0xff]
    %v3609 = vadd.f32 %v3592, %v3608
    %v3610 = vadd.f32 %v3593, %v3608
    %v3611 = vadd.f32 %v3594, %v3608
    %v3612 = vadd.f32 %v3595, %v3608
    %v3613 = vadd.f32 %v3596, %v3608
    %v3614 = vadd.f32 %v3597, %v3608
    %v3615 = vadd.f32 %v3598, %v3608
    %v3616 = vadd.f32 %v3599, %v3608
    %v3617 = vadd.f32 %v3600, %v3608
    %v3618 = vadd.f32 %v3601, %v3608
    %v3619 = vadd.f32 %v3602, %v3608
    %v3620 = vadd.f32 %v3603, %v3608
    %v3621 = vadd.f32 %v3604, %v3608
    %v3622 = vadd.f32 %v3605, %v3608
    %v3623 = vadd.f32 %v3606, %v3608
    %v3624 = vadd.f32 %v3607, %v3608
    %vm3625 = vcmask 64512
    %3626 = vst.msk [vmem:[%s12] sm:$0xff] %vm3625, %v3609
    %3627 = vst.msk [vmem:[%s12 + $0x8] sm:$0xff] %vm3625, %v3610
    %3628 = vst.msk [vmem:[%s12 + $0x10] sm:$0xff] %vm3625, %v3611
    %3629 = vst.msk [vmem:[%s12 + $0x18] sm:$0xff] %vm3625, %v3612
    %3630 = vst.msk [vmem:[%s12 + $0x20] sm:$0xff] %vm3625, %v3613
    %3631 = vst.msk [vmem:[%s12 + $0x28] sm:$0xff] %vm3625, %v3614
    %3632 = vst.msk [vmem:[%s12 + $0x30] sm:$0xff] %vm3625, %v3615
    %3633 = vst.msk [vmem:[%s12 + $0x38] sm:$0xff] %vm3625, %v3616
    %3634 = vst.msk [vmem:[%s12 + $0x40] sm:$0xff] %vm3625, %v3617
    %3635 = vst.msk [vmem:[%s12 + $0x48] sm:$0xff] %vm3625, %v3618
    %3636 = vst.msk [vmem:[%s12 + $0x50] sm:$0xff] %vm3625, %v3619
    %3637 = vst.msk [vmem:[%s12 + $0x58] sm:$0xff] %vm3625, %v3620
    %3638 = vst.msk [vmem:[%s12 + $0x60] sm:$0xff] %vm3625, %v3621
    %3639 = vst.msk [vmem:[%s12 + $0x68] sm:$0xff] %vm3625, %v3622
    %3640 = vst.msk [vmem:[%s12 + $0x70] sm:$0xff] %vm3625, %v3623
    %3641 = vst.msk [vmem:[%s12 + $0x78] sm:$0xff] %vm3625, %v3624
    // Predicated region
    $region86: #{albedo_net_forward.1} parent=1 // pred_check
      _
    $region87: #{albedo_net_forward.1} parent=1 // pred_check_branch
      %3643 = sbr.rel (0) target = $region89
    $region88: #{albedo_net_forward.1} parent=1 // pred_region
      _
    $region89: #{albedo_net_forward.1} parent=1 // pred_fallthru
      _
    // Predicated region
    $region90: #{albedo_net_forward.1} parent=1 // pred_check
      _
    $region91: #{albedo_net_forward.1} parent=1 // pred_check_branch
      %3645 = sbr.rel (0) target = $region93
    $region92: #{albedo_net_forward.1} parent=1 // pred_region
      _
    $region93: #{albedo_net_forward.1} parent=1 // pred_fallthru
      _
    %3646 = vsyncpa [#allocation3], 1
    %3647 = vsyncpa [#allocation5], 1
    %3648 = vsyncpa [#allocation8], 1
    %3649 = vsyncpa [#allocation11], 1
    %3650 = vsyncpa [#allocation14], 1

</llo_original>
